<compile_context>
chip_gen: v5e
topology: v5e:2x2
jax: 0.10.0
libtpu: 0.0.40
codegen_flags: <defaults>
</compile_context>

<pallas_src>
import functools
import math
from types import SimpleNamespace

import jax
import jax.numpy as jnp
from jax.experimental import pallas as pl
from jax.experimental.pallas import tpu as pltpu  # noqa: F401  (TPU backend assumed)


# ----------------------------- in-kernel helpers -----------------------------

def _gelu(x):
    # tanh-approx GELU (EUP tanh; review-recommended replacement for erf).
    c = math.sqrt(2.0 / math.pi)
    return 0.5 * x * (1.0 + jnp.tanh(c * (x + 0.044715 * x * x * x)))


def _layernorm(x, g, b, eps=1e-5):
    mu = jnp.mean(x, axis=-1, keepdims=True)
    var = jnp.mean((x - mu) ** 2, axis=-1, keepdims=True)
    return (x - mu) * jax.lax.rsqrt(var + eps) * g + b


# ------------------------------ fused Pallas kernel ----------------------------
#
# One invocation, no grid: every input is a full-array VMEM block.
# Inputs (in order):
#   y (B, D, L), y_mspi (B, D, M),
#   emb_y_w (L, d), emb_y_b (1, d), emb_m_w (M, d), emb_m_b (1, d),
#   per encoder layer (x e_layers):
#       wq bq wk bk wv bv wo bo g1 bn1 w1 b1 w2 b2 g2 bn2
#   head: gf bf wm bm wp bp
# Output: dec (B, D, pred_len)

def _make_fused_kernel(B, D, L, M, d, d_ff, n_heads, pred_len, n_layers):
    BD = B * D
    dh = d // n_heads
    scale = 1.0 / math.sqrt(dh)

    def kernel(*refs):
        y_ref, ym_ref, eyw, eyb, emw, emb0 = refs[0:6]
        layer_refs = refs[6:6 + 16 * n_layers]
        gf, bf, wm, bm, wp, bp = refs[6 + 16 * n_layers:6 + 16 * n_layers + 6]
        o_ref = refs[6 + 16 * n_layers + 6]

        # --- DataEmbedding_Linear: value-embedding linears on (B*D, .) slabs ---
        y2 = y_ref[...].reshape(BD, L)
        ym2 = ym_ref[...].reshape(BD, M)
        xkv2 = jnp.dot(y2, eyw[...], preferred_element_type=jnp.float32) + eyb[...]
        xq2 = jnp.dot(ym2, emw[...], preferred_element_type=jnp.float32) + emb0[...]

        # Per-head lane masks (hoisted: same for every layer / head loop iter).
        lane = jax.lax.broadcasted_iota(jnp.int32, (1, 1, d), 2)
        head_masks = [
            ((lane >= h * dh) & (lane < (h + 1) * dh)).astype(jnp.float32)
            for h in range(n_heads)
        ]

        xkv3 = xkv2.reshape(B, D, d)

        # --- Encoder: e_layers of cross attention + FFN ---
        for l in range(n_layers):
            (wq, bq, wk, bk, wv, bv, wo, bo,
             g1, bn1, w1, b1, w2, b2, g2, bn2) = layer_refs[16 * l:16 * (l + 1)]

            q2 = jnp.dot(xq2, wq[...], preferred_element_type=jnp.float32) + bq[...]
            k2 = jnp.dot(xkv2, wk[...], preferred_element_type=jnp.float32) + bk[...]
            v2 = jnp.dot(xkv2, wv[...], preferred_element_type=jnp.float32) + bv[...]
            q3 = q2.reshape(B, D, d)
            k3 = k2.reshape(B, D, d)
            v3 = v2.reshape(B, D, d)

            # Multi-head attention via lane masks: no sub-128 lane slices,
            # no lane-dim concatenate.  (q * mask_h) . k == q_h . k_h since the
            # masked lanes contribute zero to the contraction.
            att3 = jnp.zeros((B, D, d), jnp.float32)
            for hm in head_masks:
                s = jnp.einsum("bqd,bkd->bqk", q3 * hm, k3,
                               preferred_element_type=jnp.float32) * scale
                s = s - jnp.max(s, axis=-1, keepdims=True)
                p = jnp.exp(s)
                p = p * pl.reciprocal(jnp.sum(p, axis=-1, keepdims=True),
                                      approx=True)
                att3 = att3 + jnp.einsum("bqk,bkd->bqd", p, v3 * hm,
                                         preferred_element_type=jnp.float32)

            att2 = (jnp.dot(att3.reshape(BD, d), wo[...],
                            preferred_element_type=jnp.float32) + bo[...])

            x2 = _layernorm(xq2 + att2, g1[...], bn1[...])
            ff = _gelu(jnp.dot(x2, w1[...], preferred_element_type=jnp.float32)
                       + b1[...])
            ff = jnp.dot(ff, w2[...], preferred_element_type=jnp.float32) + b2[...]
            xq2 = _layernorm(x2 + ff, g2[...], bn2[...])

        # --- final encoder norm + mapping + GELU + projection head ---
        z = _layernorm(xq2, gf[...], bf[...])
        mp = _gelu(jnp.dot(z, wm[...], preferred_element_type=jnp.float32) + bm[...])
        out2 = jnp.dot(mp, wp[...], preferred_element_type=jnp.float32) + bp[...]
        o_ref[...] = out2.reshape(B, D, pred_len)

    return kernel


def csiformer_core(cfg, params, y, y_mspi):
    """Fused embedding + encoder + head.  y: (B, D, L), y_mspi: (B, D, M)."""
    B, D, L = y.shape
    M = y_mspi.shape[2]

    inputs = [y, y_mspi,
              params["emb_y_w"], params["emb_y_b"],
              params["emb_m_w"], params["emb_m_b"]]
    for lp in params["layers"]:
        inputs += [lp[k] for k in ("wq", "bq", "wk", "bk", "wv", "bv", "wo", "bo",
                                   "g1", "bn1", "w1", "b1", "w2", "b2", "g2", "bn2")]
    inputs += [params["gf"], params["bf"], params["wm"], params["bm"],
               params["wp"], params["bp"]]

    kernel = _make_fused_kernel(B, D, L, M, cfg.d_model, cfg.d_ff,
                                cfg.n_heads, cfg.pred_len, cfg.e_layers)
    return pl.pallas_call(
        kernel,
        out_shape=jax.ShapeDtypeStruct((B, D, cfg.pred_len), jnp.float32),
    )(*inputs)


# ------------------------------- model wrapper --------------------------------

def make_config():
    return SimpleNamespace(
        batch_size=2, seq_len=16, pred_len=8, dec_in=4, freq="h",
        mspi_layers=3, pool_type="max", d_model=32, n_heads=4, d_ff=64,
        e_layers=2, map_dim=32, factor=5, dropout=0.0, embed="timeF",
        activation="gelu", output_attention=False,
    )


def init_params(cfg, key):
    x_mark_dim = {"h": 4, "t": 5, "s": 6}[cfg.freq]
    D = cfg.dec_in + x_mark_dim
    d, dff = cfg.d_model, cfg.d_ff

    keys = iter(jax.random.split(key, 64))

    def rnd(shape, scale=0.05):
        return scale * jax.random.normal(next(keys), shape, dtype=jnp.float32)

    params = {
        "mask": rnd((cfg.batch_size, D, cfg.seq_len)),
        "emb_y_w": rnd((cfg.seq_len, d)), "emb_y_b": rnd((1, d)),
        "emb_m_w": rnd((cfg.mspi_layers, d)), "emb_m_b": rnd((1, d)),
        "gf": jnp.ones((1, d), jnp.float32), "bf": jnp.zeros((1, d), jnp.float32),
        "wm": rnd((d, cfg.map_dim)), "bm": rnd((1, cfg.map_dim)),
        "wp": rnd((cfg.map_dim, cfg.pred_len)), "bp": rnd((1, cfg.pred_len)),
        "layers": [],
    }
    for _ in range(cfg.e_layers):
        params["layers"].append({
            "wq": rnd((d, d)), "bq": rnd((1, d)),
            "wk": rnd((d, d)), "bk": rnd((1, d)),
            "wv": rnd((d, d)), "bv": rnd((1, d)),
            "wo": rnd((d, d)), "bo": rnd((1, d)),
            "g1": jnp.ones((1, d), jnp.float32), "bn1": jnp.zeros((1, d), jnp.float32),
            "w1": rnd((d, dff)), "b1": rnd((1, dff)),
            "w2": rnd((dff, d)), "b2": rnd((1, d)),
            "g2": jnp.ones((1, d), jnp.float32), "bn2": jnp.zeros((1, d), jnp.float32),
        })
    return params


def forward(cfg, params, x_enc, x_mark_enc, x_dec, x_mark_dec):
    del x_dec, x_mark_dec  # unused by the reference forward
    B, L, C = x_enc.shape
    P = cfg.pred_len

    # --- non-stationary instance normalization (glue, matches torch exactly) ---
    means = jnp.mean(x_enc, axis=1, keepdims=True)                 # (B, 1, C)
    xc = x_enc - means
    stdev = jnp.sqrt(jnp.var(xc, axis=1, keepdims=True) + 1e-5)    # unbiased=False
    xc = xc / stdev

    x = jnp.concatenate([xc, x_mark_enc], axis=2)                  # (B, L, D)
    x_inv = jnp.transpose(x, (0, 2, 1))                            # (B, D, L)

    # --- MaskModel: learnable per-(batch, channel, step) sigmoid gate ---
    y = x_inv * jax.nn.sigmoid(params["mask"])                     # (B, D, L)

    # --- MSPINet: multi-scale pooling features over the time axis ---
    D = y.shape[1]
    feats = []
    for i in range(cfg.mspi_layers):
        w = 2 ** i
        Lp = L // w
        blk = y[:, :, :Lp * w].reshape(B, D, Lp, w)
        pooled = jnp.max(blk, axis=-1) if cfg.pool_type == "max" else jnp.mean(blk, axis=-1)
        feats.append(jnp.mean(pooled, axis=-1))
    y_mspi = jnp.stack(feats, axis=-1)                             # (B, D, mspi_layers)

    # --- fused Pallas kernel: embedding + encoder (e_layers) + head ---
    dec = csiformer_core(cfg, params, y, y_mspi)                   # (B, D, pred_len)

    dec = jnp.transpose(dec, (0, 2, 1))[:, :, :C]                  # (B, pred_len, C)
    dec = dec * stdev[:, 0, :][:, None, :] + means[:, 0, :][:, None, :]
    return dec[:, -P:, :]


# ------------------------------------ main ------------------------------------

if __name__ == "__main__":
    cfg = make_config()
    params = init_params(cfg, jax.random.PRNGKey(42))

    key = jax.random.PRNGKey(0)
    k1, k2, k3, k4 = jax.random.split(key, 4)
    x_mark_dim = {"h": 4, "t": 5, "s": 6}[cfg.freq]
    x_enc = jax.random.normal(k1, (cfg.batch_size, cfg.seq_len, cfg.dec_in), jnp.float32)
    x_mark_enc = jax.random.normal(k2, (cfg.batch_size, cfg.seq_len, x_mark_dim), jnp.float32)
    x_dec = jax.random.normal(k3, (cfg.batch_size, cfg.pred_len, cfg.dec_in), jnp.float32)
    x_mark_dec = jax.random.normal(k4, (cfg.batch_size, cfg.pred_len, x_mark_dim), jnp.float32)

    # jit the whole forward: glue ops + the single fused pallas_call compile into
    # one executable (removes per-op dispatch overhead, the dominant cost here).
    fwd = jax.jit(functools.partial(forward, cfg))

    out = fwd(params, x_enc, x_mark_enc, x_dec, x_mark_dec)
    out = jax.block_until_ready(out)
    assert out.shape == (cfg.batch_size, cfg.pred_len, cfg.dec_in), out.shape
    assert bool(jnp.all(jnp.isfinite(out)))
    print("KERNEL_OK")
</pallas_src>

<mosaic_0001>
module attributes {stable_mosaic.version = 11 : i64} {
  func.func @kernel(%arg0: memref<2x8x16xf32, #tpu.memory_space<vmem>>, %arg1: memref<2x8x3xf32, #tpu.memory_space<vmem>>, %arg2: memref<16x32xf32, #tpu.memory_space<vmem>>, %arg3: memref<1x32xf32, #tpu.memory_space<vmem>>, %arg4: memref<3x32xf32, #tpu.memory_space<vmem>>, %arg5: memref<1x32xf32, #tpu.memory_space<vmem>>, %arg6: memref<32x32xf32, #tpu.memory_space<vmem>>, %arg7: memref<1x32xf32, #tpu.memory_space<vmem>>, %arg8: memref<32x32xf32, #tpu.memory_space<vmem>>, %arg9: memref<1x32xf32, #tpu.memory_space<vmem>>, %arg10: memref<32x32xf32, #tpu.memory_space<vmem>>, %arg11: memref<1x32xf32, #tpu.memory_space<vmem>>, %arg12: memref<32x32xf32, #tpu.memory_space<vmem>>, %arg13: memref<1x32xf32, #tpu.memory_space<vmem>>, %arg14: memref<1x32xf32, #tpu.memory_space<vmem>>, %arg15: memref<1x32xf32, #tpu.memory_space<vmem>>, %arg16: memref<32x64xf32, #tpu.memory_space<vmem>>, %arg17: memref<1x64xf32, #tpu.memory_space<vmem>>, %arg18: memref<64x32xf32, #tpu.memory_space<vmem>>, %arg19: memref<1x32xf32, #tpu.memory_space<vmem>>, %arg20: memref<1x32xf32, #tpu.memory_space<vmem>>, %arg21: memref<1x32xf32, #tpu.memory_space<vmem>>, %arg22: memref<32x32xf32, #tpu.memory_space<vmem>>, %arg23: memref<1x32xf32, #tpu.memory_space<vmem>>, %arg24: memref<32x32xf32, #tpu.memory_space<vmem>>, %arg25: memref<1x32xf32, #tpu.memory_space<vmem>>, %arg26: memref<32x32xf32, #tpu.memory_space<vmem>>, %arg27: memref<1x32xf32, #tpu.memory_space<vmem>>, %arg28: memref<32x32xf32, #tpu.memory_space<vmem>>, %arg29: memref<1x32xf32, #tpu.memory_space<vmem>>, %arg30: memref<1x32xf32, #tpu.memory_space<vmem>>, %arg31: memref<1x32xf32, #tpu.memory_space<vmem>>, %arg32: memref<32x64xf32, #tpu.memory_space<vmem>>, %arg33: memref<1x64xf32, #tpu.memory_space<vmem>>, %arg34: memref<64x32xf32, #tpu.memory_space<vmem>>, %arg35: memref<1x32xf32, #tpu.memory_space<vmem>>, %arg36: memref<1x32xf32, #tpu.memory_space<vmem>>, %arg37: memref<1x32xf32, #tpu.memory_space<vmem>>, %arg38: memref<1x32xf32, #tpu.memory_space<vmem>>, %arg39: memref<1x32xf32, #tpu.memory_space<vmem>>, %arg40: memref<32x32xf32, #tpu.memory_space<vmem>>, %arg41: memref<1x32xf32, #tpu.memory_space<vmem>>, %arg42: memref<32x8xf32, #tpu.memory_space<vmem>>, %arg43: memref<1x8xf32, #tpu.memory_space<vmem>>, %arg44: memref<2x8x8xf32, #tpu.memory_space<vmem>>) attributes {dimension_semantics = [], scalar_prefetch = 0 : i64, scratch_operands = 0 : i64, tpu.core_type = #tpu.core_type<tc>} {
    %c0 = arith.constant 0 : index
    %c0_0 = arith.constant 0 : index
    %c0_1 = arith.constant 0 : index
    %0 = vector.load %arg0[%c0, %c0_0, %c0_1] : memref<2x8x16xf32, #tpu.memory_space<vmem>>, vector<2x8x16xf32>
    %1 = vector.shape_cast %0 : vector<2x8x16xf32> to vector<16x16xf32>
    %c0_2 = arith.constant 0 : index
    %c0_3 = arith.constant 0 : index
    %c0_4 = arith.constant 0 : index
    %2 = vector.load %arg1[%c0_2, %c0_3, %c0_4] : memref<2x8x3xf32, #tpu.memory_space<vmem>>, vector<2x8x3xf32>
    %3 = vector.shape_cast %2 : vector<2x8x3xf32> to vector<16x3xf32>
    %c0_5 = arith.constant 0 : index
    %c0_6 = arith.constant 0 : index
    %4 = vector.load %arg2[%c0_5, %c0_6] : memref<16x32xf32, #tpu.memory_space<vmem>>, vector<16x32xf32>
    %cst = arith.constant dense<0.000000e+00> : vector<16x32xf32>
    %5 = tpu.matmul %1, %4, %cst {dimension_numbers = #tpu.dot_dimension_numbers<[1], [0], [0], [1], [0, 0, 1, 1], [], []>} : vector<16x16xf32>, vector<16x32xf32>, vector<16x32xf32> -> vector<16x32xf32>
    %c0_7 = arith.constant 0 : index
    %c0_8 = arith.constant 0 : index
    %6 = vector.load %arg3[%c0_7, %c0_8] : memref<1x32xf32, #tpu.memory_space<vmem>>, vector<1x32xf32>
    %7 = vector.broadcast %6 : vector<1x32xf32> to vector<16x32xf32>
    %8 = arith.addf %5, %7 : vector<16x32xf32>
    %c0_9 = arith.constant 0 : index
    %c0_10 = arith.constant 0 : index
    %9 = vector.load %arg4[%c0_9, %c0_10] : memref<3x32xf32, #tpu.memory_space<vmem>>, vector<3x32xf32>
    %cst_11 = arith.constant dense<0.000000e+00> : vector<16x32xf32>
    %10 = tpu.matmul %3, %9, %cst_11 {dimension_numbers = #tpu.dot_dimension_numbers<[1], [0], [0], [1], [0, 0, 1, 1], [], []>} : vector<16x3xf32>, vector<3x32xf32>, vector<16x32xf32> -> vector<16x32xf32>
    %c0_12 = arith.constant 0 : index
    %c0_13 = arith.constant 0 : index
    %11 = vector.load %arg5[%c0_12, %c0_13] : memref<1x32xf32, #tpu.memory_space<vmem>>, vector<1x32xf32>
    %12 = vector.broadcast %11 : vector<1x32xf32> to vector<16x32xf32>
    %13 = arith.addf %10, %12 : vector<16x32xf32>
    %14 = tpu.iota {dimensions = array<i32: 2>} : vector<1x1x32xi32>
    %c0_i32 = arith.constant 0 : i32
    %15 = vector.broadcast %c0_i32 : i32 to vector<1x1x32xi32>
    %16 = arith.cmpi sge, %14, %15 : vector<1x1x32xi32>
    %c8_i32 = arith.constant 8 : i32
    %17 = vector.broadcast %c8_i32 : i32 to vector<1x1x32xi32>
    %18 = arith.cmpi slt, %14, %17 : vector<1x1x32xi32>
    %19 = arith.andi %16, %18 : vector<1x1x32xi1>
    %20 = arith.extui %19 : vector<1x1x32xi1> to vector<1x1x32xi32>
    %21 = arith.sitofp %20 : vector<1x1x32xi32> to vector<1x1x32xf32>
    %c8_i32_14 = arith.constant 8 : i32
    %22 = vector.broadcast %c8_i32_14 : i32 to vector<1x1x32xi32>
    %23 = arith.cmpi sge, %14, %22 : vector<1x1x32xi32>
    %c16_i32 = arith.constant 16 : i32
    %24 = vector.broadcast %c16_i32 : i32 to vector<1x1x32xi32>
    %25 = arith.cmpi slt, %14, %24 : vector<1x1x32xi32>
    %26 = arith.andi %23, %25 : vector<1x1x32xi1>
    %27 = arith.extui %26 : vector<1x1x32xi1> to vector<1x1x32xi32>
    %28 = arith.sitofp %27 : vector<1x1x32xi32> to vector<1x1x32xf32>
    %c16_i32_15 = arith.constant 16 : i32
    %29 = vector.broadcast %c16_i32_15 : i32 to vector<1x1x32xi32>
    %30 = arith.cmpi sge, %14, %29 : vector<1x1x32xi32>
    %c24_i32 = arith.constant 24 : i32
    %31 = vector.broadcast %c24_i32 : i32 to vector<1x1x32xi32>
    %32 = arith.cmpi slt, %14, %31 : vector<1x1x32xi32>
    %33 = arith.andi %30, %32 : vector<1x1x32xi1>
    %34 = arith.extui %33 : vector<1x1x32xi1> to vector<1x1x32xi32>
    %35 = arith.sitofp %34 : vector<1x1x32xi32> to vector<1x1x32xf32>
    %c24_i32_16 = arith.constant 24 : i32
    %36 = vector.broadcast %c24_i32_16 : i32 to vector<1x1x32xi32>
    %37 = arith.cmpi sge, %14, %36 : vector<1x1x32xi32>
    %c32_i32 = arith.constant 32 : i32
    %38 = vector.broadcast %c32_i32 : i32 to vector<1x1x32xi32>
    %39 = arith.cmpi slt, %14, %38 : vector<1x1x32xi32>
    %40 = arith.andi %37, %39 : vector<1x1x32xi1>
    %41 = arith.extui %40 : vector<1x1x32xi1> to vector<1x1x32xi32>
    %42 = arith.sitofp %41 : vector<1x1x32xi32> to vector<1x1x32xf32>
    %c0_17 = arith.constant 0 : index
    %c0_18 = arith.constant 0 : index
    %43 = vector.load %arg6[%c0_17, %c0_18] : memref<32x32xf32, #tpu.memory_space<vmem>>, vector<32x32xf32>
    %cst_19 = arith.constant dense<0.000000e+00> : vector<16x32xf32>
    %44 = tpu.matmul %13, %43, %cst_19 {dimension_numbers = #tpu.dot_dimension_numbers<[1], [0], [0], [1], [0, 0, 1, 1], [], []>} : vector<16x32xf32>, vector<32x32xf32>, vector<16x32xf32> -> vector<16x32xf32>
    %c0_20 = arith.constant 0 : index
    %c0_21 = arith.constant 0 : index
    %45 = vector.load %arg7[%c0_20, %c0_21] : memref<1x32xf32, #tpu.memory_space<vmem>>, vector<1x32xf32>
    %46 = vector.broadcast %45 : vector<1x32xf32> to vector<16x32xf32>
    %47 = arith.addf %44, %46 : vector<16x32xf32>
    %c0_22 = arith.constant 0 : index
    %c0_23 = arith.constant 0 : index
    %48 = vector.load %arg8[%c0_22, %c0_23] : memref<32x32xf32, #tpu.memory_space<vmem>>, vector<32x32xf32>
    %cst_24 = arith.constant dense<0.000000e+00> : vector<16x32xf32>
    %49 = tpu.matmul %8, %48, %cst_24 {dimension_numbers = #tpu.dot_dimension_numbers<[1], [0], [0], [1], [0, 0, 1, 1], [], []>} : vector<16x32xf32>, vector<32x32xf32>, vector<16x32xf32> -> vector<16x32xf32>
    %c0_25 = arith.constant 0 : index
    %c0_26 = arith.constant 0 : index
    %50 = vector.load %arg9[%c0_25, %c0_26] : memref<1x32xf32, #tpu.memory_space<vmem>>, vector<1x32xf32>
    %51 = vector.broadcast %50 : vector<1x32xf32> to vector<16x32xf32>
    %52 = arith.addf %49, %51 : vector<16x32xf32>
    %c0_27 = arith.constant 0 : index
    %c0_28 = arith.constant 0 : index
    %53 = vector.load %arg10[%c0_27, %c0_28] : memref<32x32xf32, #tpu.memory_space<vmem>>, vector<32x32xf32>
    %cst_29 = arith.constant dense<0.000000e+00> : vector<16x32xf32>
    %54 = tpu.matmul %8, %53, %cst_29 {dimension_numbers = #tpu.dot_dimension_numbers<[1], [0], [0], [1], [0, 0, 1, 1], [], []>} : vector<16x32xf32>, vector<32x32xf32>, vector<16x32xf32> -> vector<16x32xf32>
    %c0_30 = arith.constant 0 : index
    %c0_31 = arith.constant 0 : index
    %55 = vector.load %arg11[%c0_30, %c0_31] : memref<1x32xf32, #tpu.memory_space<vmem>>, vector<1x32xf32>
    %56 = vector.broadcast %55 : vector<1x32xf32> to vector<16x32xf32>
    %57 = arith.addf %54, %56 : vector<16x32xf32>
    %58 = vector.shape_cast %47 : vector<16x32xf32> to vector<2x8x32xf32>
    %59 = vector.shape_cast %52 : vector<16x32xf32> to vector<2x8x32xf32>
    %60 = vector.shape_cast %57 : vector<16x32xf32> to vector<2x8x32xf32>
    %cst_32 = arith.constant 0.000000e+00 : f32
    %61 = vector.broadcast %cst_32 : f32 to vector<2x8x32xf32>
    %62 = vector.broadcast %21 : vector<1x1x32xf32> to vector<2x8x32xf32>
    %63 = arith.mulf %58, %62 : vector<2x8x32xf32>
    "tpu.trace_start"() <{level = 10 : i32, message = "bqd,bkd->bqk"}> : () -> ()
    %cst_33 = arith.constant dense<0.000000e+00> : vector<2x8x8xf32>
    %64 = tpu.matmul %63, %59, %cst_33 {dimension_numbers = #tpu.dot_dimension_numbers<[2], [2], [1], [1], [0, 0, 0, 1, 1, 1], [0], [0]>} : vector<2x8x32xf32>, vector<2x8x32xf32>, vector<2x8x8xf32> -> vector<2x8x8xf32>
    "tpu.trace_stop"() : () -> ()
    %cst_34 = arith.constant 0.353553385 : f32
    %65 = vector.broadcast %cst_34 : f32 to vector<2x8x8xf32>
    %66 = arith.mulf %64, %65 : vector<2x8x8xf32>
    %cst_35 = arith.constant dense<0xFF800000> : vector<2x8xf32>
    %67 = vector.multi_reduction <maximumf>, %66, %cst_35 [2] : vector<2x8x8xf32> to vector<2x8xf32>
    %68 = vector.shape_cast %67 : vector<2x8xf32> to vector<2x8x1xf32>
    %69 = vector.broadcast %68 : vector<2x8x1xf32> to vector<2x8x8xf32>
    %70 = arith.subf %66, %69 : vector<2x8x8xf32>
    %71 = math.exp %70 : vector<2x8x8xf32>
    %cst_36 = arith.constant dense<0.000000e+00> : vector<2x8xf32>
    %72 = vector.multi_reduction <add>, %71, %cst_36 [2] : vector<2x8x8xf32> to vector<2x8xf32>
    %73 = vector.shape_cast %72 : vector<2x8xf32> to vector<2x8x1xf32>
    %74 = tpu.reciprocal %73 {approx = true} : vector<2x8x1xf32> -> vector<2x8x1xf32>
    %75 = vector.broadcast %74 : vector<2x8x1xf32> to vector<2x8x8xf32>
    %76 = arith.mulf %71, %75 : vector<2x8x8xf32>
    %77 = vector.broadcast %21 : vector<1x1x32xf32> to vector<2x8x32xf32>
    %78 = arith.mulf %60, %77 : vector<2x8x32xf32>
    "tpu.trace_start"() <{level = 10 : i32, message = "bqk,bkd->bqd"}> : () -> ()
    %cst_37 = arith.constant dense<0.000000e+00> : vector<2x8x32xf32>
    %79 = tpu.matmul %76, %78, %cst_37 {dimension_numbers = #tpu.dot_dimension_numbers<[2], [1], [1], [2], [0, 0, 0, 1, 1, 2], [0], [0]>} : vector<2x8x8xf32>, vector<2x8x32xf32>, vector<2x8x32xf32> -> vector<2x8x32xf32>
    "tpu.trace_stop"() : () -> ()
    %80 = arith.addf %61, %79 : vector<2x8x32xf32>
    %81 = vector.broadcast %28 : vector<1x1x32xf32> to vector<2x8x32xf32>
    %82 = arith.mulf %58, %81 : vector<2x8x32xf32>
    "tpu.trace_start"() <{level = 10 : i32, message = "bqd,bkd->bqk"}> : () -> ()
    %cst_38 = arith.constant dense<0.000000e+00> : vector<2x8x8xf32>
    %83 = tpu.matmul %82, %59, %cst_38 {dimension_numbers = #tpu.dot_dimension_numbers<[2], [2], [1], [1], [0, 0, 0, 1, 1, 1], [0], [0]>} : vector<2x8x32xf32>, vector<2x8x32xf32>, vector<2x8x8xf32> -> vector<2x8x8xf32>
    "tpu.trace_stop"() : () -> ()
    %cst_39 = arith.constant 0.353553385 : f32
    %84 = vector.broadcast %cst_39 : f32 to vector<2x8x8xf32>
    %85 = arith.mulf %83, %84 : vector<2x8x8xf32>
    %cst_40 = arith.constant dense<0xFF800000> : vector<2x8xf32>
    %86 = vector.multi_reduction <maximumf>, %85, %cst_40 [2] : vector<2x8x8xf32> to vector<2x8xf32>
    %87 = vector.shape_cast %86 : vector<2x8xf32> to vector<2x8x1xf32>
    %88 = vector.broadcast %87 : vector<2x8x1xf32> to vector<2x8x8xf32>
    %89 = arith.subf %85, %88 : vector<2x8x8xf32>
    %90 = math.exp %89 : vector<2x8x8xf32>
    %cst_41 = arith.constant dense<0.000000e+00> : vector<2x8xf32>
    %91 = vector.multi_reduction <add>, %90, %cst_41 [2] : vector<2x8x8xf32> to vector<2x8xf32>
    %92 = vector.shape_cast %91 : vector<2x8xf32> to vector<2x8x1xf32>
    %93 = tpu.reciprocal %92 {approx = true} : vector<2x8x1xf32> -> vector<2x8x1xf32>
    %94 = vector.broadcast %93 : vector<2x8x1xf32> to vector<2x8x8xf32>
    %95 = arith.mulf %90, %94 : vector<2x8x8xf32>
    %96 = vector.broadcast %28 : vector<1x1x32xf32> to vector<2x8x32xf32>
    %97 = arith.mulf %60, %96 : vector<2x8x32xf32>
    "tpu.trace_start"() <{level = 10 : i32, message = "bqk,bkd->bqd"}> : () -> ()
    %cst_42 = arith.constant dense<0.000000e+00> : vector<2x8x32xf32>
    %98 = tpu.matmul %95, %97, %cst_42 {dimension_numbers = #tpu.dot_dimension_numbers<[2], [1], [1], [2], [0, 0, 0, 1, 1, 2], [0], [0]>} : vector<2x8x8xf32>, vector<2x8x32xf32>, vector<2x8x32xf32> -> vector<2x8x32xf32>
    "tpu.trace_stop"() : () -> ()
    %99 = arith.addf %80, %98 : vector<2x8x32xf32>
    %100 = vector.broadcast %35 : vector<1x1x32xf32> to vector<2x8x32xf32>
    %101 = arith.mulf %58, %100 : vector<2x8x32xf32>
    "tpu.trace_start"() <{level = 10 : i32, message = "bqd,bkd->bqk"}> : () -> ()
    %cst_43 = arith.constant dense<0.000000e+00> : vector<2x8x8xf32>
    %102 = tpu.matmul %101, %59, %cst_43 {dimension_numbers = #tpu.dot_dimension_numbers<[2], [2], [1], [1], [0, 0, 0, 1, 1, 1], [0], [0]>} : vector<2x8x32xf32>, vector<2x8x32xf32>, vector<2x8x8xf32> -> vector<2x8x8xf32>
    "tpu.trace_stop"() : () -> ()
    %cst_44 = arith.constant 0.353553385 : f32
    %103 = vector.broadcast %cst_44 : f32 to vector<2x8x8xf32>
    %104 = arith.mulf %102, %103 : vector<2x8x8xf32>
    %cst_45 = arith.constant dense<0xFF800000> : vector<2x8xf32>
    %105 = vector.multi_reduction <maximumf>, %104, %cst_45 [2] : vector<2x8x8xf32> to vector<2x8xf32>
    %106 = vector.shape_cast %105 : vector<2x8xf32> to vector<2x8x1xf32>
    %107 = vector.broadcast %106 : vector<2x8x1xf32> to vector<2x8x8xf32>
    %108 = arith.subf %104, %107 : vector<2x8x8xf32>
    %109 = math.exp %108 : vector<2x8x8xf32>
    %cst_46 = arith.constant dense<0.000000e+00> : vector<2x8xf32>
    %110 = vector.multi_reduction <add>, %109, %cst_46 [2] : vector<2x8x8xf32> to vector<2x8xf32>
    %111 = vector.shape_cast %110 : vector<2x8xf32> to vector<2x8x1xf32>
    %112 = tpu.reciprocal %111 {approx = true} : vector<2x8x1xf32> -> vector<2x8x1xf32>
    %113 = vector.broadcast %112 : vector<2x8x1xf32> to vector<2x8x8xf32>
    %114 = arith.mulf %109, %113 : vector<2x8x8xf32>
    %115 = vector.broadcast %35 : vector<1x1x32xf32> to vector<2x8x32xf32>
    %116 = arith.mulf %60, %115 : vector<2x8x32xf32>
    "tpu.trace_start"() <{level = 10 : i32, message = "bqk,bkd->bqd"}> : () -> ()
    %cst_47 = arith.constant dense<0.000000e+00> : vector<2x8x32xf32>
    %117 = tpu.matmul %114, %116, %cst_47 {dimension_numbers = #tpu.dot_dimension_numbers<[2], [1], [1], [2], [0, 0, 0, 1, 1, 2], [0], [0]>} : vector<2x8x8xf32>, vector<2x8x32xf32>, vector<2x8x32xf32> -> vector<2x8x32xf32>
    "tpu.trace_stop"() : () -> ()
    %118 = arith.addf %99, %117 : vector<2x8x32xf32>
    %119 = vector.broadcast %42 : vector<1x1x32xf32> to vector<2x8x32xf32>
    %120 = arith.mulf %58, %119 : vector<2x8x32xf32>
    "tpu.trace_start"() <{level = 10 : i32, message = "bqd,bkd->bqk"}> : () -> ()
    %cst_48 = arith.constant dense<0.000000e+00> : vector<2x8x8xf32>
    %121 = tpu.matmul %120, %59, %cst_48 {dimension_numbers = #tpu.dot_dimension_numbers<[2], [2], [1], [1], [0, 0, 0, 1, 1, 1], [0], [0]>} : vector<2x8x32xf32>, vector<2x8x32xf32>, vector<2x8x8xf32> -> vector<2x8x8xf32>
    "tpu.trace_stop"() : () -> ()
    %cst_49 = arith.constant 0.353553385 : f32
    %122 = vector.broadcast %cst_49 : f32 to vector<2x8x8xf32>
    %123 = arith.mulf %121, %122 : vector<2x8x8xf32>
    %cst_50 = arith.constant dense<0xFF800000> : vector<2x8xf32>
    %124 = vector.multi_reduction <maximumf>, %123, %cst_50 [2] : vector<2x8x8xf32> to vector<2x8xf32>
    %125 = vector.shape_cast %124 : vector<2x8xf32> to vector<2x8x1xf32>
    %126 = vector.broadcast %125 : vector<2x8x1xf32> to vector<2x8x8xf32>
    %127 = arith.subf %123, %126 : vector<2x8x8xf32>
    %128 = math.exp %127 : vector<2x8x8xf32>
    %cst_51 = arith.constant dense<0.000000e+00> : vector<2x8xf32>
    %129 = vector.multi_reduction <add>, %128, %cst_51 [2] : vector<2x8x8xf32> to vector<2x8xf32>
    %130 = vector.shape_cast %129 : vector<2x8xf32> to vector<2x8x1xf32>
    %131 = tpu.reciprocal %130 {approx = true} : vector<2x8x1xf32> -> vector<2x8x1xf32>
    %132 = vector.broadcast %131 : vector<2x8x1xf32> to vector<2x8x8xf32>
    %133 = arith.mulf %128, %132 : vector<2x8x8xf32>
    %134 = vector.broadcast %42 : vector<1x1x32xf32> to vector<2x8x32xf32>
    %135 = arith.mulf %60, %134 : vector<2x8x32xf32>
    "tpu.trace_start"() <{level = 10 : i32, message = "bqk,bkd->bqd"}> : () -> ()
    %cst_52 = arith.constant dense<0.000000e+00> : vector<2x8x32xf32>
    %136 = tpu.matmul %133, %135, %cst_52 {dimension_numbers = #tpu.dot_dimension_numbers<[2], [1], [1], [2], [0, 0, 0, 1, 1, 2], [0], [0]>} : vector<2x8x8xf32>, vector<2x8x32xf32>, vector<2x8x32xf32> -> vector<2x8x32xf32>
    "tpu.trace_stop"() : () -> ()
    %137 = arith.addf %118, %136 : vector<2x8x32xf32>
    %138 = vector.shape_cast %137 : vector<2x8x32xf32> to vector<16x32xf32>
    %c0_53 = arith.constant 0 : index
    %c0_54 = arith.constant 0 : index
    %139 = vector.load %arg12[%c0_53, %c0_54] : memref<32x32xf32, #tpu.memory_space<vmem>>, vector<32x32xf32>
    %cst_55 = arith.constant dense<0.000000e+00> : vector<16x32xf32>
    %140 = tpu.matmul %138, %139, %cst_55 {dimension_numbers = #tpu.dot_dimension_numbers<[1], [0], [0], [1], [0, 0, 1, 1], [], []>} : vector<16x32xf32>, vector<32x32xf32>, vector<16x32xf32> -> vector<16x32xf32>
    %c0_56 = arith.constant 0 : index
    %c0_57 = arith.constant 0 : index
    %141 = vector.load %arg13[%c0_56, %c0_57] : memref<1x32xf32, #tpu.memory_space<vmem>>, vector<1x32xf32>
    %142 = vector.broadcast %141 : vector<1x32xf32> to vector<16x32xf32>
    %143 = arith.addf %140, %142 : vector<16x32xf32>
    %144 = arith.addf %13, %143 : vector<16x32xf32>
    %c0_58 = arith.constant 0 : index
    %c0_59 = arith.constant 0 : index
    %145 = vector.load %arg14[%c0_58, %c0_59] : memref<1x32xf32, #tpu.memory_space<vmem>>, vector<1x32xf32>
    %c0_60 = arith.constant 0 : index
    %c0_61 = arith.constant 0 : index
    %146 = vector.load %arg15[%c0_60, %c0_61] : memref<1x32xf32, #tpu.memory_space<vmem>>, vector<1x32xf32>
    %cst_62 = arith.constant dense<0.000000e+00> : vector<16xf32>
    %147 = vector.multi_reduction <add>, %144, %cst_62 [1] : vector<16x32xf32> to vector<16xf32>
    %148 = vector.shape_cast %147 : vector<16xf32> to vector<16x1xf32>
    %cst_63 = arith.constant 3.200000e+01 : f32
    %149 = vector.broadcast %cst_63 : f32 to vector<16x1xf32>
    %150 = arith.divf %148, %149 : vector<16x1xf32>
    %151 = vector.broadcast %150 : vector<16x1xf32> to vector<16x32xf32>
    %152 = arith.subf %144, %151 : vector<16x32xf32>
    %153 = arith.mulf %152, %152 : vector<16x32xf32>
    %cst_64 = arith.constant dense<0.000000e+00> : vector<16xf32>
    %154 = vector.multi_reduction <add>, %153, %cst_64 [1] : vector<16x32xf32> to vector<16xf32>
    %155 = vector.shape_cast %154 : vector<16xf32> to vector<16x1xf32>
    %cst_65 = arith.constant 3.200000e+01 : f32
    %156 = vector.broadcast %cst_65 : f32 to vector<16x1xf32>
    %157 = arith.divf %155, %156 : vector<16x1xf32>
    %158 = vector.broadcast %150 : vector<16x1xf32> to vector<16x32xf32>
    %159 = arith.subf %144, %158 : vector<16x32xf32>
    %cst_66 = arith.constant 9.99999974E-6 : f32
    %160 = vector.broadcast %cst_66 : f32 to vector<16x1xf32>
    %161 = arith.addf %157, %160 : vector<16x1xf32>
    %162 = math.rsqrt %161 : vector<16x1xf32>
    %163 = vector.broadcast %162 : vector<16x1xf32> to vector<16x32xf32>
    %164 = arith.mulf %159, %163 : vector<16x32xf32>
    %165 = vector.broadcast %145 : vector<1x32xf32> to vector<16x32xf32>
    %166 = arith.mulf %164, %165 : vector<16x32xf32>
    %167 = vector.broadcast %146 : vector<1x32xf32> to vector<16x32xf32>
    %168 = arith.addf %166, %167 : vector<16x32xf32>
    %c0_67 = arith.constant 0 : index
    %c0_68 = arith.constant 0 : index
    %169 = vector.load %arg16[%c0_67, %c0_68] : memref<32x64xf32, #tpu.memory_space<vmem>>, vector<32x64xf32>
    %cst_69 = arith.constant dense<0.000000e+00> : vector<16x64xf32>
    %170 = tpu.matmul %168, %169, %cst_69 {dimension_numbers = #tpu.dot_dimension_numbers<[1], [0], [0], [1], [0, 0, 1, 1], [], []>} : vector<16x32xf32>, vector<32x64xf32>, vector<16x64xf32> -> vector<16x64xf32>
    %c0_70 = arith.constant 0 : index
    %c0_71 = arith.constant 0 : index
    %171 = vector.load %arg17[%c0_70, %c0_71] : memref<1x64xf32, #tpu.memory_space<vmem>>, vector<1x64xf32>
    %172 = vector.broadcast %171 : vector<1x64xf32> to vector<16x64xf32>
    %173 = arith.addf %170, %172 : vector<16x64xf32>
    %cst_72 = arith.constant 5.000000e-01 : f32
    %174 = vector.broadcast %cst_72 : f32 to vector<16x64xf32>
    %175 = arith.mulf %174, %173 : vector<16x64xf32>
    %cst_73 = arith.constant 4.471500e-02 : f32
    %176 = vector.broadcast %cst_73 : f32 to vector<16x64xf32>
    %177 = arith.mulf %176, %173 : vector<16x64xf32>
    %178 = arith.mulf %177, %173 : vector<16x64xf32>
    %179 = arith.mulf %178, %173 : vector<16x64xf32>
    %180 = arith.addf %173, %179 : vector<16x64xf32>
    %cst_74 = arith.constant 0.797884583 : f32
    %181 = vector.broadcast %cst_74 : f32 to vector<16x64xf32>
    %182 = arith.mulf %181, %180 : vector<16x64xf32>
    %183 = math.tanh %182 : vector<16x64xf32>
    %cst_75 = arith.constant 1.000000e+00 : f32
    %184 = vector.broadcast %cst_75 : f32 to vector<16x64xf32>
    %185 = arith.addf %184, %183 : vector<16x64xf32>
    %186 = arith.mulf %175, %185 : vector<16x64xf32>
    %c0_76 = arith.constant 0 : index
    %c0_77 = arith.constant 0 : index
    %187 = vector.load %arg18[%c0_76, %c0_77] : memref<64x32xf32, #tpu.memory_space<vmem>>, vector<64x32xf32>
    %cst_78 = arith.constant dense<0.000000e+00> : vector<16x32xf32>
    %188 = tpu.matmul %186, %187, %cst_78 {dimension_numbers = #tpu.dot_dimension_numbers<[1], [0], [0], [1], [0, 0, 1, 1], [], []>} : vector<16x64xf32>, vector<64x32xf32>, vector<16x32xf32> -> vector<16x32xf32>
    %c0_79 = arith.constant 0 : index
    %c0_80 = arith.constant 0 : index
    %189 = vector.load %arg19[%c0_79, %c0_80] : memref<1x32xf32, #tpu.memory_space<vmem>>, vector<1x32xf32>
    %190 = vector.broadcast %189 : vector<1x32xf32> to vector<16x32xf32>
    %191 = arith.addf %188, %190 : vector<16x32xf32>
    %192 = arith.addf %168, %191 : vector<16x32xf32>
    %c0_81 = arith.constant 0 : index
    %c0_82 = arith.constant 0 : index
    %193 = vector.load %arg20[%c0_81, %c0_82] : memref<1x32xf32, #tpu.memory_space<vmem>>, vector<1x32xf32>
    %c0_83 = arith.constant 0 : index
    %c0_84 = arith.constant 0 : index
    %194 = vector.load %arg21[%c0_83, %c0_84] : memref<1x32xf32, #tpu.memory_space<vmem>>, vector<1x32xf32>
    %cst_85 = arith.constant dense<0.000000e+00> : vector<16xf32>
    %195 = vector.multi_reduction <add>, %192, %cst_85 [1] : vector<16x32xf32> to vector<16xf32>
    %196 = vector.shape_cast %195 : vector<16xf32> to vector<16x1xf32>
    %cst_86 = arith.constant 3.200000e+01 : f32
    %197 = vector.broadcast %cst_86 : f32 to vector<16x1xf32>
    %198 = arith.divf %196, %197 : vector<16x1xf32>
    %199 = vector.broadcast %198 : vector<16x1xf32> to vector<16x32xf32>
    %200 = arith.subf %192, %199 : vector<16x32xf32>
    %201 = arith.mulf %200, %200 : vector<16x32xf32>
    %cst_87 = arith.constant dense<0.000000e+00> : vector<16xf32>
    %202 = vector.multi_reduction <add>, %201, %cst_87 [1] : vector<16x32xf32> to vector<16xf32>
    %203 = vector.shape_cast %202 : vector<16xf32> to vector<16x1xf32>
    %cst_88 = arith.constant 3.200000e+01 : f32
    %204 = vector.broadcast %cst_88 : f32 to vector<16x1xf32>
    %205 = arith.divf %203, %204 : vector<16x1xf32>
    %206 = vector.broadcast %198 : vector<16x1xf32> to vector<16x32xf32>
    %207 = arith.subf %192, %206 : vector<16x32xf32>
    %cst_89 = arith.constant 9.99999974E-6 : f32
    %208 = vector.broadcast %cst_89 : f32 to vector<16x1xf32>
    %209 = arith.addf %205, %208 : vector<16x1xf32>
    %210 = math.rsqrt %209 : vector<16x1xf32>
    %211 = vector.broadcast %210 : vector<16x1xf32> to vector<16x32xf32>
    %212 = arith.mulf %207, %211 : vector<16x32xf32>
    %213 = vector.broadcast %193 : vector<1x32xf32> to vector<16x32xf32>
    %214 = arith.mulf %212, %213 : vector<16x32xf32>
    %215 = vector.broadcast %194 : vector<1x32xf32> to vector<16x32xf32>
    %216 = arith.addf %214, %215 : vector<16x32xf32>
    %c0_90 = arith.constant 0 : index
    %c0_91 = arith.constant 0 : index
    %217 = vector.load %arg22[%c0_90, %c0_91] : memref<32x32xf32, #tpu.memory_space<vmem>>, vector<32x32xf32>
    %cst_92 = arith.constant dense<0.000000e+00> : vector<16x32xf32>
    %218 = tpu.matmul %216, %217, %cst_92 {dimension_numbers = #tpu.dot_dimension_numbers<[1], [0], [0], [1], [0, 0, 1, 1], [], []>} : vector<16x32xf32>, vector<32x32xf32>, vector<16x32xf32> -> vector<16x32xf32>
    %c0_93 = arith.constant 0 : index
    %c0_94 = arith.constant 0 : index
    %219 = vector.load %arg23[%c0_93, %c0_94] : memref<1x32xf32, #tpu.memory_space<vmem>>, vector<1x32xf32>
    %220 = vector.broadcast %219 : vector<1x32xf32> to vector<16x32xf32>
    %221 = arith.addf %218, %220 : vector<16x32xf32>
    %c0_95 = arith.constant 0 : index
    %c0_96 = arith.constant 0 : index
    %222 = vector.load %arg24[%c0_95, %c0_96] : memref<32x32xf32, #tpu.memory_space<vmem>>, vector<32x32xf32>
    %cst_97 = arith.constant dense<0.000000e+00> : vector<16x32xf32>
    %223 = tpu.matmul %8, %222, %cst_97 {dimension_numbers = #tpu.dot_dimension_numbers<[1], [0], [0], [1], [0, 0, 1, 1], [], []>} : vector<16x32xf32>, vector<32x32xf32>, vector<16x32xf32> -> vector<16x32xf32>
    %c0_98 = arith.constant 0 : index
    %c0_99 = arith.constant 0 : index
    %224 = vector.load %arg25[%c0_98, %c0_99] : memref<1x32xf32, #tpu.memory_space<vmem>>, vector<1x32xf32>
    %225 = vector.broadcast %224 : vector<1x32xf32> to vector<16x32xf32>
    %226 = arith.addf %223, %225 : vector<16x32xf32>
    %c0_100 = arith.constant 0 : index
    %c0_101 = arith.constant 0 : index
    %227 = vector.load %arg26[%c0_100, %c0_101] : memref<32x32xf32, #tpu.memory_space<vmem>>, vector<32x32xf32>
    %cst_102 = arith.constant dense<0.000000e+00> : vector<16x32xf32>
    %228 = tpu.matmul %8, %227, %cst_102 {dimension_numbers = #tpu.dot_dimension_numbers<[1], [0], [0], [1], [0, 0, 1, 1], [], []>} : vector<16x32xf32>, vector<32x32xf32>, vector<16x32xf32> -> vector<16x32xf32>
    %c0_103 = arith.constant 0 : index
    %c0_104 = arith.constant 0 : index
    %229 = vector.load %arg27[%c0_103, %c0_104] : memref<1x32xf32, #tpu.memory_space<vmem>>, vector<1x32xf32>
    %230 = vector.broadcast %229 : vector<1x32xf32> to vector<16x32xf32>
    %231 = arith.addf %228, %230 : vector<16x32xf32>
    %232 = vector.shape_cast %221 : vector<16x32xf32> to vector<2x8x32xf32>
    %233 = vector.shape_cast %226 : vector<16x32xf32> to vector<2x8x32xf32>
    %234 = vector.shape_cast %231 : vector<16x32xf32> to vector<2x8x32xf32>
    %cst_105 = arith.constant 0.000000e+00 : f32
    %235 = vector.broadcast %cst_105 : f32 to vector<2x8x32xf32>
    %236 = vector.broadcast %21 : vector<1x1x32xf32> to vector<2x8x32xf32>
    %237 = arith.mulf %232, %236 : vector<2x8x32xf32>
    "tpu.trace_start"() <{level = 10 : i32, message = "bqd,bkd->bqk"}> : () -> ()
    %cst_106 = arith.constant dense<0.000000e+00> : vector<2x8x8xf32>
    %238 = tpu.matmul %237, %233, %cst_106 {dimension_numbers = #tpu.dot_dimension_numbers<[2], [2], [1], [1], [0, 0, 0, 1, 1, 1], [0], [0]>} : vector<2x8x32xf32>, vector<2x8x32xf32>, vector<2x8x8xf32> -> vector<2x8x8xf32>
    "tpu.trace_stop"() : () -> ()
    %cst_107 = arith.constant 0.353553385 : f32
    %239 = vector.broadcast %cst_107 : f32 to vector<2x8x8xf32>
    %240 = arith.mulf %238, %239 : vector<2x8x8xf32>
    %cst_108 = arith.constant dense<0xFF800000> : vector<2x8xf32>
    %241 = vector.multi_reduction <maximumf>, %240, %cst_108 [2] : vector<2x8x8xf32> to vector<2x8xf32>
    %242 = vector.shape_cast %241 : vector<2x8xf32> to vector<2x8x1xf32>
    %243 = vector.broadcast %242 : vector<2x8x1xf32> to vector<2x8x8xf32>
    %244 = arith.subf %240, %243 : vector<2x8x8xf32>
    %245 = math.exp %244 : vector<2x8x8xf32>
    %cst_109 = arith.constant dense<0.000000e+00> : vector<2x8xf32>
    %246 = vector.multi_reduction <add>, %245, %cst_109 [2] : vector<2x8x8xf32> to vector<2x8xf32>
    %247 = vector.shape_cast %246 : vector<2x8xf32> to vector<2x8x1xf32>
    %248 = tpu.reciprocal %247 {approx = true} : vector<2x8x1xf32> -> vector<2x8x1xf32>
    %249 = vector.broadcast %248 : vector<2x8x1xf32> to vector<2x8x8xf32>
    %250 = arith.mulf %245, %249 : vector<2x8x8xf32>
    %251 = vector.broadcast %21 : vector<1x1x32xf32> to vector<2x8x32xf32>
    %252 = arith.mulf %234, %251 : vector<2x8x32xf32>
    "tpu.trace_start"() <{level = 10 : i32, message = "bqk,bkd->bqd"}> : () -> ()
    %cst_110 = arith.constant dense<0.000000e+00> : vector<2x8x32xf32>
    %253 = tpu.matmul %250, %252, %cst_110 {dimension_numbers = #tpu.dot_dimension_numbers<[2], [1], [1], [2], [0, 0, 0, 1, 1, 2], [0], [0]>} : vector<2x8x8xf32>, vector<2x8x32xf32>, vector<2x8x32xf32> -> vector<2x8x32xf32>
    "tpu.trace_stop"() : () -> ()
    %254 = arith.addf %235, %253 : vector<2x8x32xf32>
    %255 = vector.broadcast %28 : vector<1x1x32xf32> to vector<2x8x32xf32>
    %256 = arith.mulf %232, %255 : vector<2x8x32xf32>
    "tpu.trace_start"() <{level = 10 : i32, message = "bqd,bkd->bqk"}> : () -> ()
    %cst_111 = arith.constant dense<0.000000e+00> : vector<2x8x8xf32>
    %257 = tpu.matmul %256, %233, %cst_111 {dimension_numbers = #tpu.dot_dimension_numbers<[2], [2], [1], [1], [0, 0, 0, 1, 1, 1], [0], [0]>} : vector<2x8x32xf32>, vector<2x8x32xf32>, vector<2x8x8xf32> -> vector<2x8x8xf32>
    "tpu.trace_stop"() : () -> ()
    %cst_112 = arith.constant 0.353553385 : f32
    %258 = vector.broadcast %cst_112 : f32 to vector<2x8x8xf32>
    %259 = arith.mulf %257, %258 : vector<2x8x8xf32>
    %cst_113 = arith.constant dense<0xFF800000> : vector<2x8xf32>
    %260 = vector.multi_reduction <maximumf>, %259, %cst_113 [2] : vector<2x8x8xf32> to vector<2x8xf32>
    %261 = vector.shape_cast %260 : vector<2x8xf32> to vector<2x8x1xf32>
    %262 = vector.broadcast %261 : vector<2x8x1xf32> to vector<2x8x8xf32>
    %263 = arith.subf %259, %262 : vector<2x8x8xf32>
    %264 = math.exp %263 : vector<2x8x8xf32>
    %cst_114 = arith.constant dense<0.000000e+00> : vector<2x8xf32>
    %265 = vector.multi_reduction <add>, %264, %cst_114 [2] : vector<2x8x8xf32> to vector<2x8xf32>
    %266 = vector.shape_cast %265 : vector<2x8xf32> to vector<2x8x1xf32>
    %267 = tpu.reciprocal %266 {approx = true} : vector<2x8x1xf32> -> vector<2x8x1xf32>
    %268 = vector.broadcast %267 : vector<2x8x1xf32> to vector<2x8x8xf32>
    %269 = arith.mulf %264, %268 : vector<2x8x8xf32>
    %270 = vector.broadcast %28 : vector<1x1x32xf32> to vector<2x8x32xf32>
    %271 = arith.mulf %234, %270 : vector<2x8x32xf32>
    "tpu.trace_start"() <{level = 10 : i32, message = "bqk,bkd->bqd"}> : () -> ()
    %cst_115 = arith.constant dense<0.000000e+00> : vector<2x8x32xf32>
    %272 = tpu.matmul %269, %271, %cst_115 {dimension_numbers = #tpu.dot_dimension_numbers<[2], [1], [1], [2], [0, 0, 0, 1, 1, 2], [0], [0]>} : vector<2x8x8xf32>, vector<2x8x32xf32>, vector<2x8x32xf32> -> vector<2x8x32xf32>
    "tpu.trace_stop"() : () -> ()
    %273 = arith.addf %254, %272 : vector<2x8x32xf32>
    %274 = vector.broadcast %35 : vector<1x1x32xf32> to vector<2x8x32xf32>
    %275 = arith.mulf %232, %274 : vector<2x8x32xf32>
    "tpu.trace_start"() <{level = 10 : i32, message = "bqd,bkd->bqk"}> : () -> ()
    %cst_116 = arith.constant dense<0.000000e+00> : vector<2x8x8xf32>
    %276 = tpu.matmul %275, %233, %cst_116 {dimension_numbers = #tpu.dot_dimension_numbers<[2], [2], [1], [1], [0, 0, 0, 1, 1, 1], [0], [0]>} : vector<2x8x32xf32>, vector<2x8x32xf32>, vector<2x8x8xf32> -> vector<2x8x8xf32>
    "tpu.trace_stop"() : () -> ()
    %cst_117 = arith.constant 0.353553385 : f32
    %277 = vector.broadcast %cst_117 : f32 to vector<2x8x8xf32>
    %278 = arith.mulf %276, %277 : vector<2x8x8xf32>
    %cst_118 = arith.constant dense<0xFF800000> : vector<2x8xf32>
    %279 = vector.multi_reduction <maximumf>, %278, %cst_118 [2] : vector<2x8x8xf32> to vector<2x8xf32>
    %280 = vector.shape_cast %279 : vector<2x8xf32> to vector<2x8x1xf32>
    %281 = vector.broadcast %280 : vector<2x8x1xf32> to vector<2x8x8xf32>
    %282 = arith.subf %278, %281 : vector<2x8x8xf32>
    %283 = math.exp %282 : vector<2x8x8xf32>
    %cst_119 = arith.constant dense<0.000000e+00> : vector<2x8xf32>
    %284 = vector.multi_reduction <add>, %283, %cst_119 [2] : vector<2x8x8xf32> to vector<2x8xf32>
    %285 = vector.shape_cast %284 : vector<2x8xf32> to vector<2x8x1xf32>
    %286 = tpu.reciprocal %285 {approx = true} : vector<2x8x1xf32> -> vector<2x8x1xf32>
    %287 = vector.broadcast %286 : vector<2x8x1xf32> to vector<2x8x8xf32>
    %288 = arith.mulf %283, %287 : vector<2x8x8xf32>
    %289 = vector.broadcast %35 : vector<1x1x32xf32> to vector<2x8x32xf32>
    %290 = arith.mulf %234, %289 : vector<2x8x32xf32>
    "tpu.trace_start"() <{level = 10 : i32, message = "bqk,bkd->bqd"}> : () -> ()
    %cst_120 = arith.constant dense<0.000000e+00> : vector<2x8x32xf32>
    %291 = tpu.matmul %288, %290, %cst_120 {dimension_numbers = #tpu.dot_dimension_numbers<[2], [1], [1], [2], [0, 0, 0, 1, 1, 2], [0], [0]>} : vector<2x8x8xf32>, vector<2x8x32xf32>, vector<2x8x32xf32> -> vector<2x8x32xf32>
    "tpu.trace_stop"() : () -> ()
    %292 = arith.addf %273, %291 : vector<2x8x32xf32>
    %293 = vector.broadcast %42 : vector<1x1x32xf32> to vector<2x8x32xf32>
    %294 = arith.mulf %232, %293 : vector<2x8x32xf32>
    "tpu.trace_start"() <{level = 10 : i32, message = "bqd,bkd->bqk"}> : () -> ()
    %cst_121 = arith.constant dense<0.000000e+00> : vector<2x8x8xf32>
    %295 = tpu.matmul %294, %233, %cst_121 {dimension_numbers = #tpu.dot_dimension_numbers<[2], [2], [1], [1], [0, 0, 0, 1, 1, 1], [0], [0]>} : vector<2x8x32xf32>, vector<2x8x32xf32>, vector<2x8x8xf32> -> vector<2x8x8xf32>
    "tpu.trace_stop"() : () -> ()
    %cst_122 = arith.constant 0.353553385 : f32
    %296 = vector.broadcast %cst_122 : f32 to vector<2x8x8xf32>
    %297 = arith.mulf %295, %296 : vector<2x8x8xf32>
    %cst_123 = arith.constant dense<0xFF800000> : vector<2x8xf32>
    %298 = vector.multi_reduction <maximumf>, %297, %cst_123 [2] : vector<2x8x8xf32> to vector<2x8xf32>
    %299 = vector.shape_cast %298 : vector<2x8xf32> to vector<2x8x1xf32>
    %300 = vector.broadcast %299 : vector<2x8x1xf32> to vector<2x8x8xf32>
    %301 = arith.subf %297, %300 : vector<2x8x8xf32>
    %302 = math.exp %301 : vector<2x8x8xf32>
    %cst_124 = arith.constant dense<0.000000e+00> : vector<2x8xf32>
    %303 = vector.multi_reduction <add>, %302, %cst_124 [2] : vector<2x8x8xf32> to vector<2x8xf32>
    %304 = vector.shape_cast %303 : vector<2x8xf32> to vector<2x8x1xf32>
    %305 = tpu.reciprocal %304 {approx = true} : vector<2x8x1xf32> -> vector<2x8x1xf32>
    %306 = vector.broadcast %305 : vector<2x8x1xf32> to vector<2x8x8xf32>
    %307 = arith.mulf %302, %306 : vector<2x8x8xf32>
    %308 = vector.broadcast %42 : vector<1x1x32xf32> to vector<2x8x32xf32>
    %309 = arith.mulf %234, %308 : vector<2x8x32xf32>
    "tpu.trace_start"() <{level = 10 : i32, message = "bqk,bkd->bqd"}> : () -> ()
    %cst_125 = arith.constant dense<0.000000e+00> : vector<2x8x32xf32>
    %310 = tpu.matmul %307, %309, %cst_125 {dimension_numbers = #tpu.dot_dimension_numbers<[2], [1], [1], [2], [0, 0, 0, 1, 1, 2], [0], [0]>} : vector<2x8x8xf32>, vector<2x8x32xf32>, vector<2x8x32xf32> -> vector<2x8x32xf32>
    "tpu.trace_stop"() : () -> ()
    %311 = arith.addf %292, %310 : vector<2x8x32xf32>
    %312 = vector.shape_cast %311 : vector<2x8x32xf32> to vector<16x32xf32>
    %c0_126 = arith.constant 0 : index
    %c0_127 = arith.constant 0 : index
    %313 = vector.load %arg28[%c0_126, %c0_127] : memref<32x32xf32, #tpu.memory_space<vmem>>, vector<32x32xf32>
    %cst_128 = arith.constant dense<0.000000e+00> : vector<16x32xf32>
    %314 = tpu.matmul %312, %313, %cst_128 {dimension_numbers = #tpu.dot_dimension_numbers<[1], [0], [0], [1], [0, 0, 1, 1], [], []>} : vector<16x32xf32>, vector<32x32xf32>, vector<16x32xf32> -> vector<16x32xf32>
    %c0_129 = arith.constant 0 : index
    %c0_130 = arith.constant 0 : index
    %315 = vector.load %arg29[%c0_129, %c0_130] : memref<1x32xf32, #tpu.memory_space<vmem>>, vector<1x32xf32>
    %316 = vector.broadcast %315 : vector<1x32xf32> to vector<16x32xf32>
    %317 = arith.addf %314, %316 : vector<16x32xf32>
    %318 = arith.addf %216, %317 : vector<16x32xf32>
    %c0_131 = arith.constant 0 : index
    %c0_132 = arith.constant 0 : index
    %319 = vector.load %arg30[%c0_131, %c0_132] : memref<1x32xf32, #tpu.memory_space<vmem>>, vector<1x32xf32>
    %c0_133 = arith.constant 0 : index
    %c0_134 = arith.constant 0 : index
    %320 = vector.load %arg31[%c0_133, %c0_134] : memref<1x32xf32, #tpu.memory_space<vmem>>, vector<1x32xf32>
    %cst_135 = arith.constant dense<0.000000e+00> : vector<16xf32>
    %321 = vector.multi_reduction <add>, %318, %cst_135 [1] : vector<16x32xf32> to vector<16xf32>
    %322 = vector.shape_cast %321 : vector<16xf32> to vector<16x1xf32>
    %cst_136 = arith.constant 3.200000e+01 : f32
    %323 = vector.broadcast %cst_136 : f32 to vector<16x1xf32>
    %324 = arith.divf %322, %323 : vector<16x1xf32>
    %325 = vector.broadcast %324 : vector<16x1xf32> to vector<16x32xf32>
    %326 = arith.subf %318, %325 : vector<16x32xf32>
    %327 = arith.mulf %326, %326 : vector<16x32xf32>
    %cst_137 = arith.constant dense<0.000000e+00> : vector<16xf32>
    %328 = vector.multi_reduction <add>, %327, %cst_137 [1] : vector<16x32xf32> to vector<16xf32>
    %329 = vector.shape_cast %328 : vector<16xf32> to vector<16x1xf32>
    %cst_138 = arith.constant 3.200000e+01 : f32
    %330 = vector.broadcast %cst_138 : f32 to vector<16x1xf32>
    %331 = arith.divf %329, %330 : vector<16x1xf32>
    %332 = vector.broadcast %324 : vector<16x1xf32> to vector<16x32xf32>
    %333 = arith.subf %318, %332 : vector<16x32xf32>
    %cst_139 = arith.constant 9.99999974E-6 : f32
    %334 = vector.broadcast %cst_139 : f32 to vector<16x1xf32>
    %335 = arith.addf %331, %334 : vector<16x1xf32>
    %336 = math.rsqrt %335 : vector<16x1xf32>
    %337 = vector.broadcast %336 : vector<16x1xf32> to vector<16x32xf32>
    %338 = arith.mulf %333, %337 : vector<16x32xf32>
    %339 = vector.broadcast %319 : vector<1x32xf32> to vector<16x32xf32>
    %340 = arith.mulf %338, %339 : vector<16x32xf32>
    %341 = vector.broadcast %320 : vector<1x32xf32> to vector<16x32xf32>
    %342 = arith.addf %340, %341 : vector<16x32xf32>
    %c0_140 = arith.constant 0 : index
    %c0_141 = arith.constant 0 : index
    %343 = vector.load %arg32[%c0_140, %c0_141] : memref<32x64xf32, #tpu.memory_space<vmem>>, vector<32x64xf32>
    %cst_142 = arith.constant dense<0.000000e+00> : vector<16x64xf32>
    %344 = tpu.matmul %342, %343, %cst_142 {dimension_numbers = #tpu.dot_dimension_numbers<[1], [0], [0], [1], [0, 0, 1, 1], [], []>} : vector<16x32xf32>, vector<32x64xf32>, vector<16x64xf32> -> vector<16x64xf32>
    %c0_143 = arith.constant 0 : index
    %c0_144 = arith.constant 0 : index
    %345 = vector.load %arg33[%c0_143, %c0_144] : memref<1x64xf32, #tpu.memory_space<vmem>>, vector<1x64xf32>
    %346 = vector.broadcast %345 : vector<1x64xf32> to vector<16x64xf32>
    %347 = arith.addf %344, %346 : vector<16x64xf32>
    %cst_145 = arith.constant 5.000000e-01 : f32
    %348 = vector.broadcast %cst_145 : f32 to vector<16x64xf32>
    %349 = arith.mulf %348, %347 : vector<16x64xf32>
    %cst_146 = arith.constant 4.471500e-02 : f32
    %350 = vector.broadcast %cst_146 : f32 to vector<16x64xf32>
    %351 = arith.mulf %350, %347 : vector<16x64xf32>
    %352 = arith.mulf %351, %347 : vector<16x64xf32>
    %353 = arith.mulf %352, %347 : vector<16x64xf32>
    %354 = arith.addf %347, %353 : vector<16x64xf32>
    %cst_147 = arith.constant 0.797884583 : f32
    %355 = vector.broadcast %cst_147 : f32 to vector<16x64xf32>
    %356 = arith.mulf %355, %354 : vector<16x64xf32>
    %357 = math.tanh %356 : vector<16x64xf32>
    %cst_148 = arith.constant 1.000000e+00 : f32
    %358 = vector.broadcast %cst_148 : f32 to vector<16x64xf32>
    %359 = arith.addf %358, %357 : vector<16x64xf32>
    %360 = arith.mulf %349, %359 : vector<16x64xf32>
    %c0_149 = arith.constant 0 : index
    %c0_150 = arith.constant 0 : index
    %361 = vector.load %arg34[%c0_149, %c0_150] : memref<64x32xf32, #tpu.memory_space<vmem>>, vector<64x32xf32>
    %cst_151 = arith.constant dense<0.000000e+00> : vector<16x32xf32>
    %362 = tpu.matmul %360, %361, %cst_151 {dimension_numbers = #tpu.dot_dimension_numbers<[1], [0], [0], [1], [0, 0, 1, 1], [], []>} : vector<16x64xf32>, vector<64x32xf32>, vector<16x32xf32> -> vector<16x32xf32>
    %c0_152 = arith.constant 0 : index
    %c0_153 = arith.constant 0 : index
    %363 = vector.load %arg35[%c0_152, %c0_153] : memref<1x32xf32, #tpu.memory_space<vmem>>, vector<1x32xf32>
    %364 = vector.broadcast %363 : vector<1x32xf32> to vector<16x32xf32>
    %365 = arith.addf %362, %364 : vector<16x32xf32>
    %366 = arith.addf %342, %365 : vector<16x32xf32>
    %c0_154 = arith.constant 0 : index
    %c0_155 = arith.constant 0 : index
    %367 = vector.load %arg36[%c0_154, %c0_155] : memref<1x32xf32, #tpu.memory_space<vmem>>, vector<1x32xf32>
    %c0_156 = arith.constant 0 : index
    %c0_157 = arith.constant 0 : index
    %368 = vector.load %arg37[%c0_156, %c0_157] : memref<1x32xf32, #tpu.memory_space<vmem>>, vector<1x32xf32>
    %cst_158 = arith.constant dense<0.000000e+00> : vector<16xf32>
    %369 = vector.multi_reduction <add>, %366, %cst_158 [1] : vector<16x32xf32> to vector<16xf32>
    %370 = vector.shape_cast %369 : vector<16xf32> to vector<16x1xf32>
    %cst_159 = arith.constant 3.200000e+01 : f32
    %371 = vector.broadcast %cst_159 : f32 to vector<16x1xf32>
    %372 = arith.divf %370, %371 : vector<16x1xf32>
    %373 = vector.broadcast %372 : vector<16x1xf32> to vector<16x32xf32>
    %374 = arith.subf %366, %373 : vector<16x32xf32>
    %375 = arith.mulf %374, %374 : vector<16x32xf32>
    %cst_160 = arith.constant dense<0.000000e+00> : vector<16xf32>
    %376 = vector.multi_reduction <add>, %375, %cst_160 [1] : vector<16x32xf32> to vector<16xf32>
    %377 = vector.shape_cast %376 : vector<16xf32> to vector<16x1xf32>
    %cst_161 = arith.constant 3.200000e+01 : f32
    %378 = vector.broadcast %cst_161 : f32 to vector<16x1xf32>
    %379 = arith.divf %377, %378 : vector<16x1xf32>
    %380 = vector.broadcast %372 : vector<16x1xf32> to vector<16x32xf32>
    %381 = arith.subf %366, %380 : vector<16x32xf32>
    %cst_162 = arith.constant 9.99999974E-6 : f32
    %382 = vector.broadcast %cst_162 : f32 to vector<16x1xf32>
    %383 = arith.addf %379, %382 : vector<16x1xf32>
    %384 = math.rsqrt %383 : vector<16x1xf32>
    %385 = vector.broadcast %384 : vector<16x1xf32> to vector<16x32xf32>
    %386 = arith.mulf %381, %385 : vector<16x32xf32>
    %387 = vector.broadcast %367 : vector<1x32xf32> to vector<16x32xf32>
    %388 = arith.mulf %386, %387 : vector<16x32xf32>
    %389 = vector.broadcast %368 : vector<1x32xf32> to vector<16x32xf32>
    %390 = arith.addf %388, %389 : vector<16x32xf32>
    %c0_163 = arith.constant 0 : index
    %c0_164 = arith.constant 0 : index
    %391 = vector.load %arg38[%c0_163, %c0_164] : memref<1x32xf32, #tpu.memory_space<vmem>>, vector<1x32xf32>
    %c0_165 = arith.constant 0 : index
    %c0_166 = arith.constant 0 : index
    %392 = vector.load %arg39[%c0_165, %c0_166] : memref<1x32xf32, #tpu.memory_space<vmem>>, vector<1x32xf32>
    %cst_167 = arith.constant dense<0.000000e+00> : vector<16xf32>
    %393 = vector.multi_reduction <add>, %390, %cst_167 [1] : vector<16x32xf32> to vector<16xf32>
    %394 = vector.shape_cast %393 : vector<16xf32> to vector<16x1xf32>
    %cst_168 = arith.constant 3.200000e+01 : f32
    %395 = vector.broadcast %cst_168 : f32 to vector<16x1xf32>
    %396 = arith.divf %394, %395 : vector<16x1xf32>
    %397 = vector.broadcast %396 : vector<16x1xf32> to vector<16x32xf32>
    %398 = arith.subf %390, %397 : vector<16x32xf32>
    %399 = arith.mulf %398, %398 : vector<16x32xf32>
    %cst_169 = arith.constant dense<0.000000e+00> : vector<16xf32>
    %400 = vector.multi_reduction <add>, %399, %cst_169 [1] : vector<16x32xf32> to vector<16xf32>
    %401 = vector.shape_cast %400 : vector<16xf32> to vector<16x1xf32>
    %cst_170 = arith.constant 3.200000e+01 : f32
    %402 = vector.broadcast %cst_170 : f32 to vector<16x1xf32>
    %403 = arith.divf %401, %402 : vector<16x1xf32>
    %404 = vector.broadcast %396 : vector<16x1xf32> to vector<16x32xf32>
    %405 = arith.subf %390, %404 : vector<16x32xf32>
    %cst_171 = arith.constant 9.99999974E-6 : f32
    %406 = vector.broadcast %cst_171 : f32 to vector<16x1xf32>
    %407 = arith.addf %403, %406 : vector<16x1xf32>
    %408 = math.rsqrt %407 : vector<16x1xf32>
    %409 = vector.broadcast %408 : vector<16x1xf32> to vector<16x32xf32>
    %410 = arith.mulf %405, %409 : vector<16x32xf32>
    %411 = vector.broadcast %391 : vector<1x32xf32> to vector<16x32xf32>
    %412 = arith.mulf %410, %411 : vector<16x32xf32>
    %413 = vector.broadcast %392 : vector<1x32xf32> to vector<16x32xf32>
    %414 = arith.addf %412, %413 : vector<16x32xf32>
    %c0_172 = arith.constant 0 : index
    %c0_173 = arith.constant 0 : index
    %415 = vector.load %arg40[%c0_172, %c0_173] : memref<32x32xf32, #tpu.memory_space<vmem>>, vector<32x32xf32>
    %cst_174 = arith.constant dense<0.000000e+00> : vector<16x32xf32>
    %416 = tpu.matmul %414, %415, %cst_174 {dimension_numbers = #tpu.dot_dimension_numbers<[1], [0], [0], [1], [0, 0, 1, 1], [], []>} : vector<16x32xf32>, vector<32x32xf32>, vector<16x32xf32> -> vector<16x32xf32>
    %c0_175 = arith.constant 0 : index
    %c0_176 = arith.constant 0 : index
    %417 = vector.load %arg41[%c0_175, %c0_176] : memref<1x32xf32, #tpu.memory_space<vmem>>, vector<1x32xf32>
    %418 = vector.broadcast %417 : vector<1x32xf32> to vector<16x32xf32>
    %419 = arith.addf %416, %418 : vector<16x32xf32>
    %cst_177 = arith.constant 5.000000e-01 : f32
    %420 = vector.broadcast %cst_177 : f32 to vector<16x32xf32>
    %421 = arith.mulf %420, %419 : vector<16x32xf32>
    %cst_178 = arith.constant 4.471500e-02 : f32
    %422 = vector.broadcast %cst_178 : f32 to vector<16x32xf32>
    %423 = arith.mulf %422, %419 : vector<16x32xf32>
    %424 = arith.mulf %423, %419 : vector<16x32xf32>
    %425 = arith.mulf %424, %419 : vector<16x32xf32>
    %426 = arith.addf %419, %425 : vector<16x32xf32>
    %cst_179 = arith.constant 0.797884583 : f32
    %427 = vector.broadcast %cst_179 : f32 to vector<16x32xf32>
    %428 = arith.mulf %427, %426 : vector<16x32xf32>
    %429 = math.tanh %428 : vector<16x32xf32>
    %cst_180 = arith.constant 1.000000e+00 : f32
    %430 = vector.broadcast %cst_180 : f32 to vector<16x32xf32>
    %431 = arith.addf %430, %429 : vector<16x32xf32>
    %432 = arith.mulf %421, %431 : vector<16x32xf32>
    %c0_181 = arith.constant 0 : index
    %c0_182 = arith.constant 0 : index
    %433 = vector.load %arg42[%c0_181, %c0_182] : memref<32x8xf32, #tpu.memory_space<vmem>>, vector<32x8xf32>
    %cst_183 = arith.constant dense<0.000000e+00> : vector<16x8xf32>
    %434 = tpu.matmul %432, %433, %cst_183 {dimension_numbers = #tpu.dot_dimension_numbers<[1], [0], [0], [1], [0, 0, 1, 1], [], []>} : vector<16x32xf32>, vector<32x8xf32>, vector<16x8xf32> -> vector<16x8xf32>
    %c0_184 = arith.constant 0 : index
    %c0_185 = arith.constant 0 : index
    %435 = vector.load %arg43[%c0_184, %c0_185] : memref<1x8xf32, #tpu.memory_space<vmem>>, vector<1x8xf32>
    %436 = vector.broadcast %435 : vector<1x8xf32> to vector<16x8xf32>
    %437 = arith.addf %434, %436 : vector<16x8xf32>
    %438 = vector.shape_cast %437 : vector<16x8xf32> to vector<2x8x8xf32>
    %c0_186 = arith.constant 0 : index
    %c0_187 = arith.constant 0 : index
    %c0_188 = arith.constant 0 : index
    %439 = vector.load %arg44[%c0_186, %c0_187, %c0_188] : memref<2x8x8xf32, #tpu.memory_space<vmem>>, vector<2x8x8xf32>
    tpu.vector_store %arg44[%c0_186, %c0_187, %c0_188], %438 {strides = array<i32>} : memref<2x8x8xf32, #tpu.memory_space<vmem>>, vector<2x8x8xf32>,
    return
  }
}

</mosaic_0001>

<llo_original>
// kernel: forward.1
$region0: #{forward.1}
  #allocation0 [shape = 'u32[]', space=smem, size = 0x4, offset = 0x4, fixed_abs, tag = 'smem constant byte address 0x4 - core index']
  #allocation1 [shape = 'u32[72,128]{1,0:T(1,128)}', space=vmem, size = 0x9000, scoped, tag = 'internal scratch']
  %s0 = inlined_call_operand.smem [shape: u32[45], index: -1, kind: input, shape index: {}]
  %s1 = sld [smem:[%s0]]
  %s2 = scalar_lea.smem %s0, 1
  %s3 = sld [smem:[%s2]]
  %s4 = scalar_lea.smem %s0, 2
  %s5 = sld [smem:[%s4]]
  %s6 = scalar_lea.smem %s0, 3
  %s7 = sld [smem:[%s6]]
  %s8 = scalar_lea.smem %s0, 4
  %s9 = sld [smem:[%s8]]
  %s10 = scalar_lea.smem %s0, 5
  %s11 = sld [smem:[%s10]]
  %s12 = scalar_lea.smem %s0, 6
  %s13 = sld [smem:[%s12]]
  %s14 = scalar_lea.smem %s0, 7
  %s15 = sld [smem:[%s14]]
  %s16 = scalar_lea.smem %s0, 8
  %s17 = sld [smem:[%s16]]
  %s18 = scalar_lea.smem %s0, 9
  %s19 = sld [smem:[%s18]]
  %s20 = scalar_lea.smem %s0, 10
  %s21 = sld [smem:[%s20]]
  %s22 = scalar_lea.smem %s0, 11
  %s23 = sld [smem:[%s22]]
  %s24 = scalar_lea.smem %s0, 12
  %s25 = sld [smem:[%s24]]
  %s26 = scalar_lea.smem %s0, 13
  %s27 = sld [smem:[%s26]]
  %s28 = scalar_lea.smem %s0, 14
  %s29 = sld [smem:[%s28]]
  %s30 = scalar_lea.smem %s0, 15
  %s31 = sld [smem:[%s30]]
  %s32 = scalar_lea.smem %s0, 16
  %s33 = sld [smem:[%s32]]
  %s34 = scalar_lea.smem %s0, 17
  %s35 = sld [smem:[%s34]]
  %s36 = scalar_lea.smem %s0, 18
  %s37 = sld [smem:[%s36]]
  %s38 = scalar_lea.smem %s0, 19
  %s39 = sld [smem:[%s38]]
  %s40 = scalar_lea.smem %s0, 20
  %s41 = sld [smem:[%s40]]
  %s42 = scalar_lea.smem %s0, 21
  %s43 = sld [smem:[%s42]]
  %s44 = scalar_lea.smem %s0, 22
  %s45 = sld [smem:[%s44]]
  %s46 = scalar_lea.smem %s0, 23
  %s47 = sld [smem:[%s46]]
  %s48 = scalar_lea.smem %s0, 24
  %s49 = sld [smem:[%s48]]
  %s50 = scalar_lea.smem %s0, 25
  %s51 = sld [smem:[%s50]]
  %s52 = scalar_lea.smem %s0, 26
  %s53 = sld [smem:[%s52]]
  %s54 = scalar_lea.smem %s0, 27
  %s55 = sld [smem:[%s54]]
  %s56 = scalar_lea.smem %s0, 28
  %s57 = sld [smem:[%s56]]
  %s58 = scalar_lea.smem %s0, 29
  %s59 = sld [smem:[%s58]]
  %s60 = scalar_lea.smem %s0, 30
  %s61 = sld [smem:[%s60]]
  %s62 = scalar_lea.smem %s0, 31
  %s63 = sld [smem:[%s62]]
  %s64 = scalar_lea.smem %s0, 32
  %s65 = sld [smem:[%s64]]
  %s66 = scalar_lea.smem %s0, 33
  %s67 = sld [smem:[%s66]]
  %s68 = scalar_lea.smem %s0, 34
  %s69 = sld [smem:[%s68]]
  %s70 = scalar_lea.smem %s0, 35
  %s71 = sld [smem:[%s70]]
  %s72 = scalar_lea.smem %s0, 36
  %s73 = sld [smem:[%s72]]
  %s74 = scalar_lea.smem %s0, 37
  %s75 = sld [smem:[%s74]]
  %s76 = scalar_lea.smem %s0, 38
  %s77 = sld [smem:[%s76]]
  %s78 = scalar_lea.smem %s0, 39
  %s79 = sld [smem:[%s78]]
  %s80 = scalar_lea.smem %s0, 40
  %s81 = sld [smem:[%s80]]
  %s82 = scalar_lea.smem %s0, 41
  %s83 = sld [smem:[%s82]]
  %s84 = scalar_lea.smem %s0, 42
  %s85 = sld [smem:[%s84]]
  %s86 = scalar_lea.smem %s0, 43
  %s87 = sld [smem:[%s86]]
  %s88 = scalar_lea.smem %s0, 44
  %s89 = sld [smem:[%s88]]
  %s90 = sld [smem:[#allocation0]]
  $region202: #{forward.1} parent=0
    _
  %s92 = ssub.s32 1, %s90
  %s93 = scalar_select 0, %s92, %s90
  $region1: #{forward.1} parent=0
    #allocation2 [shape = 'u8[512]{0}', space=vmem, size = 0x400, scoped, tag = 'input window, operand 38, single buffered']
    #allocation3 [shape = 's32[1]{0}', space=sflag, size = 0x4, scoped, tag = 'scoped memory for forward.1']
    #allocation4 [shape = 'u8[512]{0}', space=vmem, size = 0x400, scoped, tag = 'input window, operand 39, single buffered']
    #allocation5 [shape = 's32[1]{0}', space=sflag, size = 0x4, scoped, tag = 'scoped memory for forward.1']
    #allocation6 [shape = 'u8[512]{0}', space=vmem, size = 0x400, scoped, tag = 'input window, operand 41, single buffered']
    #allocation7 [shape = 'u8[512]{0}', space=vmem, size = 0x400, scoped, tag = 'input window, operand 43, single buffered']
    #allocation8 [shape = 's32[1]{0}', space=sflag, size = 0x4, scoped, tag = 'scoped memory for forward.1']
    %94 = vsyncpa [#allocation3], 0
    %95 = vsyncpa [#allocation5], 0
    %96 = vsyncpa [#allocation8], 0
    // Predicated region
    $region2: #{forward.1} parent=1 // pred_check
      _
    $region3: #{forward.1} parent=1 // pred_check_branch
      %98 = sbr.rel (0) target = $region5
    $region4: #{forward.1} parent=1 // pred_region
      _
    $region5: #{forward.1} parent=1 // pred_fallthru
      _
    // Predicated region
    $region6: #{forward.1} parent=1 // pred_check
      _
    $region7: #{forward.1} parent=1 // pred_check_branch
      %100 = sbr.rel (0) target = $region9
    $region8: #{forward.1} parent=1 // pred_region
      _
    $region9: #{forward.1} parent=1 // pred_fallthru
      _
    // Predicated region
    $region10: #{forward.1} parent=1 // pred_check
      _
    $region11: #{forward.1} parent=1 // pred_check_branch
      %102 = sbr.rel (0) target = $region13
    $region12: #{forward.1} parent=1 // pred_region
      _
    $region13: #{forward.1} parent=1 // pred_fallthru
      _
    // Predicated region
    $region14: #{forward.1} parent=1 // pred_check
      _
    $region15: #{forward.1} parent=1 // pred_check_branch
      %104 = sbr.rel (0) target = $region17
    $region16: #{forward.1} parent=1 // pred_region
      _
    $region17: #{forward.1} parent=1 // pred_fallthru
      _
    // Predicated region
    $region18: #{forward.1} parent=1 // pred_check
      _
    $region19: #{forward.1} parent=1 // pred_check_branch
      %106 = sbr.rel (0) target = $region21
    $region20: #{forward.1} parent=1 // pred_region
      _
    $region21: #{forward.1} parent=1 // pred_fallthru
      _
    // Predicated region
    $region22: #{forward.1} parent=1 // pred_check
      _
    $region23: #{forward.1} parent=1 // pred_check_branch
      %108 = sbr.rel (0) target = $region25
    $region24: #{forward.1} parent=1 // pred_region
      _
    $region25: #{forward.1} parent=1 // pred_fallthru
      _
    // Predicated region
    $region26: #{forward.1} parent=1 // pred_check
      _
    $region27: #{forward.1} parent=1 // pred_check_branch
      %110 = sbr.rel (0) target = $region29
    $region28: #{forward.1} parent=1 // pred_region
      _
    $region29: #{forward.1} parent=1 // pred_fallthru
      _
    // Predicated region
    $region30: #{forward.1} parent=1 // pred_check
      _
    $region31: #{forward.1} parent=1 // pred_check_branch
      %112 = sbr.rel (0) target = $region33
    $region32: #{forward.1} parent=1 // pred_region
      _
    $region33: #{forward.1} parent=1 // pred_fallthru
      _
    // Predicated region
    $region34: #{forward.1} parent=1 // pred_check
      _
    $region35: #{forward.1} parent=1 // pred_check_branch
      %114 = sbr.rel (0) target = $region37
    $region36: #{forward.1} parent=1 // pred_region
      _
    $region37: #{forward.1} parent=1 // pred_fallthru
      _
    // Predicated region
    $region38: #{forward.1} parent=1 // pred_check
      _
    $region39: #{forward.1} parent=1 // pred_check_branch
      %116 = sbr.rel (0) target = $region41
    $region40: #{forward.1} parent=1 // pred_region
      _
    $region41: #{forward.1} parent=1 // pred_fallthru
      _
    // Predicated region
    $region42: #{forward.1} parent=1 // pred_check
      _
    $region43: #{forward.1} parent=1 // pred_check_branch
      %118 = sbr.rel (0) target = $region45
    $region44: #{forward.1} parent=1 // pred_region
      _
    $region45: #{forward.1} parent=1 // pred_fallthru
      _
    // Predicated region
    $region46: #{forward.1} parent=1 // pred_check
      _
    $region47: #{forward.1} parent=1 // pred_check_branch
      %120 = sbr.rel (0) target = $region49
    $region48: #{forward.1} parent=1 // pred_region
      _
    $region49: #{forward.1} parent=1 // pred_fallthru
      _
    // Predicated region
    $region50: #{forward.1} parent=1 // pred_check
      _
    $region51: #{forward.1} parent=1 // pred_check_branch
      %122 = sbr.rel (0) target = $region53
    $region52: #{forward.1} parent=1 // pred_region
      _
    $region53: #{forward.1} parent=1 // pred_fallthru
      _
    // Predicated region
    $region54: #{forward.1} parent=1 // pred_check
      _
    $region55: #{forward.1} parent=1 // pred_check_branch
      %124 = sbr.rel (0) target = $region57
    $region56: #{forward.1} parent=1 // pred_region
      _
    $region57: #{forward.1} parent=1 // pred_fallthru
      _
    // Predicated region
    $region58: #{forward.1} parent=1 // pred_check
      _
    $region59: #{forward.1} parent=1 // pred_check_branch
      %126 = sbr.rel (0) target = $region61
    $region60: #{forward.1} parent=1 // pred_region
      _
    $region61: #{forward.1} parent=1 // pred_fallthru
      _
    // Predicated region
    $region62: #{forward.1} parent=1 // pred_check
      _
    $region63: #{forward.1} parent=1 // pred_check_branch
      %128 = sbr.rel (0) target = $region65
    $region64: #{forward.1} parent=1 // pred_region
      _
    $region65: #{forward.1} parent=1 // pred_fallthru
      _
    // Predicated region
    $region66: #{forward.1} parent=1 // pred_check
      _
    $region67: #{forward.1} parent=1 // pred_check_branch
      %130 = sbr.rel (0) target = $region69
    $region68: #{forward.1} parent=1 // pred_region
      _
    $region69: #{forward.1} parent=1 // pred_fallthru
      _
    // Predicated region
    $region70: #{forward.1} parent=1 // pred_check
      _
    $region71: #{forward.1} parent=1 // pred_check_branch
      %132 = sbr.rel (0) target = $region73
    $region72: #{forward.1} parent=1 // pred_region
      _
    $region73: #{forward.1} parent=1 // pred_fallthru
      _
    // Predicated region
    $region74: #{forward.1} parent=1 // pred_check
      _
    $region75: #{forward.1} parent=1 // pred_check_branch
      %134 = sbr.rel (0) target = $region77
    $region76: #{forward.1} parent=1 // pred_region
      _
    $region77: #{forward.1} parent=1 // pred_fallthru
      _
    // Predicated region
    $region78: #{forward.1} parent=1 // pred_check
      _
    $region79: #{forward.1} parent=1 // pred_check_branch
      %136 = sbr.rel (0) target = $region81
    $region80: #{forward.1} parent=1 // pred_region
      _
    $region81: #{forward.1} parent=1 // pred_fallthru
      _
    // Predicated region
    $region82: #{forward.1} parent=1 // pred_check
      _
    $region83: #{forward.1} parent=1 // pred_check_branch
      %138 = sbr.rel (0) target = $region85
    $region84: #{forward.1} parent=1 // pred_region
      _
    $region85: #{forward.1} parent=1 // pred_fallthru
      _
    // Predicated region
    $region86: #{forward.1} parent=1 // pred_check
      _
    $region87: #{forward.1} parent=1 // pred_check_branch
      %140 = sbr.rel (0) target = $region89
    $region88: #{forward.1} parent=1 // pred_region
      _
    $region89: #{forward.1} parent=1 // pred_fallthru
      _
    // Predicated region
    $region90: #{forward.1} parent=1 // pred_check
      _
    $region91: #{forward.1} parent=1 // pred_check_branch
      %142 = sbr.rel (0) target = $region93
    $region92: #{forward.1} parent=1 // pred_region
      _
    $region93: #{forward.1} parent=1 // pred_fallthru
      _
    // Predicated region
    $region94: #{forward.1} parent=1 // pred_check
      _
    $region95: #{forward.1} parent=1 // pred_check_branch
      %144 = sbr.rel (0) target = $region97
    $region96: #{forward.1} parent=1 // pred_region
      _
    $region97: #{forward.1} parent=1 // pred_fallthru
      _
    // Predicated region
    $region98: #{forward.1} parent=1 // pred_check
      _
    $region99: #{forward.1} parent=1 // pred_check_branch
      %146 = sbr.rel (0) target = $region101
    $region100: #{forward.1} parent=1 // pred_region
      _
    $region101: #{forward.1} parent=1 // pred_fallthru
      _
    // Predicated region
    $region102: #{forward.1} parent=1 // pred_check
      _
    $region103: #{forward.1} parent=1 // pred_check_branch
      %148 = sbr.rel (0) target = $region105
    $region104: #{forward.1} parent=1 // pred_region
      _
    $region105: #{forward.1} parent=1 // pred_fallthru
      _
    // Predicated region
    $region106: #{forward.1} parent=1 // pred_check
      _
    $region107: #{forward.1} parent=1 // pred_check_branch
      %150 = sbr.rel (0) target = $region109
    $region108: #{forward.1} parent=1 // pred_region
      _
    $region109: #{forward.1} parent=1 // pred_fallthru
      _
    // Predicated region
    $region110: #{forward.1} parent=1 // pred_check
      _
    $region111: #{forward.1} parent=1 // pred_check_branch
      %152 = sbr.rel (0) target = $region113
    $region112: #{forward.1} parent=1 // pred_region
      _
    $region113: #{forward.1} parent=1 // pred_fallthru
      _
    // Predicated region
    $region114: #{forward.1} parent=1 // pred_check
      _
    $region115: #{forward.1} parent=1 // pred_check_branch
      %154 = sbr.rel (0) target = $region117
    $region116: #{forward.1} parent=1 // pred_region
      _
    $region117: #{forward.1} parent=1 // pred_fallthru
      _
    // Predicated region
    $region118: #{forward.1} parent=1 // pred_check
      _
    $region119: #{forward.1} parent=1 // pred_check_branch
      %156 = sbr.rel (0) target = $region121
    $region120: #{forward.1} parent=1 // pred_region
      _
    $region121: #{forward.1} parent=1 // pred_fallthru
      _
    // Predicated region
    $region122: #{forward.1} parent=1 // pred_check
      _
    $region123: #{forward.1} parent=1 // pred_check_branch
      %158 = sbr.rel (0) target = $region125
    $region124: #{forward.1} parent=1 // pred_region
      _
    $region125: #{forward.1} parent=1 // pred_fallthru
      _
    // Predicated region
    $region126: #{forward.1} parent=1 // pred_check
      _
    $region127: #{forward.1} parent=1 // pred_check_branch
      %160 = sbr.rel (0) target = $region129
    $region128: #{forward.1} parent=1 // pred_region
      _
    $region129: #{forward.1} parent=1 // pred_fallthru
      _
    // Predicated region
    $region130: #{forward.1} parent=1 // pred_check
      _
    $region131: #{forward.1} parent=1 // pred_check_branch
      %162 = sbr.rel (0) target = $region133
    $region132: #{forward.1} parent=1 // pred_region
      _
    $region133: #{forward.1} parent=1 // pred_fallthru
      _
    // Predicated region
    $region134: #{forward.1} parent=1 // pred_check
      _
    $region135: #{forward.1} parent=1 // pred_check_branch
      %164 = sbr.rel (0) target = $region137
    $region136: #{forward.1} parent=1 // pred_region
      _
    $region137: #{forward.1} parent=1 // pred_fallthru
      _
    // Predicated region
    $region138: #{forward.1} parent=1 // pred_check
      _
    $region139: #{forward.1} parent=1 // pred_check_branch
      %166 = sbr.rel (0) target = $region141
    $region140: #{forward.1} parent=1 // pred_region
      _
    $region141: #{forward.1} parent=1 // pred_fallthru
      _
    // Predicated region
    $region142: #{forward.1} parent=1 // pred_check
      _
    $region143: #{forward.1} parent=1 // pred_check_branch
      %168 = sbr.rel (0) target = $region145
    $region144: #{forward.1} parent=1 // pred_region
      _
    $region145: #{forward.1} parent=1 // pred_fallthru
      _
    // Predicated region
    $region146: #{forward.1} parent=1 // pred_check
      _
    $region147: #{forward.1} parent=1 // pred_check_branch
      %170 = sbr.rel (0) target = $region149
    $region148: #{forward.1} parent=1 // pred_region
      _
    $region149: #{forward.1} parent=1 // pred_fallthru
      _
    // Predicated region
    $region150: #{forward.1} parent=1 // pred_check
      _
    $region151: #{forward.1} parent=1 // pred_check_branch
      %172 = sbr.rel (0) target = $region153
    $region152: #{forward.1} parent=1 // pred_region
      _
    $region153: #{forward.1} parent=1 // pred_fallthru
      _
    // Predicated region
    $region154: #{forward.1} parent=1 // pred_check
      _
    $region155: #{forward.1} parent=1 // pred_check_branch
      %174 = sbr.rel (0) target = $region157
    $region156: #{forward.1} parent=1 // pred_region
      %176 = vsyncadd [#allocation3], 0
      %s178 = sshll.u32 %s77, 4
      %s179 = int_to_ptr.hbm [resolvable:$true] %s178
      %s180 = sshll.u32 [#allocation2], 4
      %s181 = int_to_ptr.vmem [resolvable:$true] %s180
      %183 = dma.hbm_to_vmem [thread:$0]  %s179, 16, %s181, [#allocation3]
    $region157: #{forward.1} parent=1 // pred_fallthru
      _
    // Predicated region
    $region158: #{forward.1} parent=1 // pred_check
      _
    $region159: #{forward.1} parent=1 // pred_check_branch
      %185 = sbr.rel (0) target = $region161
    $region160: #{forward.1} parent=1 // pred_region
      %187 = vsyncadd [#allocation5], 0
      %s189 = sshll.u32 %s79, 4
      %s190 = int_to_ptr.hbm [resolvable:$true] %s189
      %s191 = sshll.u32 [#allocation4], 4
      %s192 = int_to_ptr.vmem [resolvable:$true] %s191
      %194 = dma.hbm_to_vmem [thread:$0]  %s190, 16, %s192, [#allocation5]
    $region161: #{forward.1} parent=1 // pred_fallthru
      _
    // Predicated region
    $region162: #{forward.1} parent=1 // pred_check
      _
    $region163: #{forward.1} parent=1 // pred_check_branch
      %196 = sbr.rel (0) target = $region165
    $region164: #{forward.1} parent=1 // pred_region
      _
    $region165: #{forward.1} parent=1 // pred_fallthru
      _
    // Predicated region
    $region166: #{forward.1} parent=1 // pred_check
      _
    $region167: #{forward.1} parent=1 // pred_check_branch
      %198 = sbr.rel (0) target = $region169
    $region168: #{forward.1} parent=1 // pred_region
      %200 = vsyncadd [#allocation5], 0
      %s202 = sshll.u32 %s83, 4
      %s203 = int_to_ptr.hbm [resolvable:$true] %s202
      %s204 = sshll.u32 [#allocation6], 4
      %s205 = int_to_ptr.vmem [resolvable:$true] %s204
      %207 = dma.hbm_to_vmem [thread:$0]  %s203, 16, %s205, [#allocation5]
    $region169: #{forward.1} parent=1 // pred_fallthru
      _
    // Predicated region
    $region170: #{forward.1} parent=1 // pred_check
      _
    $region171: #{forward.1} parent=1 // pred_check_branch
      %209 = sbr.rel (0) target = $region173
    $region172: #{forward.1} parent=1 // pred_region
      _
    $region173: #{forward.1} parent=1 // pred_fallthru
      _
    // Predicated region
    $region174: #{forward.1} parent=1 // pred_check
      _
    $region175: #{forward.1} parent=1 // pred_check_branch
      %211 = sbr.rel (0) target = $region177
    $region176: #{forward.1} parent=1 // pred_region
      %213 = vsyncadd [#allocation8], 0
      %s215 = sshll.u32 %s87, 4
      %s216 = int_to_ptr.hbm [resolvable:$true] %s215
      %s217 = sshll.u32 [#allocation7], 4
      %s218 = int_to_ptr.vmem [resolvable:$true] %s217
      %220 = dma.hbm_to_vmem [thread:$0]  %s216, 16, %s218, [#allocation8]
    $region177: #{forward.1} parent=1 // pred_fallthru
      _
    // Predicated region
    $region178: #{forward.1} parent=1 // pred_check
      _
    $region179: #{forward.1} parent=1 // pred_check_branch
      %222 = sbr.rel (0) target = $region181
    $region180: #{forward.1} parent=1 // pred_region
      %224 = dma.done [#allocation3], 16
    $region181: #{forward.1} parent=1 // pred_fallthru
      _
    // Predicated region
    $region182: #{forward.1} parent=1 // pred_check
      _
    $region183: #{forward.1} parent=1 // pred_check_branch
      %226 = sbr.rel (0) target = $region185
    $region184: #{forward.1} parent=1 // pred_region
      %228 = dma.done [#allocation5], 16
    $region185: #{forward.1} parent=1 // pred_fallthru
      _
    // Predicated region
    $region186: #{forward.1} parent=1 // pred_check
      _
    $region187: #{forward.1} parent=1 // pred_check_branch
      %230 = sbr.rel (0) target = $region189
    $region188: #{forward.1} parent=1 // pred_region
      %232 = dma.done [#allocation5], 16
    $region189: #{forward.1} parent=1 // pred_fallthru
      _
    // Predicated region
    $region190: #{forward.1} parent=1 // pred_check
      _
    $region191: #{forward.1} parent=1 // pred_check_branch
      %234 = sbr.rel (0) target = $region193
    $region192: #{forward.1} parent=1 // pred_region
      %236 = dma.done [#allocation8], 16
    $region193: #{forward.1} parent=1 // pred_fallthru
      _
    %v237 = vld [vmem:[%s1] sm:$0xff]
    %v238 = vld [vmem:[%s1 + $0x8] sm:$0xff]
    %v239 = vld [vmem:[%s3] sm:$0xff]
    %v240 = vld [vmem:[%s3 + $0x8] sm:$0xff]
    %v241 = vld [vmem:[%s5] sm:$0xff]
    %v242 = vld [vmem:[%s5 + $0x8] sm:$0xff]
    %v243 = vld [vmem:[%s7] sm:$0x1]
    %v245 = vperm.slane %v243, 0
    %vm247 = vcmask 130048
    %v249 = vsel %vm247, %v237, 0
    %v252 = vsel %vm247, %v238, 0
    %254 = vmatpush.msra.mxu0 0.0
    %255 = vmatpush.msra.mxu0 0.0
    %256 = vmatpush.msra.mxu0 0.0
    %257 = vmatpush.msra.mxu0 0.0
    %258 = vmatpush.msra.mxu0 0.0
    %259 = vmatpush.msra.mxu0 0.0
    %260 = vmatpush.msra.mxu0 0.0
    %261 = vmatpush.msra.mxu0 0.0
    %262 = vmatpush.msra.mxu0 0.0
    %263 = vmatpush.msra.mxu0 0.0
    %264 = vmatpush.msra.mxu0 0.0
    %265 = vmatpush.msra.mxu0 0.0
    %266 = vmatpush.msra.mxu0 0.0
    %267 = vmatpush.msra.mxu0 0.0
    %268 = vmatpush.msra.mxu0 %v242
    %269 = vmatpush.msra.mxu0 %v241
    %270 = vmatmul.f32.gmra.mxu0 %v249
    %v271 = vpop.f32.mrf.mxu0
    %v272 = vadd.f32 %v245, %v271
    %273 = vmatmul.f32.gmra.mxu0 %v252
    %v274 = vpop.f32.mrf.mxu0
    %v275 = vadd.f32 %v245, %v274
    %276 = vdwg.mxu0
    %v277 = vld [vmem:[%s9] sm:$0x7]
    %v278 = vld [vmem:[%s11] sm:$0x1]
    %v280 = vperm.slane %v278, 0
    %vm282 = vcmask 23552
    %v284 = vsel %vm282, %v239, 0
    %v287 = vsel %vm282, %v240, 0
    %vm289 = vcmask 1042432
    %v291 = vsel %vm289, %v277, 0
    %293 = vmatpush.msra.mxu0 0.0
    %294 = vmatpush.msra.mxu0 0.0
    %295 = vmatpush.msra.mxu0 0.0
    %296 = vmatpush.msra.mxu0 0.0
    %297 = vmatpush.msra.mxu0 0.0
    %298 = vmatpush.msra.mxu0 0.0
    %299 = vmatpush.msra.mxu0 0.0
    %300 = vmatpush.msra.mxu0 0.0
    %301 = vmatpush.msra.mxu0 0.0
    %302 = vmatpush.msra.mxu0 0.0
    %303 = vmatpush.msra.mxu0 0.0
    %304 = vmatpush.msra.mxu0 0.0
    %305 = vmatpush.msra.mxu0 0.0
    %306 = vmatpush.msra.mxu0 0.0
    %307 = vmatpush.msra.mxu0 0.0
    %308 = vmatpush.msra.mxu0 %v291
    %309 = vmatmul.f32.gmra.mxu0 %v284
    %v310 = vpop.f32.mrf.mxu0
    %v311 = vadd.f32 %v280, %v310
    %312 = vmatmul.f32.gmra.mxu0 %v287
    %v313 = vpop.f32.mrf.mxu0
    %v314 = vadd.f32 %v280, %v313
    %315 = vdwg.mxu0
    %v316 = vlaneseq
    %v317 = vand.u32 %v316, 127
    %vm318 = vcmp.ge.s32.totalorder %v317, 0
    %vm319 = vcmp.lt.s32.totalorder %v317, 8
    %vm320 = vmand %vm318, %vm319
    %v321 = vsel %vm320, 1, 0
    %v322 = vcvt.s32.f32 %v321
    %vm323 = vcmp.ge.s32.totalorder %v317, 8
    %vm324 = vcmp.lt.s32.totalorder %v317, 16
    %vm325 = vmand %vm323, %vm324
    %v326 = vsel %vm325, 1, 0
    %v327 = vcvt.s32.f32 %v326
    %vm328 = vcmp.ge.s32.totalorder %v317, 16
    %vm329 = vcmp.lt.s32.totalorder %v317, 24
    %vm330 = vmand %vm328, %vm329
    %v331 = vsel %vm330, 1, 0
    %v332 = vcvt.s32.f32 %v331
    %vm333 = vcmp.ge.s32.totalorder %v317, 24
    %vm334 = vcmp.lt.s32.totalorder %v317, 32
    %vm335 = vmand %vm333, %vm334
    %v336 = vsel %vm335, 1, 0
    %v337 = vcvt.s32.f32 %v336
    %v338 = vld [vmem:[%s13] sm:$0xff]
    %v339 = vld [vmem:[%s13 + $0x8] sm:$0xff]
    %v340 = vld [vmem:[%s13 + $0x10] sm:$0xff]
    %v341 = vld [vmem:[%s13 + $0x18] sm:$0xff]
    %v342 = vld [vmem:[%s15] sm:$0x1]
    %v344 = vperm.slane %v342, 0
    %vm346 = vcmask 261120
    %v348 = vsel %vm346, %v311, 0
    %v351 = vsel %vm346, %v314, 0
    %353 = vmatpush.msra.mxu0 0.0
    %354 = vmatpush.msra.mxu0 0.0
    %355 = vmatpush.msra.mxu0 0.0
    %356 = vmatpush.msra.mxu0 0.0
    %357 = vmatpush.msra.mxu0 0.0
    %358 = vmatpush.msra.mxu0 0.0
    %359 = vmatpush.msra.mxu0 0.0
    %360 = vmatpush.msra.mxu0 0.0
    %361 = vmatpush.msra.mxu0 0.0
    %362 = vmatpush.msra.mxu0 0.0
    %363 = vmatpush.msra.mxu0 0.0
    %364 = vmatpush.msra.mxu0 0.0
    %365 = vmatpush.msra.mxu0 %v341
    %366 = vmatpush.msra.mxu0 %v340
    %367 = vmatpush.msra.mxu0 %v339
    %368 = vmatpush.msra.mxu0 %v338
    %369 = vmatmul.f32.gmra.mxu0 %v348
    %v370 = vpop.f32.mrf.mxu0
    %v371 = vadd.f32 %v344, %v370
    %372 = vmatmul.f32.gmra.mxu0 %v351
    %v373 = vpop.f32.mrf.mxu0
    %v374 = vadd.f32 %v344, %v373
    %375 = vdwg.mxu0
    %v376 = vld [vmem:[%s17] sm:$0xff]
    %v377 = vld [vmem:[%s17 + $0x8] sm:$0xff]
    %v378 = vld [vmem:[%s17 + $0x10] sm:$0xff]
    %v379 = vld [vmem:[%s17 + $0x18] sm:$0xff]
    %v380 = vld [vmem:[%s19] sm:$0x1]
    %v382 = vperm.slane %v380, 0
    %v385 = vsel %vm346, %v272, 0
    %v388 = vsel %vm346, %v275, 0
    %390 = vmatpush.msra.mxu0 0.0
    %391 = vmatpush.msra.mxu0 0.0
    %392 = vmatpush.msra.mxu0 0.0
    %393 = vmatpush.msra.mxu0 0.0
    %394 = vmatpush.msra.mxu0 0.0
    %395 = vmatpush.msra.mxu0 0.0
    %396 = vmatpush.msra.mxu0 0.0
    %397 = vmatpush.msra.mxu0 0.0
    %398 = vmatpush.msra.mxu0 0.0
    %399 = vmatpush.msra.mxu0 0.0
    %400 = vmatpush.msra.mxu0 0.0
    %401 = vmatpush.msra.mxu0 0.0
    %402 = vmatpush.msra.mxu0 %v379
    %403 = vmatpush.msra.mxu0 %v378
    %404 = vmatpush.msra.mxu0 %v377
    %405 = vmatpush.msra.mxu0 %v376
    %406 = vmatmul.f32.gmra.mxu0 %v385
    %v407 = vpop.f32.mrf.mxu0
    %v408 = vadd.f32 %v382, %v407
    %409 = vmatmul.f32.gmra.mxu0 %v388
    %v410 = vpop.f32.mrf.mxu0
    %v411 = vadd.f32 %v382, %v410
    %412 = vdwg.mxu0
    %v413 = vld [vmem:[%s21] sm:$0xff]
    %v414 = vld [vmem:[%s21 + $0x8] sm:$0xff]
    %v415 = vld [vmem:[%s21 + $0x10] sm:$0xff]
    %v416 = vld [vmem:[%s21 + $0x18] sm:$0xff]
    %v417 = vld [vmem:[%s23] sm:$0x1]
    %v419 = vperm.slane %v417, 0
    %421 = vmatpush.msra.mxu0 0.0
    %422 = vmatpush.msra.mxu0 0.0
    %423 = vmatpush.msra.mxu0 0.0
    %424 = vmatpush.msra.mxu0 0.0
    %425 = vmatpush.msra.mxu0 0.0
    %426 = vmatpush.msra.mxu0 0.0
    %427 = vmatpush.msra.mxu0 0.0
    %428 = vmatpush.msra.mxu0 0.0
    %429 = vmatpush.msra.mxu0 0.0
    %430 = vmatpush.msra.mxu0 0.0
    %431 = vmatpush.msra.mxu0 0.0
    %432 = vmatpush.msra.mxu0 0.0
    %433 = vmatpush.msra.mxu0 %v416
    %434 = vmatpush.msra.mxu0 %v415
    %435 = vmatpush.msra.mxu0 %v414
    %436 = vmatpush.msra.mxu0 %v413
    %437 = vmatmul.f32.gmra.mxu0 %v385
    %v438 = vpop.f32.mrf.mxu0
    %v439 = vadd.f32 %v419, %v438
    %440 = vmatmul.f32.gmra.mxu0 %v388
    %v441 = vpop.f32.mrf.mxu0
    %v442 = vadd.f32 %v419, %v441
    %443 = vdwg.mxu0
    %v444 = vmul.f32 %v371, %v322
    %v445 = vmul.f32 %v374, %v322
    %v447 = vsel %vm346, %v444, 0
    %v450 = vsel %vm346, %v408, 0
    %452 = vmatpush.xpose.msra.mxu0 0.0
    %453 = vmatpush.xpose.msra.mxu0 0.0
    %454 = vmatpush.xpose.msra.mxu0 0.0
    %455 = vmatpush.xpose.msra.mxu0 0.0
    %456 = vmatpush.xpose.msra.mxu0 0.0
    %457 = vmatpush.xpose.msra.mxu0 0.0
    %458 = vmatpush.xpose.msra.mxu0 0.0
    %459 = vmatpush.xpose.msra.mxu0 0.0
    %460 = vmatpush.xpose.msra.mxu0 0.0
    %461 = vmatpush.xpose.msra.mxu0 0.0
    %462 = vmatpush.xpose.msra.mxu0 0.0
    %463 = vmatpush.xpose.msra.mxu0 0.0
    %464 = vmatpush.xpose.msra.mxu0 0.0
    %465 = vmatpush.xpose.msra.mxu0 0.0
    %466 = vmatpush.xpose.msra.mxu0 0.0
    %467 = vmatpush.xpose.msra.mxu0 %v450
    %468 = vmatmul.f32.gmra.mxu0 %v447
    %v469 = vpop.f32.mrf.mxu0
    %v470 = vadd.f32 0.0, %v469
    %471 = vdwg.mxu0
    %v473 = vsel %vm346, %v445, 0
    %v476 = vsel %vm346, %v411, 0
    %478 = vmatpush.xpose.msra.mxu0 0.0
    %479 = vmatpush.xpose.msra.mxu0 0.0
    %480 = vmatpush.xpose.msra.mxu0 0.0
    %481 = vmatpush.xpose.msra.mxu0 0.0
    %482 = vmatpush.xpose.msra.mxu0 0.0
    %483 = vmatpush.xpose.msra.mxu0 0.0
    %484 = vmatpush.xpose.msra.mxu0 0.0
    %485 = vmatpush.xpose.msra.mxu0 0.0
    %486 = vmatpush.xpose.msra.mxu0 0.0
    %487 = vmatpush.xpose.msra.mxu0 0.0
    %488 = vmatpush.xpose.msra.mxu0 0.0
    %489 = vmatpush.xpose.msra.mxu0 0.0
    %490 = vmatpush.xpose.msra.mxu0 0.0
    %491 = vmatpush.xpose.msra.mxu0 0.0
    %492 = vmatpush.xpose.msra.mxu0 0.0
    %493 = vmatpush.xpose.msra.mxu0 %v476
    %494 = vmatmul.f32.gmra.mxu0 %v473
    %v495 = vpop.f32.mrf.mxu0
    %v496 = vadd.f32 0.0, %v495
    %497 = vdwg.mxu0
    %v498 = vmul.f32 %v470, 0.35355338
    %v499 = vmul.f32 %v496, 0.35355338
    %vm500 = vcmask 64512
    %v501 = vsel %vm500, %v498, -inf
    %502 = vmax.xlane.f32.xlu0 %v501
    %v503 = vpop.xlane.xlu0 %502
    %v504 = vsel %vm500, %v499, -inf
    %505 = vmax.xlane.f32.xlu0 %v504
    %v506 = vpop.xlane.xlu0 %505
    %v507 = vsub.f32 %v498, %v503
    %v508 = vsub.f32 %v499, %v506
    %v509 = vmul.f32 %v507, 1.442695
    %v510 = vpow.pop %v509
    %v511 = vmul.f32 %v508, 1.442695
    %v512 = vpow.pop %v511
    %v513 = vsel %vm500, %v510, 0.0
    %514 = vadd.xlane.f32.xlu0 %v513
    %v515 = vpop.xlane.xlu0 %514
    %v516 = vsel %vm500, %v512, 0.0
    %517 = vadd.xlane.f32.xlu0 %v516
    %v518 = vpop.xlane.xlu0 %517
    %v519 = vrcp.pop %v515
    %v520 = vrcp.pop %v518
    %v521 = vmul.f32 %v510, %v519
    %v522 = vmul.f32 %v512, %v520
    %v523 = vmul.f32 %v439, %v322
    %v524 = vmul.f32 %v442, %v322
    %v525 = vmul.f32 %v371, %v327
    %v526 = vmul.f32 %v374, %v327
    %v528 = vsel %vm346, %v525, 0
    %530 = vmatpush.xpose.msra.mxu0 0.0
    %531 = vmatpush.xpose.msra.mxu0 0.0
    %532 = vmatpush.xpose.msra.mxu0 0.0
    %533 = vmatpush.xpose.msra.mxu0 0.0
    %534 = vmatpush.xpose.msra.mxu0 0.0
    %535 = vmatpush.xpose.msra.mxu0 0.0
    %536 = vmatpush.xpose.msra.mxu0 0.0
    %537 = vmatpush.xpose.msra.mxu0 0.0
    %538 = vmatpush.xpose.msra.mxu0 0.0
    %539 = vmatpush.xpose.msra.mxu0 0.0
    %540 = vmatpush.xpose.msra.mxu0 0.0
    %541 = vmatpush.xpose.msra.mxu0 0.0
    %542 = vmatpush.xpose.msra.mxu0 0.0
    %543 = vmatpush.xpose.msra.mxu0 0.0
    %544 = vmatpush.xpose.msra.mxu0 0.0
    %545 = vmatpush.xpose.msra.mxu0 %v450
    %546 = vmatmul.f32.gmra.mxu0 %v528
    %v547 = vpop.f32.mrf.mxu0
    %v548 = vadd.f32 0.0, %v547
    %549 = vdwg.mxu0
    %v551 = vsel %vm346, %v526, 0
    %553 = vmatpush.xpose.msra.mxu0 0.0
    %554 = vmatpush.xpose.msra.mxu0 0.0
    %555 = vmatpush.xpose.msra.mxu0 0.0
    %556 = vmatpush.xpose.msra.mxu0 0.0
    %557 = vmatpush.xpose.msra.mxu0 0.0
    %558 = vmatpush.xpose.msra.mxu0 0.0
    %559 = vmatpush.xpose.msra.mxu0 0.0
    %560 = vmatpush.xpose.msra.mxu0 0.0
    %561 = vmatpush.xpose.msra.mxu0 0.0
    %562 = vmatpush.xpose.msra.mxu0 0.0
    %563 = vmatpush.xpose.msra.mxu0 0.0
    %564 = vmatpush.xpose.msra.mxu0 0.0
    %565 = vmatpush.xpose.msra.mxu0 0.0
    %566 = vmatpush.xpose.msra.mxu0 0.0
    %567 = vmatpush.xpose.msra.mxu0 0.0
    %568 = vmatpush.xpose.msra.mxu0 %v476
    %569 = vmatmul.f32.gmra.mxu0 %v551
    %v570 = vpop.f32.mrf.mxu0
    %v571 = vadd.f32 0.0, %v570
    %572 = vdwg.mxu0
    %v573 = vmul.f32 %v548, 0.35355338
    %v574 = vmul.f32 %v571, 0.35355338
    %v575 = vsel %vm500, %v573, -inf
    %576 = vmax.xlane.f32.xlu0 %v575
    %v577 = vpop.xlane.xlu0 %576
    %v578 = vsel %vm500, %v574, -inf
    %579 = vmax.xlane.f32.xlu0 %v578
    %v580 = vpop.xlane.xlu0 %579
    %v581 = vsub.f32 %v573, %v577
    %v582 = vsub.f32 %v574, %v580
    %v583 = vmul.f32 %v581, 1.442695
    %v584 = vpow.pop %v583
    %v585 = vmul.f32 %v582, 1.442695
    %v586 = vpow.pop %v585
    %v587 = vsel %vm500, %v584, 0.0
    %588 = vadd.xlane.f32.xlu0 %v587
    %v589 = vpop.xlane.xlu0 %588
    %v590 = vsel %vm500, %v586, 0.0
    %591 = vadd.xlane.f32.xlu0 %v590
    %v592 = vpop.xlane.xlu0 %591
    %v593 = vrcp.pop %v589
    %v594 = vrcp.pop %v592
    %v595 = vmul.f32 %v584, %v593
    %v596 = vmul.f32 %v586, %v594
    %v597 = vmul.f32 %v439, %v327
    %v598 = vmul.f32 %v442, %v327
    %v600 = vsel %vm500, %v595, 0
    %602 = vmatpush.msra.mxu0 0.0
    %603 = vmatpush.msra.mxu0 0.0
    %604 = vmatpush.msra.mxu0 0.0
    %605 = vmatpush.msra.mxu0 0.0
    %606 = vmatpush.msra.mxu0 0.0
    %607 = vmatpush.msra.mxu0 0.0
    %608 = vmatpush.msra.mxu0 0.0
    %609 = vmatpush.msra.mxu0 0.0
    %610 = vmatpush.msra.mxu0 0.0
    %611 = vmatpush.msra.mxu0 0.0
    %612 = vmatpush.msra.mxu0 0.0
    %613 = vmatpush.msra.mxu0 0.0
    %614 = vmatpush.msra.mxu0 0.0
    %615 = vmatpush.msra.mxu0 0.0
    %616 = vmatpush.msra.mxu0 0.0
    %617 = vmatpush.msra.mxu0 %v597
    %618 = vmatmul.f32.gmra.mxu0 %v600
    %v619 = vpop.f32.mrf.mxu0
    %v620 = vadd.f32 0.0, %v619
    %621 = vdwg.mxu0
    %v623 = vsel %vm500, %v596, 0
    %625 = vmatpush.msra.mxu0 0.0
    %626 = vmatpush.msra.mxu0 0.0
    %627 = vmatpush.msra.mxu0 0.0
    %628 = vmatpush.msra.mxu0 0.0
    %629 = vmatpush.msra.mxu0 0.0
    %630 = vmatpush.msra.mxu0 0.0
    %631 = vmatpush.msra.mxu0 0.0
    %632 = vmatpush.msra.mxu0 0.0
    %633 = vmatpush.msra.mxu0 0.0
    %634 = vmatpush.msra.mxu0 0.0
    %635 = vmatpush.msra.mxu0 0.0
    %636 = vmatpush.msra.mxu0 0.0
    %637 = vmatpush.msra.mxu0 0.0
    %638 = vmatpush.msra.mxu0 0.0
    %639 = vmatpush.msra.mxu0 0.0
    %640 = vmatpush.msra.mxu0 %v598
    %641 = vmatmul.f32.gmra.mxu0 %v623
    %v642 = vpop.f32.mrf.mxu0
    %v643 = vadd.f32 0.0, %v642
    %644 = vdwg.mxu0
    %v646 = vsel %vm500, %v521, 0
    %648 = vmatpush.msra.mxu0 0.0
    %649 = vmatpush.msra.mxu0 0.0
    %650 = vmatpush.msra.mxu0 0.0
    %651 = vmatpush.msra.mxu0 0.0
    %652 = vmatpush.msra.mxu0 0.0
    %653 = vmatpush.msra.mxu0 0.0
    %654 = vmatpush.msra.mxu0 0.0
    %655 = vmatpush.msra.mxu0 0.0
    %656 = vmatpush.msra.mxu0 0.0
    %657 = vmatpush.msra.mxu0 0.0
    %658 = vmatpush.msra.mxu0 0.0
    %659 = vmatpush.msra.mxu0 0.0
    %660 = vmatpush.msra.mxu0 0.0
    %661 = vmatpush.msra.mxu0 0.0
    %662 = vmatpush.msra.mxu0 0.0
    %663 = vmatpush.msra.mxu0 %v523
    %664 = vmatmul.f32.gmra.mxu0 %v646
    %v665 = vpop.f32.mrf.mxu0
    %v666 = vadd.f32 %v620, %v665
    %667 = vdwg.mxu0
    %v669 = vsel %vm500, %v522, 0
    %671 = vmatpush.msra.mxu0 0.0
    %672 = vmatpush.msra.mxu0 0.0
    %673 = vmatpush.msra.mxu0 0.0
    %674 = vmatpush.msra.mxu0 0.0
    %675 = vmatpush.msra.mxu0 0.0
    %676 = vmatpush.msra.mxu0 0.0
    %677 = vmatpush.msra.mxu0 0.0
    %678 = vmatpush.msra.mxu0 0.0
    %679 = vmatpush.msra.mxu0 0.0
    %680 = vmatpush.msra.mxu0 0.0
    %681 = vmatpush.msra.mxu0 0.0
    %682 = vmatpush.msra.mxu0 0.0
    %683 = vmatpush.msra.mxu0 0.0
    %684 = vmatpush.msra.mxu0 0.0
    %685 = vmatpush.msra.mxu0 0.0
    %686 = vmatpush.msra.mxu0 %v524
    %687 = vmatmul.f32.gmra.mxu0 %v669
    %v688 = vpop.f32.mrf.mxu0
    %v689 = vadd.f32 %v643, %v688
    %690 = vdwg.mxu0
    %v691 = vmul.f32 %v371, %v332
    %v692 = vmul.f32 %v374, %v332
    %v694 = vsel %vm346, %v691, 0
    %696 = vmatpush.xpose.msra.mxu0 0.0
    %697 = vmatpush.xpose.msra.mxu0 0.0
    %698 = vmatpush.xpose.msra.mxu0 0.0
    %699 = vmatpush.xpose.msra.mxu0 0.0
    %700 = vmatpush.xpose.msra.mxu0 0.0
    %701 = vmatpush.xpose.msra.mxu0 0.0
    %702 = vmatpush.xpose.msra.mxu0 0.0
    %703 = vmatpush.xpose.msra.mxu0 0.0
    %704 = vmatpush.xpose.msra.mxu0 0.0
    %705 = vmatpush.xpose.msra.mxu0 0.0
    %706 = vmatpush.xpose.msra.mxu0 0.0
    %707 = vmatpush.xpose.msra.mxu0 0.0
    %708 = vmatpush.xpose.msra.mxu0 0.0
    %709 = vmatpush.xpose.msra.mxu0 0.0
    %710 = vmatpush.xpose.msra.mxu0 0.0
    %711 = vmatpush.xpose.msra.mxu0 %v450
    %712 = vmatmul.f32.gmra.mxu0 %v694
    %v713 = vpop.f32.mrf.mxu0
    %v714 = vadd.f32 0.0, %v713
    %715 = vdwg.mxu0
    %v717 = vsel %vm346, %v692, 0
    %719 = vmatpush.xpose.msra.mxu0 0.0
    %720 = vmatpush.xpose.msra.mxu0 0.0
    %721 = vmatpush.xpose.msra.mxu0 0.0
    %722 = vmatpush.xpose.msra.mxu0 0.0
    %723 = vmatpush.xpose.msra.mxu0 0.0
    %724 = vmatpush.xpose.msra.mxu0 0.0
    %725 = vmatpush.xpose.msra.mxu0 0.0
    %726 = vmatpush.xpose.msra.mxu0 0.0
    %727 = vmatpush.xpose.msra.mxu0 0.0
    %728 = vmatpush.xpose.msra.mxu0 0.0
    %729 = vmatpush.xpose.msra.mxu0 0.0
    %730 = vmatpush.xpose.msra.mxu0 0.0
    %731 = vmatpush.xpose.msra.mxu0 0.0
    %732 = vmatpush.xpose.msra.mxu0 0.0
    %733 = vmatpush.xpose.msra.mxu0 0.0
    %734 = vmatpush.xpose.msra.mxu0 %v476
    %735 = vmatmul.f32.gmra.mxu0 %v717
    %v736 = vpop.f32.mrf.mxu0
    %v737 = vadd.f32 0.0, %v736
    %738 = vdwg.mxu0
    %v739 = vmul.f32 %v714, 0.35355338
    %v740 = vmul.f32 %v737, 0.35355338
    %v741 = vsel %vm500, %v739, -inf
    %742 = vmax.xlane.f32.xlu0 %v741
    %v743 = vpop.xlane.xlu0 %742
    %v744 = vsel %vm500, %v740, -inf
    %745 = vmax.xlane.f32.xlu0 %v744
    %v746 = vpop.xlane.xlu0 %745
    %v747 = vsub.f32 %v739, %v743
    %v748 = vsub.f32 %v740, %v746
    %v749 = vmul.f32 %v747, 1.442695
    %v750 = vpow.pop %v749
    %v751 = vmul.f32 %v748, 1.442695
    %v752 = vpow.pop %v751
    %v753 = vsel %vm500, %v750, 0.0
    %754 = vadd.xlane.f32.xlu0 %v753
    %v755 = vpop.xlane.xlu0 %754
    %v756 = vsel %vm500, %v752, 0.0
    %757 = vadd.xlane.f32.xlu0 %v756
    %v758 = vpop.xlane.xlu0 %757
    %v759 = vrcp.pop %v755
    %v760 = vrcp.pop %v758
    %v761 = vmul.f32 %v750, %v759
    %v762 = vmul.f32 %v752, %v760
    %v763 = vmul.f32 %v439, %v332
    %v764 = vmul.f32 %v442, %v332
    %v766 = vsel %vm500, %v761, 0
    %768 = vmatpush.msra.mxu0 0.0
    %769 = vmatpush.msra.mxu0 0.0
    %770 = vmatpush.msra.mxu0 0.0
    %771 = vmatpush.msra.mxu0 0.0
    %772 = vmatpush.msra.mxu0 0.0
    %773 = vmatpush.msra.mxu0 0.0
    %774 = vmatpush.msra.mxu0 0.0
    %775 = vmatpush.msra.mxu0 0.0
    %776 = vmatpush.msra.mxu0 0.0
    %777 = vmatpush.msra.mxu0 0.0
    %778 = vmatpush.msra.mxu0 0.0
    %779 = vmatpush.msra.mxu0 0.0
    %780 = vmatpush.msra.mxu0 0.0
    %781 = vmatpush.msra.mxu0 0.0
    %782 = vmatpush.msra.mxu0 0.0
    %783 = vmatpush.msra.mxu0 %v763
    %784 = vmatmul.f32.gmra.mxu0 %v766
    %v785 = vpop.f32.mrf.mxu0
    %v786 = vadd.f32 0.0, %v785
    %787 = vdwg.mxu0
    %v789 = vsel %vm500, %v762, 0
    %791 = vmatpush.msra.mxu0 0.0
    %792 = vmatpush.msra.mxu0 0.0
    %793 = vmatpush.msra.mxu0 0.0
    %794 = vmatpush.msra.mxu0 0.0
    %795 = vmatpush.msra.mxu0 0.0
    %796 = vmatpush.msra.mxu0 0.0
    %797 = vmatpush.msra.mxu0 0.0
    %798 = vmatpush.msra.mxu0 0.0
    %799 = vmatpush.msra.mxu0 0.0
    %800 = vmatpush.msra.mxu0 0.0
    %801 = vmatpush.msra.mxu0 0.0
    %802 = vmatpush.msra.mxu0 0.0
    %803 = vmatpush.msra.mxu0 0.0
    %804 = vmatpush.msra.mxu0 0.0
    %805 = vmatpush.msra.mxu0 0.0
    %806 = vmatpush.msra.mxu0 %v764
    %807 = vmatmul.f32.gmra.mxu0 %v789
    %v808 = vpop.f32.mrf.mxu0
    %v809 = vadd.f32 0.0, %v808
    %810 = vdwg.mxu0
    %v811 = vadd.f32 %v666, %v786
    %v812 = vadd.f32 %v689, %v809
    %v813 = vmul.f32 %v371, %v337
    %v814 = vmul.f32 %v374, %v337
    %v816 = vsel %vm346, %v813, 0
    %818 = vmatpush.xpose.msra.mxu0 0.0
    %819 = vmatpush.xpose.msra.mxu0 0.0
    %820 = vmatpush.xpose.msra.mxu0 0.0
    %821 = vmatpush.xpose.msra.mxu0 0.0
    %822 = vmatpush.xpose.msra.mxu0 0.0
    %823 = vmatpush.xpose.msra.mxu0 0.0
    %824 = vmatpush.xpose.msra.mxu0 0.0
    %825 = vmatpush.xpose.msra.mxu0 0.0
    %826 = vmatpush.xpose.msra.mxu0 0.0
    %827 = vmatpush.xpose.msra.mxu0 0.0
    %828 = vmatpush.xpose.msra.mxu0 0.0
    %829 = vmatpush.xpose.msra.mxu0 0.0
    %830 = vmatpush.xpose.msra.mxu0 0.0
    %831 = vmatpush.xpose.msra.mxu0 0.0
    %832 = vmatpush.xpose.msra.mxu0 0.0
    %833 = vmatpush.xpose.msra.mxu0 %v450
    %834 = vmatmul.f32.gmra.mxu0 %v816
    %v835 = vpop.f32.mrf.mxu0
    %v836 = vadd.f32 0.0, %v835
    %837 = vdwg.mxu0
    %v839 = vsel %vm346, %v814, 0
    %841 = vmatpush.xpose.msra.mxu0 0.0
    %842 = vmatpush.xpose.msra.mxu0 0.0
    %843 = vmatpush.xpose.msra.mxu0 0.0
    %844 = vmatpush.xpose.msra.mxu0 0.0
    %845 = vmatpush.xpose.msra.mxu0 0.0
    %846 = vmatpush.xpose.msra.mxu0 0.0
    %847 = vmatpush.xpose.msra.mxu0 0.0
    %848 = vmatpush.xpose.msra.mxu0 0.0
    %849 = vmatpush.xpose.msra.mxu0 0.0
    %850 = vmatpush.xpose.msra.mxu0 0.0
    %851 = vmatpush.xpose.msra.mxu0 0.0
    %852 = vmatpush.xpose.msra.mxu0 0.0
    %853 = vmatpush.xpose.msra.mxu0 0.0
    %854 = vmatpush.xpose.msra.mxu0 0.0
    %855 = vmatpush.xpose.msra.mxu0 0.0
    %856 = vmatpush.xpose.msra.mxu0 %v476
    %857 = vmatmul.f32.gmra.mxu0 %v839
    %v858 = vpop.f32.mrf.mxu0
    %v859 = vadd.f32 0.0, %v858
    %860 = vdwg.mxu0
    %v861 = vmul.f32 %v836, 0.35355338
    %v862 = vmul.f32 %v859, 0.35355338
    %v863 = vsel %vm500, %v861, -inf
    %864 = vmax.xlane.f32.xlu0 %v863
    %v865 = vpop.xlane.xlu0 %864
    %v866 = vsel %vm500, %v862, -inf
    %867 = vmax.xlane.f32.xlu0 %v866
    %v868 = vpop.xlane.xlu0 %867
    %v869 = vsub.f32 %v861, %v865
    %v870 = vsub.f32 %v862, %v868
    %v871 = vmul.f32 %v869, 1.442695
    %v872 = vpow.pop %v871
    %v873 = vmul.f32 %v870, 1.442695
    %v874 = vpow.pop %v873
    %v875 = vsel %vm500, %v872, 0.0
    %876 = vadd.xlane.f32.xlu0 %v875
    %v877 = vpop.xlane.xlu0 %876
    %v878 = vsel %vm500, %v874, 0.0
    %879 = vadd.xlane.f32.xlu0 %v878
    %v880 = vpop.xlane.xlu0 %879
    %v881 = vrcp.pop %v877
    %v882 = vrcp.pop %v880
    %v883 = vmul.f32 %v872, %v881
    %v884 = vmul.f32 %v874, %v882
    %v885 = vmul.f32 %v439, %v337
    %v886 = vmul.f32 %v442, %v337
    %v888 = vsel %vm500, %v883, 0
    %890 = vmatpush.msra.mxu0 0.0
    %891 = vmatpush.msra.mxu0 0.0
    %892 = vmatpush.msra.mxu0 0.0
    %893 = vmatpush.msra.mxu0 0.0
    %894 = vmatpush.msra.mxu0 0.0
    %895 = vmatpush.msra.mxu0 0.0
    %896 = vmatpush.msra.mxu0 0.0
    %897 = vmatpush.msra.mxu0 0.0
    %898 = vmatpush.msra.mxu0 0.0
    %899 = vmatpush.msra.mxu0 0.0
    %900 = vmatpush.msra.mxu0 0.0
    %901 = vmatpush.msra.mxu0 0.0
    %902 = vmatpush.msra.mxu0 0.0
    %903 = vmatpush.msra.mxu0 0.0
    %904 = vmatpush.msra.mxu0 0.0
    %905 = vmatpush.msra.mxu0 %v885
    %906 = vmatmul.f32.gmra.mxu0 %v888
    %v907 = vpop.f32.mrf.mxu0
    %v908 = vadd.f32 0.0, %v907
    %909 = vdwg.mxu0
    %v911 = vsel %vm500, %v884, 0
    %913 = vmatpush.msra.mxu0 0.0
    %914 = vmatpush.msra.mxu0 0.0
    %915 = vmatpush.msra.mxu0 0.0
    %916 = vmatpush.msra.mxu0 0.0
    %917 = vmatpush.msra.mxu0 0.0
    %918 = vmatpush.msra.mxu0 0.0
    %919 = vmatpush.msra.mxu0 0.0
    %920 = vmatpush.msra.mxu0 0.0
    %921 = vmatpush.msra.mxu0 0.0
    %922 = vmatpush.msra.mxu0 0.0
    %923 = vmatpush.msra.mxu0 0.0
    %924 = vmatpush.msra.mxu0 0.0
    %925 = vmatpush.msra.mxu0 0.0
    %926 = vmatpush.msra.mxu0 0.0
    %927 = vmatpush.msra.mxu0 0.0
    %928 = vmatpush.msra.mxu0 %v886
    %929 = vmatmul.f32.gmra.mxu0 %v911
    %v930 = vpop.f32.mrf.mxu0
    %v931 = vadd.f32 0.0, %v930
    %932 = vdwg.mxu0
    %v933 = vadd.f32 %v811, %v908
    %v934 = vadd.f32 %v812, %v931
    %v935 = vld [vmem:[%s25] sm:$0xff]
    %v936 = vld [vmem:[%s25 + $0x8] sm:$0xff]
    %v937 = vld [vmem:[%s25 + $0x10] sm:$0xff]
    %v938 = vld [vmem:[%s25 + $0x18] sm:$0xff]
    %v939 = vld [vmem:[%s27] sm:$0x1]
    %v941 = vperm.slane %v939, 0
    %v944 = vsel %vm346, %v933, 0
    %v947 = vsel %vm346, %v934, 0
    %949 = vmatpush.msra.mxu0 0.0
    %950 = vmatpush.msra.mxu0 0.0
    %951 = vmatpush.msra.mxu0 0.0
    %952 = vmatpush.msra.mxu0 0.0
    %953 = vmatpush.msra.mxu0 0.0
    %954 = vmatpush.msra.mxu0 0.0
    %955 = vmatpush.msra.mxu0 0.0
    %956 = vmatpush.msra.mxu0 0.0
    %957 = vmatpush.msra.mxu0 0.0
    %958 = vmatpush.msra.mxu0 0.0
    %959 = vmatpush.msra.mxu0 0.0
    %960 = vmatpush.msra.mxu0 0.0
    %961 = vmatpush.msra.mxu0 %v938
    %962 = vmatpush.msra.mxu0 %v937
    %963 = vmatpush.msra.mxu0 %v936
    %964 = vmatpush.msra.mxu0 %v935
    %965 = vmatmul.f32.gmra.mxu0 %v944
    %v966 = vpop.f32.mrf.mxu0
    %v967 = vadd.f32 %v941, %v966
    %968 = vmatmul.f32.gmra.mxu0 %v947
    %v969 = vpop.f32.mrf.mxu0
    %v970 = vadd.f32 %v941, %v969
    %971 = vdwg.mxu0
    %v972 = vadd.f32 %v311, %v967
    %v973 = vadd.f32 %v314, %v970
    %v974 = vld [vmem:[%s29] sm:$0x1]
    %v975 = vld [vmem:[%s31] sm:$0x1]
    %v976 = vsel %vm346, %v972, 0.0
    %977 = vadd.xlane.f32.xlu0 %v976
    %v978 = vpop.xlane.xlu0 %977
    %v979 = vsel %vm346, %v973, 0.0
    %980 = vadd.xlane.f32.xlu0 %v979
    %v981 = vpop.xlane.xlu0 %980
    %v982 = vrcp.pop 32.0
    %v983 = vmul.f32 32.0, %v982
    %v984 = vsub.f32 1.0, %v983
    %v985 = vmul.f32 %v982, %v984
    %v986 = vadd.f32 %v982, %v985
    %vm987 = vweird.f32 %v982
    %v988 = vsel %vm987, %v982, %v986
    %v989 = vmul.f32 %v978, %v988
    %v990 = vmul.f32 %v981, %v988
    %v991 = vsub.f32 %v972, %v989
    %v992 = vsub.f32 %v973, %v990
    %v993 = vmul.f32 %v991, %v991
    %v994 = vmul.f32 %v992, %v992
    %v995 = vsel %vm346, %v993, 0.0
    %996 = vadd.xlane.f32.xlu0 %v995
    %v997 = vpop.xlane.xlu0 %996
    %v998 = vsel %vm346, %v994, 0.0
    %999 = vadd.xlane.f32.xlu0 %v998
    %v1000 = vpop.xlane.xlu0 %999
    %v1001 = vmul.f32 %v997, %v988
    %v1002 = vmul.f32 %v1000, %v988
    %v1003 = vadd.f32 %v1001, 1e-05
    %v1004 = vadd.f32 %v1002, 1e-05
    %v1005 = vrsqrt.pop %v1003
    %v1006 = vmul.f32 %v1005, %v1003
    %v1007 = vmul.f32 %v1006, %v1005
    %v1008 = vmul.f32 0.5, %v1007
    %v1009 = vsub.f32 1.5, %v1008
    %v1010 = vmul.f32 %v1005, %v1009
    %vm1011 = vweird.f32 %v1003
    %vm1012 = vweird.f32 %v1005
    %vm1013 = vmor %vm1011, %vm1012
    %v1014 = vsel %vm1013, %v1005, %v1010
    %v1015 = vrsqrt.pop %v1004
    %v1016 = vmul.f32 %v1015, %v1004
    %v1017 = vmul.f32 %v1016, %v1015
    %v1018 = vmul.f32 0.5, %v1017
    %v1019 = vsub.f32 1.5, %v1018
    %v1020 = vmul.f32 %v1015, %v1019
    %vm1021 = vweird.f32 %v1004
    %vm1022 = vweird.f32 %v1015
    %vm1023 = vmor %vm1021, %vm1022
    %v1024 = vsel %vm1023, %v1015, %v1020
    %v1025 = vmul.f32 %v991, %v1014
    %v1026 = vmul.f32 %v992, %v1024
    %v1028 = vperm.slane %v974, 0
    %v1030 = vmul.f32 %v1025, %v1028
    %v1031 = vmul.f32 %v1026, %v1028
    %v1033 = vperm.slane %v975, 0
    %v1035 = vadd.f32 %v1030, %v1033
    %v1036 = vadd.f32 %v1031, %v1033
    %v1037 = vld [vmem:[%s33] sm:$0xff]
    %v1038 = vld [vmem:[%s33 + $0x8] sm:$0xff]
    %v1039 = vld [vmem:[%s33 + $0x10] sm:$0xff]
    %v1040 = vld [vmem:[%s33 + $0x18] sm:$0xff]
    %v1041 = vld [vmem:[%s35] sm:$0x1]
    %v1043 = vperm.slane %v1041, 0
    %v1046 = vsel %vm346, %v1035, 0
    %v1049 = vsel %vm346, %v1036, 0
    %1051 = vmatpush.msra.mxu0 0.0
    %1052 = vmatpush.msra.mxu0 0.0
    %1053 = vmatpush.msra.mxu0 0.0
    %1054 = vmatpush.msra.mxu0 0.0
    %1055 = vmatpush.msra.mxu0 0.0
    %1056 = vmatpush.msra.mxu0 0.0
    %1057 = vmatpush.msra.mxu0 0.0
    %1058 = vmatpush.msra.mxu0 0.0
    %1059 = vmatpush.msra.mxu0 0.0
    %1060 = vmatpush.msra.mxu0 0.0
    %1061 = vmatpush.msra.mxu0 0.0
    %1062 = vmatpush.msra.mxu0 0.0
    %1063 = vmatpush.msra.mxu0 %v1040
    %1064 = vmatpush.msra.mxu0 %v1039
    %1065 = vmatpush.msra.mxu0 %v1038
    %1066 = vmatpush.msra.mxu0 %v1037
    %1067 = vmatmul.f32.gmra.mxu0 %v1046
    %v1068 = vpop.f32.mrf.mxu0
    %v1069 = vadd.f32 %v1043, %v1068
    %1070 = vmatmul.f32.gmra.mxu0 %v1049
    %v1071 = vpop.f32.mrf.mxu0
    %v1072 = vadd.f32 %v1043, %v1071
    %1073 = vdwg.mxu0
    %v1074 = vmul.f32 %v1069, 0.5
    %v1075 = vmul.f32 %v1072, 0.5
    %v1076 = vmul.f32 %v1069, 0.044715
    %v1077 = vmul.f32 %v1072, 0.044715
    %v1078 = vmul.f32 %v1076, %v1069
    %v1079 = vmul.f32 %v1077, %v1072
    %v1080 = vmul.f32 %v1078, %v1069
    %v1081 = vmul.f32 %v1079, %v1072
    %v1082 = vadd.f32 %v1069, %v1080
    %v1083 = vadd.f32 %v1072, %v1081
    %v1084 = vmul.f32 %v1082, 0.7978846
    %v1085 = vmul.f32 %v1083, 0.7978846
    %v1086 = vtanh.pop %v1084
    %v1087 = vtanh.pop %v1085
    %v1088 = vadd.f32 %v1086, 1.0
    %v1089 = vadd.f32 %v1087, 1.0
    %v1090 = vmul.f32 %v1074, %v1088
    %v1091 = vmul.f32 %v1075, %v1089
    %v1092 = vld [vmem:[%s37] sm:$0xff]
    %v1093 = vld [vmem:[%s37 + $0x8] sm:$0xff]
    %v1094 = vld [vmem:[%s37 + $0x10] sm:$0xff]
    %v1095 = vld [vmem:[%s37 + $0x18] sm:$0xff]
    %v1096 = vld [vmem:[%s37 + $0x20] sm:$0xff]
    %v1097 = vld [vmem:[%s37 + $0x28] sm:$0xff]
    %v1098 = vld [vmem:[%s37 + $0x30] sm:$0xff]
    %v1099 = vld [vmem:[%s37 + $0x38] sm:$0xff]
    %v1100 = vld [vmem:[%s39] sm:$0x1]
    %v1102 = vperm.slane %v1100, 0
    %vm1104 = vcmask 523264
    %v1106 = vsel %vm1104, %v1090, 0
    %v1109 = vsel %vm1104, %v1091, 0
    %1111 = vmatpush.msra.mxu0 0.0
    %1112 = vmatpush.msra.mxu0 0.0
    %1113 = vmatpush.msra.mxu0 0.0
    %1114 = vmatpush.msra.mxu0 0.0
    %1115 = vmatpush.msra.mxu0 0.0
    %1116 = vmatpush.msra.mxu0 0.0
    %1117 = vmatpush.msra.mxu0 0.0
    %1118 = vmatpush.msra.mxu0 0.0
    %1119 = vmatpush.msra.mxu0 %v1099
    %1120 = vmatpush.msra.mxu0 %v1098
    %1121 = vmatpush.msra.mxu0 %v1097
    %1122 = vmatpush.msra.mxu0 %v1096
    %1123 = vmatpush.msra.mxu0 %v1095
    %1124 = vmatpush.msra.mxu0 %v1094
    %1125 = vmatpush.msra.mxu0 %v1093
    %1126 = vmatpush.msra.mxu0 %v1092
    %1127 = vmatmul.f32.gmra.mxu0 %v1106
    %v1128 = vpop.f32.mrf.mxu0
    %v1129 = vadd.f32 %v1102, %v1128
    %1130 = vmatmul.f32.gmra.mxu0 %v1109
    %v1131 = vpop.f32.mrf.mxu0
    %v1132 = vadd.f32 %v1102, %v1131
    %1133 = vdwg.mxu0
    %v1134 = vadd.f32 %v1035, %v1129
    %v1135 = vadd.f32 %v1036, %v1132
    %v1136 = vld [vmem:[%s41] sm:$0x1]
    %v1137 = vld [vmem:[%s43] sm:$0x1]
    %v1138 = vsel %vm346, %v1134, 0.0
    %1139 = vadd.xlane.f32.xlu0 %v1138
    %v1140 = vpop.xlane.xlu0 %1139
    %v1141 = vsel %vm346, %v1135, 0.0
    %1142 = vadd.xlane.f32.xlu0 %v1141
    %v1143 = vpop.xlane.xlu0 %1142
    %v1144 = vmul.f32 %v1140, %v988
    %v1145 = vmul.f32 %v1143, %v988
    %v1146 = vsub.f32 %v1134, %v1144
    %v1147 = vsub.f32 %v1135, %v1145
    %v1148 = vmul.f32 %v1146, %v1146
    %v1149 = vmul.f32 %v1147, %v1147
    %v1150 = vsel %vm346, %v1148, 0.0
    %1151 = vadd.xlane.f32.xlu0 %v1150
    %v1152 = vpop.xlane.xlu0 %1151
    %v1153 = vsel %vm346, %v1149, 0.0
    %1154 = vadd.xlane.f32.xlu0 %v1153
    %v1155 = vpop.xlane.xlu0 %1154
    %v1156 = vmul.f32 %v1152, %v988
    %v1157 = vmul.f32 %v1155, %v988
    %v1158 = vadd.f32 %v1156, 1e-05
    %v1159 = vadd.f32 %v1157, 1e-05
    %v1160 = vrsqrt.pop %v1158
    %v1161 = vmul.f32 %v1160, %v1158
    %v1162 = vmul.f32 %v1161, %v1160
    %v1163 = vmul.f32 0.5, %v1162
    %v1164 = vsub.f32 1.5, %v1163
    %v1165 = vmul.f32 %v1160, %v1164
    %vm1166 = vweird.f32 %v1158
    %vm1167 = vweird.f32 %v1160
    %vm1168 = vmor %vm1166, %vm1167
    %v1169 = vsel %vm1168, %v1160, %v1165
    %v1170 = vrsqrt.pop %v1159
    %v1171 = vmul.f32 %v1170, %v1159
    %v1172 = vmul.f32 %v1171, %v1170
    %v1173 = vmul.f32 0.5, %v1172
    %v1174 = vsub.f32 1.5, %v1173
    %v1175 = vmul.f32 %v1170, %v1174
    %vm1176 = vweird.f32 %v1159
    %vm1177 = vweird.f32 %v1170
    %vm1178 = vmor %vm1176, %vm1177
    %v1179 = vsel %vm1178, %v1170, %v1175
    %v1180 = vmul.f32 %v1146, %v1169
    %v1181 = vmul.f32 %v1147, %v1179
    %v1183 = vperm.slane %v1136, 0
    %v1185 = vmul.f32 %v1180, %v1183
    %v1186 = vmul.f32 %v1181, %v1183
    %v1188 = vperm.slane %v1137, 0
    %v1190 = vadd.f32 %v1185, %v1188
    %v1191 = vadd.f32 %v1186, %v1188
    %v1192 = vld [vmem:[%s45] sm:$0xff]
    %v1193 = vld [vmem:[%s45 + $0x8] sm:$0xff]
    %v1194 = vld [vmem:[%s45 + $0x10] sm:$0xff]
    %v1195 = vld [vmem:[%s45 + $0x18] sm:$0xff]
    %v1196 = vld [vmem:[%s47] sm:$0x1]
    %v1198 = vperm.slane %v1196, 0
    %v1201 = vsel %vm346, %v1190, 0
    %v1204 = vsel %vm346, %v1191, 0
    %1206 = vmatpush.msra.mxu0 0.0
    %1207 = vmatpush.msra.mxu0 0.0
    %1208 = vmatpush.msra.mxu0 0.0
    %1209 = vmatpush.msra.mxu0 0.0
    %1210 = vmatpush.msra.mxu0 0.0
    %1211 = vmatpush.msra.mxu0 0.0
    %1212 = vmatpush.msra.mxu0 0.0
    %1213 = vmatpush.msra.mxu0 0.0
    %1214 = vmatpush.msra.mxu0 0.0
    %1215 = vmatpush.msra.mxu0 0.0
    %1216 = vmatpush.msra.mxu0 0.0
    %1217 = vmatpush.msra.mxu0 0.0
    %1218 = vmatpush.msra.mxu0 %v1195
    %1219 = vmatpush.msra.mxu0 %v1194
    %1220 = vmatpush.msra.mxu0 %v1193
    %1221 = vmatpush.msra.mxu0 %v1192
    %1222 = vmatmul.f32.gmra.mxu0 %v1201
    %v1223 = vpop.f32.mrf.mxu0
    %v1224 = vadd.f32 %v1198, %v1223
    %1225 = vmatmul.f32.gmra.mxu0 %v1204
    %v1226 = vpop.f32.mrf.mxu0
    %v1227 = vadd.f32 %v1198, %v1226
    %1228 = vdwg.mxu0
    %v1229 = vld [vmem:[%s49] sm:$0xff]
    %v1230 = vld [vmem:[%s49 + $0x8] sm:$0xff]
    %v1231 = vld [vmem:[%s49 + $0x10] sm:$0xff]
    %v1232 = vld [vmem:[%s49 + $0x18] sm:$0xff]
    %v1233 = vld [vmem:[%s51] sm:$0x1]
    %v1235 = vperm.slane %v1233, 0
    %1237 = vmatpush.msra.mxu0 0.0
    %1238 = vmatpush.msra.mxu0 0.0
    %1239 = vmatpush.msra.mxu0 0.0
    %1240 = vmatpush.msra.mxu0 0.0
    %1241 = vmatpush.msra.mxu0 0.0
    %1242 = vmatpush.msra.mxu0 0.0
    %1243 = vmatpush.msra.mxu0 0.0
    %1244 = vmatpush.msra.mxu0 0.0
    %1245 = vmatpush.msra.mxu0 0.0
    %1246 = vmatpush.msra.mxu0 0.0
    %1247 = vmatpush.msra.mxu0 0.0
    %1248 = vmatpush.msra.mxu0 0.0
    %1249 = vmatpush.msra.mxu0 %v1232
    %1250 = vmatpush.msra.mxu0 %v1231
    %1251 = vmatpush.msra.mxu0 %v1230
    %1252 = vmatpush.msra.mxu0 %v1229
    %1253 = vmatmul.f32.gmra.mxu0 %v385
    %v1254 = vpop.f32.mrf.mxu0
    %v1255 = vadd.f32 %v1235, %v1254
    %1256 = vmatmul.f32.gmra.mxu0 %v388
    %v1257 = vpop.f32.mrf.mxu0
    %v1258 = vadd.f32 %v1235, %v1257
    %1259 = vdwg.mxu0
    %v1260 = vld [vmem:[%s53] sm:$0xff]
    %v1261 = vld [vmem:[%s53 + $0x8] sm:$0xff]
    %v1262 = vld [vmem:[%s53 + $0x10] sm:$0xff]
    %v1263 = vld [vmem:[%s53 + $0x18] sm:$0xff]
    %v1264 = vld [vmem:[%s55] sm:$0x1]
    %v1266 = vperm.slane %v1264, 0
    %1268 = vmatpush.msra.mxu0 0.0
    %1269 = vmatpush.msra.mxu0 0.0
    %1270 = vmatpush.msra.mxu0 0.0
    %1271 = vmatpush.msra.mxu0 0.0
    %1272 = vmatpush.msra.mxu0 0.0
    %1273 = vmatpush.msra.mxu0 0.0
    %1274 = vmatpush.msra.mxu0 0.0
    %1275 = vmatpush.msra.mxu0 0.0
    %1276 = vmatpush.msra.mxu0 0.0
    %1277 = vmatpush.msra.mxu0 0.0
    %1278 = vmatpush.msra.mxu0 0.0
    %1279 = vmatpush.msra.mxu0 0.0
    %1280 = vmatpush.msra.mxu0 %v1263
    %1281 = vmatpush.msra.mxu0 %v1262
    %1282 = vmatpush.msra.mxu0 %v1261
    %1283 = vmatpush.msra.mxu0 %v1260
    %1284 = vmatmul.f32.gmra.mxu0 %v385
    %v1285 = vpop.f32.mrf.mxu0
    %v1286 = vadd.f32 %v1266, %v1285
    %1287 = vmatmul.f32.gmra.mxu0 %v388
    %v1288 = vpop.f32.mrf.mxu0
    %v1289 = vadd.f32 %v1266, %v1288
    %1290 = vdwg.mxu0
    %v1291 = vmul.f32 %v1224, %v322
    %v1292 = vmul.f32 %v1227, %v322
    %v1294 = vsel %vm346, %v1291, 0
    %v1297 = vsel %vm346, %v1255, 0
    %1299 = vmatpush.xpose.msra.mxu0 0.0
    %1300 = vmatpush.xpose.msra.mxu0 0.0
    %1301 = vmatpush.xpose.msra.mxu0 0.0
    %1302 = vmatpush.xpose.msra.mxu0 0.0
    %1303 = vmatpush.xpose.msra.mxu0 0.0
    %1304 = vmatpush.xpose.msra.mxu0 0.0
    %1305 = vmatpush.xpose.msra.mxu0 0.0
    %1306 = vmatpush.xpose.msra.mxu0 0.0
    %1307 = vmatpush.xpose.msra.mxu0 0.0
    %1308 = vmatpush.xpose.msra.mxu0 0.0
    %1309 = vmatpush.xpose.msra.mxu0 0.0
    %1310 = vmatpush.xpose.msra.mxu0 0.0
    %1311 = vmatpush.xpose.msra.mxu0 0.0
    %1312 = vmatpush.xpose.msra.mxu0 0.0
    %1313 = vmatpush.xpose.msra.mxu0 0.0
    %1314 = vmatpush.xpose.msra.mxu0 %v1297
    %1315 = vmatmul.f32.gmra.mxu0 %v1294
    %v1316 = vpop.f32.mrf.mxu0
    %v1317 = vadd.f32 0.0, %v1316
    %1318 = vdwg.mxu0
    %v1320 = vsel %vm346, %v1292, 0
    %v1323 = vsel %vm346, %v1258, 0
    %1325 = vmatpush.xpose.msra.mxu0 0.0
    %1326 = vmatpush.xpose.msra.mxu0 0.0
    %1327 = vmatpush.xpose.msra.mxu0 0.0
    %1328 = vmatpush.xpose.msra.mxu0 0.0
    %1329 = vmatpush.xpose.msra.mxu0 0.0
    %1330 = vmatpush.xpose.msra.mxu0 0.0
    %1331 = vmatpush.xpose.msra.mxu0 0.0
    %1332 = vmatpush.xpose.msra.mxu0 0.0
    %1333 = vmatpush.xpose.msra.mxu0 0.0
    %1334 = vmatpush.xpose.msra.mxu0 0.0
    %1335 = vmatpush.xpose.msra.mxu0 0.0
    %1336 = vmatpush.xpose.msra.mxu0 0.0
    %1337 = vmatpush.xpose.msra.mxu0 0.0
    %1338 = vmatpush.xpose.msra.mxu0 0.0
    %1339 = vmatpush.xpose.msra.mxu0 0.0
    %1340 = vmatpush.xpose.msra.mxu0 %v1323
    %1341 = vmatmul.f32.gmra.mxu0 %v1320
    %v1342 = vpop.f32.mrf.mxu0
    %v1343 = vadd.f32 0.0, %v1342
    %1344 = vdwg.mxu0
    %v1345 = vmul.f32 %v1317, 0.35355338
    %v1346 = vmul.f32 %v1343, 0.35355338
    %v1347 = vsel %vm500, %v1345, -inf
    %1348 = vmax.xlane.f32.xlu0 %v1347
    %v1349 = vpop.xlane.xlu0 %1348
    %v1350 = vsel %vm500, %v1346, -inf
    %1351 = vmax.xlane.f32.xlu0 %v1350
    %v1352 = vpop.xlane.xlu0 %1351
    %v1353 = vsub.f32 %v1345, %v1349
    %v1354 = vsub.f32 %v1346, %v1352
    %v1355 = vmul.f32 %v1353, 1.442695
    %v1356 = vpow.pop %v1355
    %v1357 = vmul.f32 %v1354, 1.442695
    %v1358 = vpow.pop %v1357
    %v1359 = vsel %vm500, %v1356, 0.0
    %1360 = vadd.xlane.f32.xlu0 %v1359
    %v1361 = vpop.xlane.xlu0 %1360
    %v1362 = vsel %vm500, %v1358, 0.0
    %1363 = vadd.xlane.f32.xlu0 %v1362
    %v1364 = vpop.xlane.xlu0 %1363
    %v1365 = vrcp.pop %v1361
    %v1366 = vrcp.pop %v1364
    %v1367 = vmul.f32 %v1356, %v1365
    %v1368 = vmul.f32 %v1358, %v1366
    %v1369 = vmul.f32 %v1286, %v322
    %v1370 = vmul.f32 %v1289, %v322
    %v1371 = vmul.f32 %v1224, %v327
    %v1372 = vmul.f32 %v1227, %v327
    %v1374 = vsel %vm346, %v1371, 0
    %1376 = vmatpush.xpose.msra.mxu0 0.0
    %1377 = vmatpush.xpose.msra.mxu0 0.0
    %1378 = vmatpush.xpose.msra.mxu0 0.0
    %1379 = vmatpush.xpose.msra.mxu0 0.0
    %1380 = vmatpush.xpose.msra.mxu0 0.0
    %1381 = vmatpush.xpose.msra.mxu0 0.0
    %1382 = vmatpush.xpose.msra.mxu0 0.0
    %1383 = vmatpush.xpose.msra.mxu0 0.0
    %1384 = vmatpush.xpose.msra.mxu0 0.0
    %1385 = vmatpush.xpose.msra.mxu0 0.0
    %1386 = vmatpush.xpose.msra.mxu0 0.0
    %1387 = vmatpush.xpose.msra.mxu0 0.0
    %1388 = vmatpush.xpose.msra.mxu0 0.0
    %1389 = vmatpush.xpose.msra.mxu0 0.0
    %1390 = vmatpush.xpose.msra.mxu0 0.0
    %1391 = vmatpush.xpose.msra.mxu0 %v1297
    %1392 = vmatmul.f32.gmra.mxu0 %v1374
    %v1393 = vpop.f32.mrf.mxu0
    %v1394 = vadd.f32 0.0, %v1393
    %1395 = vdwg.mxu0
    %v1397 = vsel %vm346, %v1372, 0
    %1399 = vmatpush.xpose.msra.mxu0 0.0
    %1400 = vmatpush.xpose.msra.mxu0 0.0
    %1401 = vmatpush.xpose.msra.mxu0 0.0
    %1402 = vmatpush.xpose.msra.mxu0 0.0
    %1403 = vmatpush.xpose.msra.mxu0 0.0
    %1404 = vmatpush.xpose.msra.mxu0 0.0
    %1405 = vmatpush.xpose.msra.mxu0 0.0
    %1406 = vmatpush.xpose.msra.mxu0 0.0
    %1407 = vmatpush.xpose.msra.mxu0 0.0
    %1408 = vmatpush.xpose.msra.mxu0 0.0
    %1409 = vmatpush.xpose.msra.mxu0 0.0
    %1410 = vmatpush.xpose.msra.mxu0 0.0
    %1411 = vmatpush.xpose.msra.mxu0 0.0
    %1412 = vmatpush.xpose.msra.mxu0 0.0
    %1413 = vmatpush.xpose.msra.mxu0 0.0
    %1414 = vmatpush.xpose.msra.mxu0 %v1323
    %1415 = vmatmul.f32.gmra.mxu0 %v1397
    %v1416 = vpop.f32.mrf.mxu0
    %v1417 = vadd.f32 0.0, %v1416
    %1418 = vdwg.mxu0
    %v1419 = vmul.f32 %v1394, 0.35355338
    %v1420 = vmul.f32 %v1417, 0.35355338
    %v1421 = vsel %vm500, %v1419, -inf
    %1422 = vmax.xlane.f32.xlu0 %v1421
    %v1423 = vpop.xlane.xlu0 %1422
    %v1424 = vsel %vm500, %v1420, -inf
    %1425 = vmax.xlane.f32.xlu0 %v1424
    %v1426 = vpop.xlane.xlu0 %1425
    %v1427 = vsub.f32 %v1419, %v1423
    %v1428 = vsub.f32 %v1420, %v1426
    %v1429 = vmul.f32 %v1427, 1.442695
    %v1430 = vpow.pop %v1429
    %v1431 = vmul.f32 %v1428, 1.442695
    %v1432 = vpow.pop %v1431
    %v1433 = vsel %vm500, %v1430, 0.0
    %1434 = vadd.xlane.f32.xlu0 %v1433
    %v1435 = vpop.xlane.xlu0 %1434
    %v1436 = vsel %vm500, %v1432, 0.0
    %1437 = vadd.xlane.f32.xlu0 %v1436
    %v1438 = vpop.xlane.xlu0 %1437
    %v1439 = vrcp.pop %v1435
    %v1440 = vrcp.pop %v1438
    %v1441 = vmul.f32 %v1430, %v1439
    %v1442 = vmul.f32 %v1432, %v1440
    %v1443 = vmul.f32 %v1286, %v327
    %v1444 = vmul.f32 %v1289, %v327
    %v1446 = vsel %vm500, %v1441, 0
    %1448 = vmatpush.msra.mxu0 0.0
    %1449 = vmatpush.msra.mxu0 0.0
    %1450 = vmatpush.msra.mxu0 0.0
    %1451 = vmatpush.msra.mxu0 0.0
    %1452 = vmatpush.msra.mxu0 0.0
    %1453 = vmatpush.msra.mxu0 0.0
    %1454 = vmatpush.msra.mxu0 0.0
    %1455 = vmatpush.msra.mxu0 0.0
    %1456 = vmatpush.msra.mxu0 0.0
    %1457 = vmatpush.msra.mxu0 0.0
    %1458 = vmatpush.msra.mxu0 0.0
    %1459 = vmatpush.msra.mxu0 0.0
    %1460 = vmatpush.msra.mxu0 0.0
    %1461 = vmatpush.msra.mxu0 0.0
    %1462 = vmatpush.msra.mxu0 0.0
    %1463 = vmatpush.msra.mxu0 %v1443
    %1464 = vmatmul.f32.gmra.mxu0 %v1446
    %v1465 = vpop.f32.mrf.mxu0
    %v1466 = vadd.f32 0.0, %v1465
    %1467 = vdwg.mxu0
    %v1469 = vsel %vm500, %v1442, 0
    %1471 = vmatpush.msra.mxu0 0.0
    %1472 = vmatpush.msra.mxu0 0.0
    %1473 = vmatpush.msra.mxu0 0.0
    %1474 = vmatpush.msra.mxu0 0.0
    %1475 = vmatpush.msra.mxu0 0.0
    %1476 = vmatpush.msra.mxu0 0.0
    %1477 = vmatpush.msra.mxu0 0.0
    %1478 = vmatpush.msra.mxu0 0.0
    %1479 = vmatpush.msra.mxu0 0.0
    %1480 = vmatpush.msra.mxu0 0.0
    %1481 = vmatpush.msra.mxu0 0.0
    %1482 = vmatpush.msra.mxu0 0.0
    %1483 = vmatpush.msra.mxu0 0.0
    %1484 = vmatpush.msra.mxu0 0.0
    %1485 = vmatpush.msra.mxu0 0.0
    %1486 = vmatpush.msra.mxu0 %v1444
    %1487 = vmatmul.f32.gmra.mxu0 %v1469
    %v1488 = vpop.f32.mrf.mxu0
    %v1489 = vadd.f32 0.0, %v1488
    %1490 = vdwg.mxu0
    %v1492 = vsel %vm500, %v1367, 0
    %1494 = vmatpush.msra.mxu0 0.0
    %1495 = vmatpush.msra.mxu0 0.0
    %1496 = vmatpush.msra.mxu0 0.0
    %1497 = vmatpush.msra.mxu0 0.0
    %1498 = vmatpush.msra.mxu0 0.0
    %1499 = vmatpush.msra.mxu0 0.0
    %1500 = vmatpush.msra.mxu0 0.0
    %1501 = vmatpush.msra.mxu0 0.0
    %1502 = vmatpush.msra.mxu0 0.0
    %1503 = vmatpush.msra.mxu0 0.0
    %1504 = vmatpush.msra.mxu0 0.0
    %1505 = vmatpush.msra.mxu0 0.0
    %1506 = vmatpush.msra.mxu0 0.0
    %1507 = vmatpush.msra.mxu0 0.0
    %1508 = vmatpush.msra.mxu0 0.0
    %1509 = vmatpush.msra.mxu0 %v1369
    %1510 = vmatmul.f32.gmra.mxu0 %v1492
    %v1511 = vpop.f32.mrf.mxu0
    %v1512 = vadd.f32 %v1466, %v1511
    %1513 = vdwg.mxu0
    %v1515 = vsel %vm500, %v1368, 0
    %1517 = vmatpush.msra.mxu0 0.0
    %1518 = vmatpush.msra.mxu0 0.0
    %1519 = vmatpush.msra.mxu0 0.0
    %1520 = vmatpush.msra.mxu0 0.0
    %1521 = vmatpush.msra.mxu0 0.0
    %1522 = vmatpush.msra.mxu0 0.0
    %1523 = vmatpush.msra.mxu0 0.0
    %1524 = vmatpush.msra.mxu0 0.0
    %1525 = vmatpush.msra.mxu0 0.0
    %1526 = vmatpush.msra.mxu0 0.0
    %1527 = vmatpush.msra.mxu0 0.0
    %1528 = vmatpush.msra.mxu0 0.0
    %1529 = vmatpush.msra.mxu0 0.0
    %1530 = vmatpush.msra.mxu0 0.0
    %1531 = vmatpush.msra.mxu0 0.0
    %1532 = vmatpush.msra.mxu0 %v1370
    %1533 = vmatmul.f32.gmra.mxu0 %v1515
    %v1534 = vpop.f32.mrf.mxu0
    %v1535 = vadd.f32 %v1489, %v1534
    %1536 = vdwg.mxu0
    %v1537 = vmul.f32 %v1224, %v332
    %v1538 = vmul.f32 %v1227, %v332
    %v1540 = vsel %vm346, %v1537, 0
    %1542 = vmatpush.xpose.msra.mxu0 0.0
    %1543 = vmatpush.xpose.msra.mxu0 0.0
    %1544 = vmatpush.xpose.msra.mxu0 0.0
    %1545 = vmatpush.xpose.msra.mxu0 0.0
    %1546 = vmatpush.xpose.msra.mxu0 0.0
    %1547 = vmatpush.xpose.msra.mxu0 0.0
    %1548 = vmatpush.xpose.msra.mxu0 0.0
    %1549 = vmatpush.xpose.msra.mxu0 0.0
    %1550 = vmatpush.xpose.msra.mxu0 0.0
    %1551 = vmatpush.xpose.msra.mxu0 0.0
    %1552 = vmatpush.xpose.msra.mxu0 0.0
    %1553 = vmatpush.xpose.msra.mxu0 0.0
    %1554 = vmatpush.xpose.msra.mxu0 0.0
    %1555 = vmatpush.xpose.msra.mxu0 0.0
    %1556 = vmatpush.xpose.msra.mxu0 0.0
    %1557 = vmatpush.xpose.msra.mxu0 %v1297
    %1558 = vmatmul.f32.gmra.mxu0 %v1540
    %v1559 = vpop.f32.mrf.mxu0
    %v1560 = vadd.f32 0.0, %v1559
    %1561 = vdwg.mxu0
    %v1563 = vsel %vm346, %v1538, 0
    %1565 = vmatpush.xpose.msra.mxu0 0.0
    %1566 = vmatpush.xpose.msra.mxu0 0.0
    %1567 = vmatpush.xpose.msra.mxu0 0.0
    %1568 = vmatpush.xpose.msra.mxu0 0.0
    %1569 = vmatpush.xpose.msra.mxu0 0.0
    %1570 = vmatpush.xpose.msra.mxu0 0.0
    %1571 = vmatpush.xpose.msra.mxu0 0.0
    %1572 = vmatpush.xpose.msra.mxu0 0.0
    %1573 = vmatpush.xpose.msra.mxu0 0.0
    %1574 = vmatpush.xpose.msra.mxu0 0.0
    %1575 = vmatpush.xpose.msra.mxu0 0.0
    %1576 = vmatpush.xpose.msra.mxu0 0.0
    %1577 = vmatpush.xpose.msra.mxu0 0.0
    %1578 = vmatpush.xpose.msra.mxu0 0.0
    %1579 = vmatpush.xpose.msra.mxu0 0.0
    %1580 = vmatpush.xpose.msra.mxu0 %v1323
    %1581 = vmatmul.f32.gmra.mxu0 %v1563
    %v1582 = vpop.f32.mrf.mxu0
    %v1583 = vadd.f32 0.0, %v1582
    %1584 = vdwg.mxu0
    %v1585 = vmul.f32 %v1560, 0.35355338
    %v1586 = vmul.f32 %v1583, 0.35355338
    %v1587 = vsel %vm500, %v1585, -inf
    %1588 = vmax.xlane.f32.xlu0 %v1587
    %v1589 = vpop.xlane.xlu0 %1588
    %v1590 = vsel %vm500, %v1586, -inf
    %1591 = vmax.xlane.f32.xlu0 %v1590
    %v1592 = vpop.xlane.xlu0 %1591
    %v1593 = vsub.f32 %v1585, %v1589
    %v1594 = vsub.f32 %v1586, %v1592
    %v1595 = vmul.f32 %v1593, 1.442695
    %v1596 = vpow.pop %v1595
    %v1597 = vmul.f32 %v1594, 1.442695
    %v1598 = vpow.pop %v1597
    %v1599 = vsel %vm500, %v1596, 0.0
    %1600 = vadd.xlane.f32.xlu0 %v1599
    %v1601 = vpop.xlane.xlu0 %1600
    %v1602 = vsel %vm500, %v1598, 0.0
    %1603 = vadd.xlane.f32.xlu0 %v1602
    %v1604 = vpop.xlane.xlu0 %1603
    %v1605 = vrcp.pop %v1601
    %v1606 = vrcp.pop %v1604
    %v1607 = vmul.f32 %v1596, %v1605
    %v1608 = vmul.f32 %v1598, %v1606
    %v1609 = vmul.f32 %v1286, %v332
    %v1610 = vmul.f32 %v1289, %v332
    %v1612 = vsel %vm500, %v1607, 0
    %1614 = vmatpush.msra.mxu0 0.0
    %1615 = vmatpush.msra.mxu0 0.0
    %1616 = vmatpush.msra.mxu0 0.0
    %1617 = vmatpush.msra.mxu0 0.0
    %1618 = vmatpush.msra.mxu0 0.0
    %1619 = vmatpush.msra.mxu0 0.0
    %1620 = vmatpush.msra.mxu0 0.0
    %1621 = vmatpush.msra.mxu0 0.0
    %1622 = vmatpush.msra.mxu0 0.0
    %1623 = vmatpush.msra.mxu0 0.0
    %1624 = vmatpush.msra.mxu0 0.0
    %1625 = vmatpush.msra.mxu0 0.0
    %1626 = vmatpush.msra.mxu0 0.0
    %1627 = vmatpush.msra.mxu0 0.0
    %1628 = vmatpush.msra.mxu0 0.0
    %1629 = vmatpush.msra.mxu0 %v1609
    %1630 = vmatmul.f32.gmra.mxu0 %v1612
    %v1631 = vpop.f32.mrf.mxu0
    %v1632 = vadd.f32 0.0, %v1631
    %1633 = vdwg.mxu0
    %v1635 = vsel %vm500, %v1608, 0
    %1637 = vmatpush.msra.mxu0 0.0
    %1638 = vmatpush.msra.mxu0 0.0
    %1639 = vmatpush.msra.mxu0 0.0
    %1640 = vmatpush.msra.mxu0 0.0
    %1641 = vmatpush.msra.mxu0 0.0
    %1642 = vmatpush.msra.mxu0 0.0
    %1643 = vmatpush.msra.mxu0 0.0
    %1644 = vmatpush.msra.mxu0 0.0
    %1645 = vmatpush.msra.mxu0 0.0
    %1646 = vmatpush.msra.mxu0 0.0
    %1647 = vmatpush.msra.mxu0 0.0
    %1648 = vmatpush.msra.mxu0 0.0
    %1649 = vmatpush.msra.mxu0 0.0
    %1650 = vmatpush.msra.mxu0 0.0
    %1651 = vmatpush.msra.mxu0 0.0
    %1652 = vmatpush.msra.mxu0 %v1610
    %1653 = vmatmul.f32.gmra.mxu0 %v1635
    %v1654 = vpop.f32.mrf.mxu0
    %v1655 = vadd.f32 0.0, %v1654
    %1656 = vdwg.mxu0
    %v1657 = vadd.f32 %v1512, %v1632
    %v1658 = vadd.f32 %v1535, %v1655
    %v1659 = vmul.f32 %v1224, %v337
    %v1660 = vmul.f32 %v1227, %v337
    %v1662 = vsel %vm346, %v1659, 0
    %1664 = vmatpush.xpose.msra.mxu0 0.0
    %1665 = vmatpush.xpose.msra.mxu0 0.0
    %1666 = vmatpush.xpose.msra.mxu0 0.0
    %1667 = vmatpush.xpose.msra.mxu0 0.0
    %1668 = vmatpush.xpose.msra.mxu0 0.0
    %1669 = vmatpush.xpose.msra.mxu0 0.0
    %1670 = vmatpush.xpose.msra.mxu0 0.0
    %1671 = vmatpush.xpose.msra.mxu0 0.0
    %1672 = vmatpush.xpose.msra.mxu0 0.0
    %1673 = vmatpush.xpose.msra.mxu0 0.0
    %1674 = vmatpush.xpose.msra.mxu0 0.0
    %1675 = vmatpush.xpose.msra.mxu0 0.0
    %1676 = vmatpush.xpose.msra.mxu0 0.0
    %1677 = vmatpush.xpose.msra.mxu0 0.0
    %1678 = vmatpush.xpose.msra.mxu0 0.0
    %1679 = vmatpush.xpose.msra.mxu0 %v1297
    %1680 = vmatmul.f32.gmra.mxu0 %v1662
    %v1681 = vpop.f32.mrf.mxu0
    %v1682 = vadd.f32 0.0, %v1681
    %1683 = vdwg.mxu0
    %v1685 = vsel %vm346, %v1660, 0
    %1687 = vmatpush.xpose.msra.mxu0 0.0
    %1688 = vmatpush.xpose.msra.mxu0 0.0
    %1689 = vmatpush.xpose.msra.mxu0 0.0
    %1690 = vmatpush.xpose.msra.mxu0 0.0
    %1691 = vmatpush.xpose.msra.mxu0 0.0
    %1692 = vmatpush.xpose.msra.mxu0 0.0
    %1693 = vmatpush.xpose.msra.mxu0 0.0
    %1694 = vmatpush.xpose.msra.mxu0 0.0
    %1695 = vmatpush.xpose.msra.mxu0 0.0
    %1696 = vmatpush.xpose.msra.mxu0 0.0
    %1697 = vmatpush.xpose.msra.mxu0 0.0
    %1698 = vmatpush.xpose.msra.mxu0 0.0
    %1699 = vmatpush.xpose.msra.mxu0 0.0
    %1700 = vmatpush.xpose.msra.mxu0 0.0
    %1701 = vmatpush.xpose.msra.mxu0 0.0
    %1702 = vmatpush.xpose.msra.mxu0 %v1323
    %1703 = vmatmul.f32.gmra.mxu0 %v1685
    %v1704 = vpop.f32.mrf.mxu0
    %v1705 = vadd.f32 0.0, %v1704
    %1706 = vdwg.mxu0
    %v1707 = vmul.f32 %v1682, 0.35355338
    %v1708 = vmul.f32 %v1705, 0.35355338
    %v1709 = vsel %vm500, %v1707, -inf
    %1710 = vmax.xlane.f32.xlu0 %v1709
    %v1711 = vpop.xlane.xlu0 %1710
    %v1712 = vsel %vm500, %v1708, -inf
    %1713 = vmax.xlane.f32.xlu0 %v1712
    %v1714 = vpop.xlane.xlu0 %1713
    %v1715 = vsub.f32 %v1707, %v1711
    %v1716 = vsub.f32 %v1708, %v1714
    %v1717 = vmul.f32 %v1715, 1.442695
    %v1718 = vpow.pop %v1717
    %v1719 = vmul.f32 %v1716, 1.442695
    %v1720 = vpow.pop %v1719
    %v1721 = vsel %vm500, %v1718, 0.0
    %1722 = vadd.xlane.f32.xlu0 %v1721
    %v1723 = vpop.xlane.xlu0 %1722
    %v1724 = vsel %vm500, %v1720, 0.0
    %1725 = vadd.xlane.f32.xlu0 %v1724
    %v1726 = vpop.xlane.xlu0 %1725
    %v1727 = vrcp.pop %v1723
    %v1728 = vrcp.pop %v1726
    %v1729 = vmul.f32 %v1718, %v1727
    %v1730 = vmul.f32 %v1720, %v1728
    %v1731 = vmul.f32 %v1286, %v337
    %v1732 = vmul.f32 %v1289, %v337
    %v1734 = vsel %vm500, %v1729, 0
    %1736 = vmatpush.msra.mxu0 0.0
    %1737 = vmatpush.msra.mxu0 0.0
    %1738 = vmatpush.msra.mxu0 0.0
    %1739 = vmatpush.msra.mxu0 0.0
    %1740 = vmatpush.msra.mxu0 0.0
    %1741 = vmatpush.msra.mxu0 0.0
    %1742 = vmatpush.msra.mxu0 0.0
    %1743 = vmatpush.msra.mxu0 0.0
    %1744 = vmatpush.msra.mxu0 0.0
    %1745 = vmatpush.msra.mxu0 0.0
    %1746 = vmatpush.msra.mxu0 0.0
    %1747 = vmatpush.msra.mxu0 0.0
    %1748 = vmatpush.msra.mxu0 0.0
    %1749 = vmatpush.msra.mxu0 0.0
    %1750 = vmatpush.msra.mxu0 0.0
    %1751 = vmatpush.msra.mxu0 %v1731
    %1752 = vmatmul.f32.gmra.mxu0 %v1734
    %v1753 = vpop.f32.mrf.mxu0
    %v1754 = vadd.f32 0.0, %v1753
    %1755 = vdwg.mxu0
    %v1757 = vsel %vm500, %v1730, 0
    %1759 = vmatpush.msra.mxu0 0.0
    %1760 = vmatpush.msra.mxu0 0.0
    %1761 = vmatpush.msra.mxu0 0.0
    %1762 = vmatpush.msra.mxu0 0.0
    %1763 = vmatpush.msra.mxu0 0.0
    %1764 = vmatpush.msra.mxu0 0.0
    %1765 = vmatpush.msra.mxu0 0.0
    %1766 = vmatpush.msra.mxu0 0.0
    %1767 = vmatpush.msra.mxu0 0.0
    %1768 = vmatpush.msra.mxu0 0.0
    %1769 = vmatpush.msra.mxu0 0.0
    %1770 = vmatpush.msra.mxu0 0.0
    %1771 = vmatpush.msra.mxu0 0.0
    %1772 = vmatpush.msra.mxu0 0.0
    %1773 = vmatpush.msra.mxu0 0.0
    %1774 = vmatpush.msra.mxu0 %v1732
    %1775 = vmatmul.f32.gmra.mxu0 %v1757
    %v1776 = vpop.f32.mrf.mxu0
    %v1777 = vadd.f32 0.0, %v1776
    %1778 = vdwg.mxu0
    %v1779 = vadd.f32 %v1657, %v1754
    %v1780 = vadd.f32 %v1658, %v1777
    %v1781 = vld [vmem:[%s57] sm:$0xff]
    %v1782 = vld [vmem:[%s57 + $0x8] sm:$0xff]
    %v1783 = vld [vmem:[%s57 + $0x10] sm:$0xff]
    %v1784 = vld [vmem:[%s57 + $0x18] sm:$0xff]
    %v1785 = vld [vmem:[%s59] sm:$0x1]
    %v1787 = vperm.slane %v1785, 0
    %v1790 = vsel %vm346, %v1779, 0
    %v1793 = vsel %vm346, %v1780, 0
    %1795 = vmatpush.msra.mxu0 0.0
    %1796 = vmatpush.msra.mxu0 0.0
    %1797 = vmatpush.msra.mxu0 0.0
    %1798 = vmatpush.msra.mxu0 0.0
    %1799 = vmatpush.msra.mxu0 0.0
    %1800 = vmatpush.msra.mxu0 0.0
    %1801 = vmatpush.msra.mxu0 0.0
    %1802 = vmatpush.msra.mxu0 0.0
    %1803 = vmatpush.msra.mxu0 0.0
    %1804 = vmatpush.msra.mxu0 0.0
    %1805 = vmatpush.msra.mxu0 0.0
    %1806 = vmatpush.msra.mxu0 0.0
    %1807 = vmatpush.msra.mxu0 %v1784
    %1808 = vmatpush.msra.mxu0 %v1783
    %1809 = vmatpush.msra.mxu0 %v1782
    %1810 = vmatpush.msra.mxu0 %v1781
    %1811 = vmatmul.f32.gmra.mxu0 %v1790
    %v1812 = vpop.f32.mrf.mxu0
    %v1813 = vadd.f32 %v1787, %v1812
    %1814 = vmatmul.f32.gmra.mxu0 %v1793
    %v1815 = vpop.f32.mrf.mxu0
    %v1816 = vadd.f32 %v1787, %v1815
    %1817 = vdwg.mxu0
    %v1818 = vadd.f32 %v1190, %v1813
    %v1819 = vadd.f32 %v1191, %v1816
    %v1820 = vld [vmem:[%s61] sm:$0x1]
    %v1821 = vld [vmem:[%s63] sm:$0x1]
    %v1822 = vsel %vm346, %v1818, 0.0
    %1823 = vadd.xlane.f32.xlu0 %v1822
    %v1824 = vpop.xlane.xlu0 %1823
    %v1825 = vsel %vm346, %v1819, 0.0
    %1826 = vadd.xlane.f32.xlu0 %v1825
    %v1827 = vpop.xlane.xlu0 %1826
    %v1828 = vmul.f32 %v1824, %v988
    %v1829 = vmul.f32 %v1827, %v988
    %v1830 = vsub.f32 %v1818, %v1828
    %v1831 = vsub.f32 %v1819, %v1829
    %v1832 = vmul.f32 %v1830, %v1830
    %v1833 = vmul.f32 %v1831, %v1831
    %v1834 = vsel %vm346, %v1832, 0.0
    %1835 = vadd.xlane.f32.xlu0 %v1834
    %v1836 = vpop.xlane.xlu0 %1835
    %v1837 = vsel %vm346, %v1833, 0.0
    %1838 = vadd.xlane.f32.xlu0 %v1837
    %v1839 = vpop.xlane.xlu0 %1838
    %v1840 = vmul.f32 %v1836, %v988
    %v1841 = vmul.f32 %v1839, %v988
    %v1842 = vadd.f32 %v1840, 1e-05
    %v1843 = vadd.f32 %v1841, 1e-05
    %v1844 = vrsqrt.pop %v1842
    %v1845 = vmul.f32 %v1844, %v1842
    %v1846 = vmul.f32 %v1845, %v1844
    %v1847 = vmul.f32 0.5, %v1846
    %v1848 = vsub.f32 1.5, %v1847
    %v1849 = vmul.f32 %v1844, %v1848
    %vm1850 = vweird.f32 %v1842
    %vm1851 = vweird.f32 %v1844
    %vm1852 = vmor %vm1850, %vm1851
    %v1853 = vsel %vm1852, %v1844, %v1849
    %v1854 = vrsqrt.pop %v1843
    %v1855 = vmul.f32 %v1854, %v1843
    %v1856 = vmul.f32 %v1855, %v1854
    %v1857 = vmul.f32 0.5, %v1856
    %v1858 = vsub.f32 1.5, %v1857
    %v1859 = vmul.f32 %v1854, %v1858
    %vm1860 = vweird.f32 %v1843
    %vm1861 = vweird.f32 %v1854
    %vm1862 = vmor %vm1860, %vm1861
    %v1863 = vsel %vm1862, %v1854, %v1859
    %v1864 = vmul.f32 %v1830, %v1853
    %v1865 = vmul.f32 %v1831, %v1863
    %v1867 = vperm.slane %v1820, 0
    %v1869 = vmul.f32 %v1864, %v1867
    %v1870 = vmul.f32 %v1865, %v1867
    %v1872 = vperm.slane %v1821, 0
    %v1874 = vadd.f32 %v1869, %v1872
    %v1875 = vadd.f32 %v1870, %v1872
    %v1876 = vld [vmem:[%s65] sm:$0xff]
    %v1877 = vld [vmem:[%s65 + $0x8] sm:$0xff]
    %v1878 = vld [vmem:[%s65 + $0x10] sm:$0xff]
    %v1879 = vld [vmem:[%s65 + $0x18] sm:$0xff]
    %v1880 = vld [vmem:[%s67] sm:$0x1]
    %v1882 = vperm.slane %v1880, 0
    %v1885 = vsel %vm346, %v1874, 0
    %v1888 = vsel %vm346, %v1875, 0
    %1890 = vmatpush.msra.mxu0 0.0
    %1891 = vmatpush.msra.mxu0 0.0
    %1892 = vmatpush.msra.mxu0 0.0
    %1893 = vmatpush.msra.mxu0 0.0
    %1894 = vmatpush.msra.mxu0 0.0
    %1895 = vmatpush.msra.mxu0 0.0
    %1896 = vmatpush.msra.mxu0 0.0
    %1897 = vmatpush.msra.mxu0 0.0
    %1898 = vmatpush.msra.mxu0 0.0
    %1899 = vmatpush.msra.mxu0 0.0
    %1900 = vmatpush.msra.mxu0 0.0
    %1901 = vmatpush.msra.mxu0 0.0
    %1902 = vmatpush.msra.mxu0 %v1879
    %1903 = vmatpush.msra.mxu0 %v1878
    %1904 = vmatpush.msra.mxu0 %v1877
    %1905 = vmatpush.msra.mxu0 %v1876
    %1906 = vmatmul.f32.gmra.mxu0 %v1885
    %v1907 = vpop.f32.mrf.mxu0
    %v1908 = vadd.f32 %v1882, %v1907
    %1909 = vmatmul.f32.gmra.mxu0 %v1888
    %v1910 = vpop.f32.mrf.mxu0
    %v1911 = vadd.f32 %v1882, %v1910
    %1912 = vdwg.mxu0
    %v1913 = vmul.f32 %v1908, 0.5
    %v1914 = vmul.f32 %v1911, 0.5
    %v1915 = vmul.f32 %v1908, 0.044715
    %v1916 = vmul.f32 %v1911, 0.044715
    %v1917 = vmul.f32 %v1915, %v1908
    %v1918 = vmul.f32 %v1916, %v1911
    %v1919 = vmul.f32 %v1917, %v1908
    %v1920 = vmul.f32 %v1918, %v1911
    %v1921 = vadd.f32 %v1908, %v1919
    %v1922 = vadd.f32 %v1911, %v1920
    %v1923 = vmul.f32 %v1921, 0.7978846
    %v1924 = vmul.f32 %v1922, 0.7978846
    %v1925 = vtanh.pop %v1923
    %v1926 = vtanh.pop %v1924
    %v1927 = vadd.f32 %v1925, 1.0
    %v1928 = vadd.f32 %v1926, 1.0
    %v1929 = vmul.f32 %v1913, %v1927
    %v1930 = vmul.f32 %v1914, %v1928
    %v1931 = vld [vmem:[%s69] sm:$0xff]
    %v1932 = vld [vmem:[%s69 + $0x8] sm:$0xff]
    %v1933 = vld [vmem:[%s69 + $0x10] sm:$0xff]
    %v1934 = vld [vmem:[%s69 + $0x18] sm:$0xff]
    %v1935 = vld [vmem:[%s69 + $0x20] sm:$0xff]
    %v1936 = vld [vmem:[%s69 + $0x28] sm:$0xff]
    %v1937 = vld [vmem:[%s69 + $0x30] sm:$0xff]
    %v1938 = vld [vmem:[%s69 + $0x38] sm:$0xff]
    %v1939 = vld [vmem:[%s71] sm:$0x1]
    %v1941 = vperm.slane %v1939, 0
    %v1944 = vsel %vm1104, %v1929, 0
    %v1947 = vsel %vm1104, %v1930, 0
    %1949 = vmatpush.msra.mxu0 0.0
    %1950 = vmatpush.msra.mxu0 0.0
    %1951 = vmatpush.msra.mxu0 0.0
    %1952 = vmatpush.msra.mxu0 0.0
    %1953 = vmatpush.msra.mxu0 0.0
    %1954 = vmatpush.msra.mxu0 0.0
    %1955 = vmatpush.msra.mxu0 0.0
    %1956 = vmatpush.msra.mxu0 0.0
    %1957 = vmatpush.msra.mxu0 %v1938
    %1958 = vmatpush.msra.mxu0 %v1937
    %1959 = vmatpush.msra.mxu0 %v1936
    %1960 = vmatpush.msra.mxu0 %v1935
    %1961 = vmatpush.msra.mxu0 %v1934
    %1962 = vmatpush.msra.mxu0 %v1933
    %1963 = vmatpush.msra.mxu0 %v1932
    %1964 = vmatpush.msra.mxu0 %v1931
    %1965 = vmatmul.f32.gmra.mxu0 %v1944
    %v1966 = vpop.f32.mrf.mxu0
    %v1967 = vadd.f32 %v1941, %v1966
    %1968 = vmatmul.f32.gmra.mxu0 %v1947
    %v1969 = vpop.f32.mrf.mxu0
    %v1970 = vadd.f32 %v1941, %v1969
    %1971 = vdwg.mxu0
    %v1972 = vadd.f32 %v1874, %v1967
    %v1973 = vadd.f32 %v1875, %v1970
    %v1974 = vld [vmem:[%s73] sm:$0x1]
    %v1975 = vld [vmem:[%s75] sm:$0x1]
    %v1976 = vsel %vm346, %v1972, 0.0
    %1977 = vadd.xlane.f32.xlu0 %v1976
    %v1978 = vpop.xlane.xlu0 %1977
    %v1979 = vsel %vm346, %v1973, 0.0
    %1980 = vadd.xlane.f32.xlu0 %v1979
    %v1981 = vpop.xlane.xlu0 %1980
    %v1982 = vmul.f32 %v1978, %v988
    %v1983 = vmul.f32 %v1981, %v988
    %v1984 = vsub.f32 %v1972, %v1982
    %v1985 = vsub.f32 %v1973, %v1983
    %v1986 = vmul.f32 %v1984, %v1984
    %v1987 = vmul.f32 %v1985, %v1985
    %v1988 = vsel %vm346, %v1986, 0.0
    %1989 = vadd.xlane.f32.xlu0 %v1988
    %v1990 = vpop.xlane.xlu0 %1989
    %v1991 = vsel %vm346, %v1987, 0.0
    %1992 = vadd.xlane.f32.xlu0 %v1991
    %v1993 = vpop.xlane.xlu0 %1992
    %v1994 = vmul.f32 %v1990, %v988
    %v1995 = vmul.f32 %v1993, %v988
    %v1996 = vadd.f32 %v1994, 1e-05
    %v1997 = vadd.f32 %v1995, 1e-05
    %v1998 = vrsqrt.pop %v1996
    %v1999 = vmul.f32 %v1998, %v1996
    %v2000 = vmul.f32 %v1999, %v1998
    %v2001 = vmul.f32 0.5, %v2000
    %v2002 = vsub.f32 1.5, %v2001
    %v2003 = vmul.f32 %v1998, %v2002
    %vm2004 = vweird.f32 %v1996
    %vm2005 = vweird.f32 %v1998
    %vm2006 = vmor %vm2004, %vm2005
    %v2007 = vsel %vm2006, %v1998, %v2003
    %v2008 = vrsqrt.pop %v1997
    %v2009 = vmul.f32 %v2008, %v1997
    %v2010 = vmul.f32 %v2009, %v2008
    %v2011 = vmul.f32 0.5, %v2010
    %v2012 = vsub.f32 1.5, %v2011
    %v2013 = vmul.f32 %v2008, %v2012
    %vm2014 = vweird.f32 %v1997
    %vm2015 = vweird.f32 %v2008
    %vm2016 = vmor %vm2014, %vm2015
    %v2017 = vsel %vm2016, %v2008, %v2013
    %v2018 = vmul.f32 %v1984, %v2007
    %v2019 = vmul.f32 %v1985, %v2017
    %v2021 = vperm.slane %v1974, 0
    %v2023 = vmul.f32 %v2018, %v2021
    %v2024 = vmul.f32 %v2019, %v2021
    %v2026 = vperm.slane %v1975, 0
    %v2028 = vadd.f32 %v2023, %v2026
    %v2029 = vadd.f32 %v2024, %v2026
    %v2030 = vld [vmem:[#allocation2] sm:$0x1]
    %v2031 = vld [vmem:[#allocation4] sm:$0x1]
    %v2032 = vsel %vm346, %v2028, 0.0
    %2033 = vadd.xlane.f32.xlu0 %v2032
    %v2034 = vpop.xlane.xlu0 %2033
    %v2035 = vsel %vm346, %v2029, 0.0
    %2036 = vadd.xlane.f32.xlu0 %v2035
    %v2037 = vpop.xlane.xlu0 %2036
    %v2038 = vmul.f32 %v2034, %v988
    %v2039 = vmul.f32 %v2037, %v988
    %v2040 = vsub.f32 %v2028, %v2038
    %v2041 = vsub.f32 %v2029, %v2039
    %v2042 = vmul.f32 %v2040, %v2040
    %v2043 = vmul.f32 %v2041, %v2041
    %v2044 = vsel %vm346, %v2042, 0.0
    %2045 = vadd.xlane.f32.xlu0 %v2044
    %v2046 = vpop.xlane.xlu0 %2045
    %v2047 = vsel %vm346, %v2043, 0.0
    %2048 = vadd.xlane.f32.xlu0 %v2047
    %v2049 = vpop.xlane.xlu0 %2048
    %v2050 = vmul.f32 %v2046, %v988
    %v2051 = vmul.f32 %v2049, %v988
    %v2052 = vadd.f32 %v2050, 1e-05
    %v2053 = vadd.f32 %v2051, 1e-05
    %v2054 = vrsqrt.pop %v2052
    %v2055 = vmul.f32 %v2054, %v2052
    %v2056 = vmul.f32 %v2055, %v2054
    %v2057 = vmul.f32 0.5, %v2056
    %v2058 = vsub.f32 1.5, %v2057
    %v2059 = vmul.f32 %v2054, %v2058
    %vm2060 = vweird.f32 %v2052
    %vm2061 = vweird.f32 %v2054
    %vm2062 = vmor %vm2060, %vm2061
    %v2063 = vsel %vm2062, %v2054, %v2059
    %v2064 = vrsqrt.pop %v2053
    %v2065 = vmul.f32 %v2064, %v2053
    %v2066 = vmul.f32 %v2065, %v2064
    %v2067 = vmul.f32 0.5, %v2066
    %v2068 = vsub.f32 1.5, %v2067
    %v2069 = vmul.f32 %v2064, %v2068
    %vm2070 = vweird.f32 %v2053
    %vm2071 = vweird.f32 %v2064
    %vm2072 = vmor %vm2070, %vm2071
    %v2073 = vsel %vm2072, %v2064, %v2069
    %v2074 = vmul.f32 %v2040, %v2063
    %v2075 = vmul.f32 %v2041, %v2073
    %v2077 = vperm.slane %v2030, 0
    %v2079 = vmul.f32 %v2074, %v2077
    %v2080 = vmul.f32 %v2075, %v2077
    %v2082 = vperm.slane %v2031, 0
    %v2084 = vadd.f32 %v2079, %v2082
    %v2085 = vadd.f32 %v2080, %v2082
    %v2086 = vld [vmem:[%s81] sm:$0xff]
    %v2087 = vld [vmem:[%s81 + $0x8] sm:$0xff]
    %v2088 = vld [vmem:[%s81 + $0x10] sm:$0xff]
    %v2089 = vld [vmem:[%s81 + $0x18] sm:$0xff]
    %v2090 = vld [vmem:[#allocation6] sm:$0x1]
    %v2092 = vperm.slane %v2090, 0
    %v2095 = vsel %vm346, %v2084, 0
    %v2098 = vsel %vm346, %v2085, 0
    %2100 = vmatpush.msra.mxu0 0.0
    %2101 = vmatpush.msra.mxu0 0.0
    %2102 = vmatpush.msra.mxu0 0.0
    %2103 = vmatpush.msra.mxu0 0.0
    %2104 = vmatpush.msra.mxu0 0.0
    %2105 = vmatpush.msra.mxu0 0.0
    %2106 = vmatpush.msra.mxu0 0.0
    %2107 = vmatpush.msra.mxu0 0.0
    %2108 = vmatpush.msra.mxu0 0.0
    %2109 = vmatpush.msra.mxu0 0.0
    %2110 = vmatpush.msra.mxu0 0.0
    %2111 = vmatpush.msra.mxu0 0.0
    %2112 = vmatpush.msra.mxu0 %v2089
    %2113 = vmatpush.msra.mxu0 %v2088
    %2114 = vmatpush.msra.mxu0 %v2087
    %2115 = vmatpush.msra.mxu0 %v2086
    %2116 = vmatmul.f32.gmra.mxu0 %v2095
    %v2117 = vpop.f32.mrf.mxu0
    %v2118 = vadd.f32 %v2092, %v2117
    %2119 = vmatmul.f32.gmra.mxu0 %v2098
    %v2120 = vpop.f32.mrf.mxu0
    %v2121 = vadd.f32 %v2092, %v2120
    %2122 = vdwg.mxu0
    %v2123 = vmul.f32 %v2118, 0.5
    %v2124 = vmul.f32 %v2121, 0.5
    %v2125 = vmul.f32 %v2118, 0.044715
    %v2126 = vmul.f32 %v2121, 0.044715
    %v2127 = vmul.f32 %v2125, %v2118
    %v2128 = vmul.f32 %v2126, %v2121
    %v2129 = vmul.f32 %v2127, %v2118
    %v2130 = vmul.f32 %v2128, %v2121
    %v2131 = vadd.f32 %v2118, %v2129
    %v2132 = vadd.f32 %v2121, %v2130
    %v2133 = vmul.f32 %v2131, 0.7978846
    %v2134 = vmul.f32 %v2132, 0.7978846
    %v2135 = vtanh.pop %v2133
    %v2136 = vtanh.pop %v2134
    %v2137 = vadd.f32 %v2135, 1.0
    %v2138 = vadd.f32 %v2136, 1.0
    %v2139 = vmul.f32 %v2123, %v2137
    %v2140 = vmul.f32 %v2124, %v2138
    %v2141 = vld [vmem:[%s85] sm:$0xff]
    %v2142 = vld [vmem:[%s85 + $0x8] sm:$0xff]
    %v2143 = vld [vmem:[%s85 + $0x10] sm:$0xff]
    %v2144 = vld [vmem:[%s85 + $0x18] sm:$0xff]
    %v2145 = vld [vmem:[#allocation7] sm:$0x1]
    %v2147 = vperm.slane %v2145, 0
    %v2150 = vsel %vm346, %v2139, 0
    %v2153 = vsel %vm346, %v2140, 0
    %2155 = vmatpush.msra.mxu0 0.0
    %2156 = vmatpush.msra.mxu0 0.0
    %2157 = vmatpush.msra.mxu0 0.0
    %2158 = vmatpush.msra.mxu0 0.0
    %2159 = vmatpush.msra.mxu0 0.0
    %2160 = vmatpush.msra.mxu0 0.0
    %2161 = vmatpush.msra.mxu0 0.0
    %2162 = vmatpush.msra.mxu0 0.0
    %2163 = vmatpush.msra.mxu0 0.0
    %2164 = vmatpush.msra.mxu0 0.0
    %2165 = vmatpush.msra.mxu0 0.0
    %2166 = vmatpush.msra.mxu0 0.0
    %2167 = vmatpush.msra.mxu0 %v2144
    %2168 = vmatpush.msra.mxu0 %v2143
    %2169 = vmatpush.msra.mxu0 %v2142
    %2170 = vmatpush.msra.mxu0 %v2141
    %2171 = vmatmul.f32.gmra.mxu0 %v2150
    %v2172 = vpop.f32.mrf.mxu0
    %v2173 = vadd.f32 %v2147, %v2172
    %2174 = vmatmul.f32.gmra.mxu0 %v2153
    %v2175 = vpop.f32.mrf.mxu0
    %v2176 = vadd.f32 %v2147, %v2175
    %2177 = vdwg.mxu0
    %2178 = vst.msk [vmem:[%s89] sm:$0xff] %vm500, %v2173
    %2179 = vst.msk [vmem:[%s89 + $0x8] sm:$0xff] %vm500, %v2176
    // Predicated region
    $region194: #{forward.1} parent=1 // pred_check
      _
    $region195: #{forward.1} parent=1 // pred_check_branch
      %2181 = sbr.rel (0) target = $region197
    $region196: #{forward.1} parent=1 // pred_region
      _
    $region197: #{forward.1} parent=1 // pred_fallthru
      _
    // Predicated region
    $region198: #{forward.1} parent=1 // pred_check
      _
    $region199: #{forward.1} parent=1 // pred_check_branch
      %2183 = sbr.rel (0) target = $region201
    $region200: #{forward.1} parent=1 // pred_region
      _
    $region201: #{forward.1} parent=1 // pred_fallthru
      _
    %2184 = vsyncpa [#allocation3], 1
    %2185 = vsyncpa [#allocation5], 1
    %2186 = vsyncpa [#allocation8], 1

</llo_original>
